<compile_context>
chip_gen: v5e
topology: v5e:2x2
jax: 0.10.0
libtpu: 0.0.40
codegen_flags: <defaults>
</compile_context>

<pallas_src>
import math
import functools

import jax
import jax.numpy as jnp
from jax.experimental import pallas as pl
from jax.experimental.pallas import tpu as pltpu


# ----------------------------- in-kernel math ------------------------------

def _layernorm(x, gamma, beta, eps=1e-5):
    mean = jnp.mean(x, axis=-1, keepdims=True)
    var = jnp.mean((x - mean) ** 2, axis=-1, keepdims=True)
    return (x - mean) * jax.lax.rsqrt(var + eps) * gamma + beta


def _softmax(x):
    m = jnp.max(x, axis=-1, keepdims=True)
    e = jnp.exp(x - m)
    # approx reciprocal runs on the EUP (its own VLIW slot) instead of the VPU.
    return e * pl.reciprocal(jnp.sum(e, axis=-1, keepdims=True), approx=True)


def _attention(q, k, v, bias, bb, Lq, Lk, heads):
    """Scaled-dot-product attention per (batch, head).

    q: (bb*Lq, D) f32, k/v: (bb*Lk, D) f32, bias: (bb, 1, Lk) additive mask
    (0 visible / -1e9 masked).  Per-head contexts are concatenated lane-dense
    in registers (no VMEM scratch, no 32-lane masked stores).
    Returns (bb*Lq, D) f32.
    """
    d_model = q.shape[-1]
    d_k = d_model // heads
    scale = 1.0 / math.sqrt(d_k)

    # TODO(synk): at realistic heads/d_model, move heads (and the batch loop)
    # to a grid axis, or batch heads into one matmul with d_k a multiple of
    # 128, instead of 32-lane column slices of a 128-lane vreg.
    ctx_rows = []
    for j in range(bb):                        # static, fully unrolled (bb small)
        qj = q[j * Lq:(j + 1) * Lq]            # (Lq, D)
        kj = k[j * Lk:(j + 1) * Lk]            # (Lk, D)
        vj = v[j * Lk:(j + 1) * Lk]            # (Lk, D)
        bj = bias[j]                           # (1, Lk), broadcasts over rows
        head_ctx = []
        for h in range(heads):
            sl = slice(h * d_k, (h + 1) * d_k)
            # Contract the last dim of both operands -> no explicit .T, no XLU
            # transpose inside the hot unrolled loop.
            s = jax.lax.dot_general(
                qj[:, sl], kj[:, sl],
                dimension_numbers=(((1,), (1,)), ((), ())),
                preferred_element_type=jnp.float32) * scale + bj
            p = _softmax(s)                    # (Lq, Lk) f32
            head_ctx.append(jnp.dot(p, vj[:, sl],
                                    preferred_element_type=jnp.float32))
        ctx_rows.append(jnp.concatenate(head_ctx, axis=-1))   # (Lq, D) lane-dense
    return jnp.concatenate(ctx_rows, axis=0)                  # (bb*Lq, D)


def decoder_layer_kernel(heads,
                         emb_ref, enc_ref, sbias_ref, tbias_ref,
                         wqkv1, bqkv1, wo1, bo1,
                         wq2, bq2, wkv2, bkv2, wo2, bo2,
                         wf1, bf1, wf2, bf2, gamma, beta,
                         out_ref):
    bb = tbias_ref.shape[0]
    T = tbias_ref.shape[2]
    S = sbias_ref.shape[2]
    D = emb_ref.shape[-1]

    # Activations arrive as bf16 (half the HBM traffic); matmuls consume them
    # directly, residual / LayerNorm / softmax math runs in f32.
    emb_bf = emb_ref[...]                      # (bb*T, D) bf16
    enc_bf = enc_ref[...]                      # (bb*S, D) bf16
    emb = emb_bf.astype(jnp.float32)
    g = gamma[...]
    b = beta[...]

    # TODO(synk): nn.Dropout(0.1) (attention weights / between blocks / FFN)
    # needs RNG in training mode; inference => identity here.

    # ---- 1) self multi-head attention + residual + LayerNorm ---------------
    # Fused Q|K|V projection: one (bb*T, D) x (D, 3D) MXU pass, f32 accumulate.
    qkv = jnp.dot(emb_bf, wqkv1[...],
                  preferred_element_type=jnp.float32) + bqkv1[...]
    ctx = _attention(qkv[:, :D], qkv[:, D:2 * D], qkv[:, 2 * D:],
                     tbias_ref[...], bb, T, T, heads)
    self_out = jnp.dot(ctx.astype(jnp.bfloat16), wo1[...],
                       preferred_element_type=jnp.float32) + bo1[...]
    query = _layernorm(self_out + emb, g, b)
    query_bf = query.astype(jnp.bfloat16)      # cast once, reused below

    # ---- 2) source (cross) multi-head attention + residual + LayerNorm -----
    q2 = jnp.dot(query_bf, wq2[...],
                 preferred_element_type=jnp.float32) + bq2[...]
    kv = jnp.dot(enc_bf, wkv2[...],            # fused K|V projection (D, 2D)
                 preferred_element_type=jnp.float32) + bkv2[...]
    ctx2 = _attention(q2, kv[:, :D], kv[:, D:],
                      sbias_ref[...], bb, T, S, heads)
    cross_out = jnp.dot(ctx2.astype(jnp.bfloat16), wo2[...],
                        preferred_element_type=jnp.float32) + bo2[...]
    inter = _layernorm(cross_out + query, g, b)
    inter_bf = inter.astype(jnp.bfloat16)

    # ---- 3) feed-forward (Linear -> ReLU -> Linear) + residual + LayerNorm --
    h1 = jnp.maximum(jnp.dot(inter_bf, wf1[...],
                             preferred_element_type=jnp.float32) + bf1[...], 0.0)
    ff = jnp.dot(h1.astype(jnp.bfloat16), wf2[...],
                 preferred_element_type=jnp.float32) + bf2[...]
    out_ref[...] = _layernorm(ff + inter, g, b).astype(out_ref.dtype)


# ------------------------------- wrapper ------------------------------------

def _default_batch_block(B, T, S):
    try:
        kind = jax.devices()[0].device_kind.lower()
    except Exception:
        kind = ""
    # v7x is the only generation with 2 TensorCores per chip: split the batch
    # so the "parallel" grid axis shards across both.  v5e/v6e (1 TC) keep
    # whole-batch-per-step (one set of fixed per-step overheads).
    if "v7" in kind and B % 2 == 0:
        bb = B // 2
        if (bb * T) % 16 == 0 and (bb * S) % 16 == 0:   # keep bf16 blocks tile-friendly
            return bb
    return B


def decoder_layer(embeddings, encoded, src_mask, tgt_mask, param_list, heads,
                  batch_block=None):
    B, T, D = embeddings.shape
    S = encoded.shape[1]

    if batch_block is None:
        batch_block = _default_batch_block(B, T, S)
    assert B % batch_block == 0
    nb = B // batch_block

    bf16, f32 = jnp.bfloat16, jnp.float32

    # Flatten rows (every matmul sees batch_block*T rows) and ship as bf16.
    emb2 = embeddings.reshape(B * T, D).astype(bf16)
    enc2 = encoded.reshape(B * S, D).astype(bf16)

    # Precomputed additive attention biases (no compare+select in the kernel).
    sbias = jnp.where(src_mask.reshape(B, 1, S) == 0,
                      -1000000000.0, 0.0).astype(f32)
    tbias = jnp.where(tgt_mask.reshape(B, 1, T) == 0,
                      -1000000000.0, 0.0).astype(f32)

    (wq1, bq1, wk1, bk1, wv1, bv1, wo1, bo1,
     wq2, bq2, wk2, bk2, wv2, bv2, wo2, bo2,
     wf1, bf1, wf2, bf2, gamma, beta) = param_list

    # Fused projection weights (column offsets are multiples of D=128, so the
    # q/k/v slices of the fused result stay lane-aligned).  Weight matrices go
    # bf16 (MXU-native, half the DMA bytes); biases / LN affine stay f32.
    params = [
        jnp.concatenate([wq1, wk1, wv1], axis=1).astype(bf16),   # wqkv1 (D, 3D)
        jnp.concatenate([bq1, bk1, bv1], axis=1).astype(f32),    # bqkv1 (1, 3D)
        wo1.astype(bf16), bo1.astype(f32),
        wq2.astype(bf16), bq2.astype(f32),
        jnp.concatenate([wk2, wv2], axis=1).astype(bf16),        # wkv2  (D, 2D)
        jnp.concatenate([bk2, bv2], axis=1).astype(f32),         # bkv2  (1, 2D)
        wo2.astype(bf16), bo2.astype(f32),
        wf1.astype(bf16), bf1.astype(f32),
        wf2.astype(bf16), bf2.astype(f32),
        gamma.astype(f32), beta.astype(f32),
    ]

    in_specs = [
        pl.BlockSpec((batch_block * T, D), lambda i: (i, 0)),
        pl.BlockSpec((batch_block * S, D), lambda i: (i, 0)),
        pl.BlockSpec((batch_block, 1, S), lambda i: (i, 0, 0)),
        pl.BlockSpec((batch_block, 1, T), lambda i: (i, 0, 0)),
    ] + [pl.BlockSpec(p.shape, lambda i: (0, 0)) for p in params]
    # TODO(synk): when d_model/middle_dim scale up, single-buffer the constant
    # weight blocks (pipeline_mode=pl.Buffered(1)) or move them to
    # memory_space=pl.ANY + one manual make_async_copy (v7x has only 64 MiB VMEM).

    # Explicit VMEM budget: double-buffered activation/bias/output blocks plus
    # (double-buffered) weights + headroom, capped below every generation's
    # default scoped limit / v7x physical VMEM.
    act_bytes = (batch_block * T * D + batch_block * S * D
                 + batch_block * T * D) * 2                    # emb + enc + out (bf16)
    bias_bytes = batch_block * (S + T) * 4
    weight_bytes = sum(int(p.size) * p.dtype.itemsize for p in params)
    est = 2 * (act_bytes + bias_bytes + weight_bytes)
    vmem_limit = int(min(max(4 * est, 8 << 20), 32 << 20))

    out = pl.pallas_call(
        functools.partial(decoder_layer_kernel, heads),
        out_shape=jax.ShapeDtypeStruct((B * T, D), bf16),
        grid_spec=pltpu.PrefetchScalarGridSpec(
            num_scalar_prefetch=0,
            grid=(nb,),
            in_specs=in_specs,
            out_specs=pl.BlockSpec((batch_block * T, D), lambda i: (i, 0)),
        ),
        compiler_params=pltpu.CompilerParams(
            dimension_semantics=("parallel",),
            vmem_limit_bytes=vmem_limit),
    )(emb2, enc2, sbias, tbias, *params)

    return out.reshape(B, T, D).astype(jnp.float32)


# --------------------------- pure-JAX reference ------------------------------

def _ref_mha(xq, xkv, mask, wq, bq, wk, bk, wv, bv, wo, bo, heads):
    B, Lq, D = xq.shape
    Lk = xkv.shape[1]
    d_k = D // heads
    q = (xq @ wq + bq).reshape(B, Lq, heads, d_k).transpose(0, 2, 1, 3)
    k = (xkv @ wk + bk).reshape(B, Lk, heads, d_k).transpose(0, 2, 1, 3)
    v = (xkv @ wv + bv).reshape(B, Lk, heads, d_k).transpose(0, 2, 1, 3)
    s = jnp.einsum('bhqd,bhkd->bhqk', q, k) / math.sqrt(d_k)
    s = jnp.where(mask == 0, -1000000000.0, s)            # mask: (B,1,1,Lk)
    w = jax.nn.softmax(s, axis=-1)
    ctx = jnp.einsum('bhqk,bhkd->bhqd', w, v).transpose(0, 2, 1, 3).reshape(B, Lq, D)
    return ctx @ wo + bo


def _ref_ln(x, gamma, beta, eps=1e-5):
    mean = jnp.mean(x, axis=-1, keepdims=True)
    var = jnp.mean((x - mean) ** 2, axis=-1, keepdims=True)
    return (x - mean) / jnp.sqrt(var + eps) * gamma + beta


def ref_decoder_layer(emb, enc, src_mask, tgt_mask, p, heads):
    (wq1, bq1, wk1, bk1, wv1, bv1, wo1, bo1,
     wq2, bq2, wk2, bk2, wv2, bv2, wo2, bo2,
     wf1, bf1, wf2, bf2, gamma, beta) = p
    self_out = _ref_mha(emb, emb, tgt_mask, wq1, bq1, wk1, bk1, wv1, bv1, wo1, bo1, heads)
    query = _ref_ln(self_out + emb, gamma, beta)
    cross = _ref_mha(query, enc, src_mask, wq2, bq2, wk2, bk2, wv2, bv2, wo2, bo2, heads)
    inter = _ref_ln(cross + query, gamma, beta)
    ff = jnp.maximum(inter @ wf1 + bf1, 0.0) @ wf2 + bf2
    return _ref_ln(ff + inter, gamma, beta)


# ---------------------------------- main -------------------------------------

if __name__ == "__main__":
    B, T, S = 2, 8, 8          # small shapes consistent with the module
    D, H, MID = 128, 4, 256    # d_model, heads, feed-forward middle dim

    key = jax.random.PRNGKey(0)
    keys = iter(jax.random.split(key, 64))

    def nrm(shape, scale=0.05):
        return scale * jax.random.normal(next(keys), shape, jnp.float32)

    def attn_params():
        ps = []
        for _ in range(4):                       # query, key, value, concat
            ps.append(nrm((D, D)))               # weight, stored (in, out)
            ps.append(nrm((1, D), 0.01))         # bias
        return ps

    param_list = (
        attn_params()                            # self-attention
        + attn_params()                          # cross-attention
        + [nrm((D, MID)), nrm((1, MID), 0.01),   # ffn fc1
           nrm((MID, D)), nrm((1, D), 0.01),     # ffn fc2
           1.0 + nrm((1, D), 0.1),               # LayerNorm gamma
           nrm((1, D), 0.1)]                     # LayerNorm beta
    )

    embeddings = jax.random.normal(next(keys), (B, T, D), jnp.float32)
    encoded = jax.random.normal(next(keys), (B, S, D), jnp.float32)

    # masks of shape (batch, 1, 1, max_words) as in the PyTorch docstring
    src_mask = (jax.random.uniform(next(keys), (B, 1, 1, S)) > 0.3).astype(jnp.float32)
    tgt_mask = (jax.random.uniform(next(keys), (B, 1, 1, T)) > 0.3).astype(jnp.float32)
    src_mask = src_mask.at[..., 0].set(1.0)
    tgt_mask = tgt_mask.at[..., 0].set(1.0)

    out = decoder_layer(embeddings, encoded, src_mask, tgt_mask, param_list, H)
    out = jax.block_until_ready(out)

    ref = ref_decoder_layer(embeddings, encoded, src_mask, tgt_mask, param_list, H)
    ref = jax.block_until_ready(ref)

    assert out.shape == (B, T, D)
    # bf16 activations / weights / output + approx softmax reciprocal =>
    # compare against the f32 reference with correspondingly relaxed tolerance.
    err = jnp.max(jnp.abs(out - ref))
    assert jnp.allclose(out, ref, rtol=2e-2, atol=5e-2), f"max abs err {err}"
    print("KERNEL_OK")
</pallas_src>

<mosaic_0001>
module attributes {stable_mosaic.version = 11 : i64} {
  func.func @decoder_layer_kernel(%arg0: i32, %arg1: memref<16x128xbf16, #tpu.memory_space<vmem>>, %arg2: memref<16x128xbf16, #tpu.memory_space<vmem>>, %arg3: memref<2x1x8xf32, #tpu.memory_space<vmem>>, %arg4: memref<2x1x8xf32, #tpu.memory_space<vmem>>, %arg5: memref<128x384xbf16, #tpu.memory_space<vmem>>, %arg6: memref<1x384xf32, #tpu.memory_space<vmem>>, %arg7: memref<128x128xbf16, #tpu.memory_space<vmem>>, %arg8: memref<1x128xf32, #tpu.memory_space<vmem>>, %arg9: memref<128x128xbf16, #tpu.memory_space<vmem>>, %arg10: memref<1x128xf32, #tpu.memory_space<vmem>>, %arg11: memref<128x256xbf16, #tpu.memory_space<vmem>>, %arg12: memref<1x256xf32, #tpu.memory_space<vmem>>, %arg13: memref<128x128xbf16, #tpu.memory_space<vmem>>, %arg14: memref<1x128xf32, #tpu.memory_space<vmem>>, %arg15: memref<128x256xbf16, #tpu.memory_space<vmem>>, %arg16: memref<1x256xf32, #tpu.memory_space<vmem>>, %arg17: memref<256x128xbf16, #tpu.memory_space<vmem>>, %arg18: memref<1x128xf32, #tpu.memory_space<vmem>>, %arg19: memref<1x128xf32, #tpu.memory_space<vmem>>, %arg20: memref<1x128xf32, #tpu.memory_space<vmem>>, %arg21: memref<16x128xbf16, #tpu.memory_space<vmem>>) attributes {dimension_semantics = [#tpu.dimension_semantics<parallel>], iteration_bounds = array<i64: 1>, scalar_prefetch = 0 : i64, scratch_operands = 0 : i64, tpu.core_type = #tpu.core_type<tc>, window_params = [{transform_indices = @transform_0, window_bounds = array<i64: 16, 128>}, {transform_indices = @transform_1, window_bounds = array<i64: 16, 128>}, {transform_indices = @transform_2, window_bounds = array<i64: 2, 1, 8>}, {transform_indices = @transform_3, window_bounds = array<i64: 2, 1, 8>}, {pipeline_mode = #tpu.pipeline_mode<synchronous>, transform_indices = @transform_4, window_bounds = array<i64: 128, 384>}, {pipeline_mode = #tpu.pipeline_mode<synchronous>, transform_indices = @transform_5, window_bounds = array<i64: 1, 384>}, {pipeline_mode = #tpu.pipeline_mode<synchronous>, transform_indices = @transform_6, window_bounds = array<i64: 128, 128>}, {pipeline_mode = #tpu.pipeline_mode<synchronous>, transform_indices = @transform_7, window_bounds = array<i64: 1, 128>}, {pipeline_mode = #tpu.pipeline_mode<synchronous>, transform_indices = @transform_8, window_bounds = array<i64: 128, 128>}, {pipeline_mode = #tpu.pipeline_mode<synchronous>, transform_indices = @transform_9, window_bounds = array<i64: 1, 128>}, {pipeline_mode = #tpu.pipeline_mode<synchronous>, transform_indices = @transform_10, window_bounds = array<i64: 128, 256>}, {pipeline_mode = #tpu.pipeline_mode<synchronous>, transform_indices = @transform_11, window_bounds = array<i64: 1, 256>}, {pipeline_mode = #tpu.pipeline_mode<synchronous>, transform_indices = @transform_12, window_bounds = array<i64: 128, 128>}, {pipeline_mode = #tpu.pipeline_mode<synchronous>, transform_indices = @transform_13, window_bounds = array<i64: 1, 128>}, {pipeline_mode = #tpu.pipeline_mode<synchronous>, transform_indices = @transform_14, window_bounds = array<i64: 128, 256>}, {pipeline_mode = #tpu.pipeline_mode<synchronous>, transform_indices = @transform_15, window_bounds = array<i64: 1, 256>}, {pipeline_mode = #tpu.pipeline_mode<synchronous>, transform_indices = @transform_16, window_bounds = array<i64: 256, 128>}, {pipeline_mode = #tpu.pipeline_mode<synchronous>, transform_indices = @transform_17, window_bounds = array<i64: 1, 128>}, {pipeline_mode = #tpu.pipeline_mode<synchronous>, transform_indices = @transform_18, window_bounds = array<i64: 1, 128>}, {pipeline_mode = #tpu.pipeline_mode<synchronous>, transform_indices = @transform_19, window_bounds = array<i64: 1, 128>}, {transform_indices = @transform_20, window_bounds = array<i64: 16, 128>}]} {
    %c0 = arith.constant 0 : index
    %c0_0 = arith.constant 0 : index
    %0 = vector.load %arg1[%c0, %c0_0] : memref<16x128xbf16, #tpu.memory_space<vmem>>, vector<16x128xbf16>
    %c0_1 = arith.constant 0 : index
    %c0_2 = arith.constant 0 : index
    %1 = vector.load %arg2[%c0_1, %c0_2] : memref<16x128xbf16, #tpu.memory_space<vmem>>, vector<16x128xbf16>
    %2 = arith.extf %0 : vector<16x128xbf16> to vector<16x128xf32>
    %c0_3 = arith.constant 0 : index
    %c0_4 = arith.constant 0 : index
    %3 = vector.load %arg19[%c0_3, %c0_4] : memref<1x128xf32, #tpu.memory_space<vmem>>, vector<1x128xf32>
    %c0_5 = arith.constant 0 : index
    %c0_6 = arith.constant 0 : index
    %4 = vector.load %arg20[%c0_5, %c0_6] : memref<1x128xf32, #tpu.memory_space<vmem>>, vector<1x128xf32>
    %c0_7 = arith.constant 0 : index
    %c0_8 = arith.constant 0 : index
    %5 = vector.load %arg5[%c0_7, %c0_8] : memref<128x384xbf16, #tpu.memory_space<vmem>>, vector<128x384xbf16>
    %cst = arith.constant dense<0.000000e+00> : vector<16x384xf32>
    %6 = tpu.matmul %0, %5, %cst {dimension_numbers = #tpu.dot_dimension_numbers<[1], [0], [0], [1], [0, 0, 1, 1], [], []>} : vector<16x128xbf16>, vector<128x384xbf16>, vector<16x384xf32> -> vector<16x384xf32>
    %c0_9 = arith.constant 0 : index
    %c0_10 = arith.constant 0 : index
    %7 = vector.load %arg6[%c0_9, %c0_10] : memref<1x384xf32, #tpu.memory_space<vmem>>, vector<1x384xf32>
    %8 = vector.broadcast %7 : vector<1x384xf32> to vector<16x384xf32>
    %9 = arith.addf %6, %8 : vector<16x384xf32>
    %10 = vector.extract_strided_slice %9 {offsets = [0, 0], sizes = [16, 128], strides = [1, 1]} : vector<16x384xf32> to vector<16x128xf32>
    %11 = vector.extract_strided_slice %9 {offsets = [0, 128], sizes = [16, 128], strides = [1, 1]} : vector<16x384xf32> to vector<16x128xf32>
    %12 = vector.extract_strided_slice %9 {offsets = [0, 256], sizes = [16, 128], strides = [1, 1]} : vector<16x384xf32> to vector<16x128xf32>
    %c0_11 = arith.constant 0 : index
    %c0_12 = arith.constant 0 : index
    %c0_13 = arith.constant 0 : index
    %13 = vector.load %arg4[%c0_11, %c0_12, %c0_13] : memref<2x1x8xf32, #tpu.memory_space<vmem>>, vector<2x1x8xf32>
    %14 = vector.extract_strided_slice %10 {offsets = [0, 0], sizes = [8, 128], strides = [1, 1]} : vector<16x128xf32> to vector<8x128xf32>
    %15 = vector.extract_strided_slice %11 {offsets = [0, 0], sizes = [8, 128], strides = [1, 1]} : vector<16x128xf32> to vector<8x128xf32>
    %16 = vector.extract_strided_slice %12 {offsets = [0, 0], sizes = [8, 128], strides = [1, 1]} : vector<16x128xf32> to vector<8x128xf32>
    %17 = vector.extract_strided_slice %13 {offsets = [0, 0, 0], sizes = [1, 1, 8], strides = [1, 1, 1]} : vector<2x1x8xf32> to vector<1x1x8xf32>
    %18 = vector.shape_cast %17 : vector<1x1x8xf32> to vector<1x8xf32>
    %19 = vector.extract_strided_slice %14 {offsets = [0, 0], sizes = [8, 32], strides = [1, 1]} : vector<8x128xf32> to vector<8x32xf32>
    %20 = vector.extract_strided_slice %15 {offsets = [0, 0], sizes = [8, 32], strides = [1, 1]} : vector<8x128xf32> to vector<8x32xf32>
    %cst_14 = arith.constant dense<0.000000e+00> : vector<8x8xf32>
    %21 = tpu.matmul %19, %20, %cst_14 {dimension_numbers = #tpu.dot_dimension_numbers<[1], [1], [0], [0], [0, 0, 1, 0], [], []>} : vector<8x32xf32>, vector<8x32xf32>, vector<8x8xf32> -> vector<8x8xf32>
    %cst_15 = arith.constant 0.176776692 : f32
    %22 = vector.broadcast %cst_15 : f32 to vector<8x8xf32>
    %23 = arith.mulf %21, %22 : vector<8x8xf32>
    %24 = vector.broadcast %18 : vector<1x8xf32> to vector<8x8xf32>
    %25 = arith.addf %23, %24 : vector<8x8xf32>
    %cst_16 = arith.constant dense<0xFF800000> : vector<8xf32>
    %26 = vector.multi_reduction <maximumf>, %25, %cst_16 [1] : vector<8x8xf32> to vector<8xf32>
    %27 = vector.shape_cast %26 : vector<8xf32> to vector<8x1xf32>
    %28 = vector.broadcast %27 : vector<8x1xf32> to vector<8x8xf32>
    %29 = arith.subf %25, %28 : vector<8x8xf32>
    %30 = math.exp %29 : vector<8x8xf32>
    %cst_17 = arith.constant dense<0.000000e+00> : vector<8xf32>
    %31 = vector.multi_reduction <add>, %30, %cst_17 [1] : vector<8x8xf32> to vector<8xf32>
    %32 = vector.shape_cast %31 : vector<8xf32> to vector<8x1xf32>
    %33 = tpu.reciprocal %32 {approx = true} : vector<8x1xf32> -> vector<8x1xf32>
    %34 = vector.broadcast %33 : vector<8x1xf32> to vector<8x8xf32>
    %35 = arith.mulf %30, %34 : vector<8x8xf32>
    %36 = vector.extract_strided_slice %16 {offsets = [0, 0], sizes = [8, 32], strides = [1, 1]} : vector<8x128xf32> to vector<8x32xf32>
    %cst_18 = arith.constant dense<0.000000e+00> : vector<8x32xf32>
    %37 = tpu.matmul %35, %36, %cst_18 {dimension_numbers = #tpu.dot_dimension_numbers<[1], [0], [0], [1], [0, 0, 1, 1], [], []>} : vector<8x8xf32>, vector<8x32xf32>, vector<8x32xf32> -> vector<8x32xf32>
    %38 = vector.extract_strided_slice %14 {offsets = [0, 32], sizes = [8, 32], strides = [1, 1]} : vector<8x128xf32> to vector<8x32xf32>
    %39 = vector.extract_strided_slice %15 {offsets = [0, 32], sizes = [8, 32], strides = [1, 1]} : vector<8x128xf32> to vector<8x32xf32>
    %cst_19 = arith.constant dense<0.000000e+00> : vector<8x8xf32>
    %40 = tpu.matmul %38, %39, %cst_19 {dimension_numbers = #tpu.dot_dimension_numbers<[1], [1], [0], [0], [0, 0, 1, 0], [], []>} : vector<8x32xf32>, vector<8x32xf32>, vector<8x8xf32> -> vector<8x8xf32>
    %cst_20 = arith.constant 0.176776692 : f32
    %41 = vector.broadcast %cst_20 : f32 to vector<8x8xf32>
    %42 = arith.mulf %40, %41 : vector<8x8xf32>
    %43 = vector.broadcast %18 : vector<1x8xf32> to vector<8x8xf32>
    %44 = arith.addf %42, %43 : vector<8x8xf32>
    %cst_21 = arith.constant dense<0xFF800000> : vector<8xf32>
    %45 = vector.multi_reduction <maximumf>, %44, %cst_21 [1] : vector<8x8xf32> to vector<8xf32>
    %46 = vector.shape_cast %45 : vector<8xf32> to vector<8x1xf32>
    %47 = vector.broadcast %46 : vector<8x1xf32> to vector<8x8xf32>
    %48 = arith.subf %44, %47 : vector<8x8xf32>
    %49 = math.exp %48 : vector<8x8xf32>
    %cst_22 = arith.constant dense<0.000000e+00> : vector<8xf32>
    %50 = vector.multi_reduction <add>, %49, %cst_22 [1] : vector<8x8xf32> to vector<8xf32>
    %51 = vector.shape_cast %50 : vector<8xf32> to vector<8x1xf32>
    %52 = tpu.reciprocal %51 {approx = true} : vector<8x1xf32> -> vector<8x1xf32>
    %53 = vector.broadcast %52 : vector<8x1xf32> to vector<8x8xf32>
    %54 = arith.mulf %49, %53 : vector<8x8xf32>
    %55 = vector.extract_strided_slice %16 {offsets = [0, 32], sizes = [8, 32], strides = [1, 1]} : vector<8x128xf32> to vector<8x32xf32>
    %cst_23 = arith.constant dense<0.000000e+00> : vector<8x32xf32>
    %56 = tpu.matmul %54, %55, %cst_23 {dimension_numbers = #tpu.dot_dimension_numbers<[1], [0], [0], [1], [0, 0, 1, 1], [], []>} : vector<8x8xf32>, vector<8x32xf32>, vector<8x32xf32> -> vector<8x32xf32>
    %57 = vector.extract_strided_slice %14 {offsets = [0, 64], sizes = [8, 32], strides = [1, 1]} : vector<8x128xf32> to vector<8x32xf32>
    %58 = vector.extract_strided_slice %15 {offsets = [0, 64], sizes = [8, 32], strides = [1, 1]} : vector<8x128xf32> to vector<8x32xf32>
    %cst_24 = arith.constant dense<0.000000e+00> : vector<8x8xf32>
    %59 = tpu.matmul %57, %58, %cst_24 {dimension_numbers = #tpu.dot_dimension_numbers<[1], [1], [0], [0], [0, 0, 1, 0], [], []>} : vector<8x32xf32>, vector<8x32xf32>, vector<8x8xf32> -> vector<8x8xf32>
    %cst_25 = arith.constant 0.176776692 : f32
    %60 = vector.broadcast %cst_25 : f32 to vector<8x8xf32>
    %61 = arith.mulf %59, %60 : vector<8x8xf32>
    %62 = vector.broadcast %18 : vector<1x8xf32> to vector<8x8xf32>
    %63 = arith.addf %61, %62 : vector<8x8xf32>
    %cst_26 = arith.constant dense<0xFF800000> : vector<8xf32>
    %64 = vector.multi_reduction <maximumf>, %63, %cst_26 [1] : vector<8x8xf32> to vector<8xf32>
    %65 = vector.shape_cast %64 : vector<8xf32> to vector<8x1xf32>
    %66 = vector.broadcast %65 : vector<8x1xf32> to vector<8x8xf32>
    %67 = arith.subf %63, %66 : vector<8x8xf32>
    %68 = math.exp %67 : vector<8x8xf32>
    %cst_27 = arith.constant dense<0.000000e+00> : vector<8xf32>
    %69 = vector.multi_reduction <add>, %68, %cst_27 [1] : vector<8x8xf32> to vector<8xf32>
    %70 = vector.shape_cast %69 : vector<8xf32> to vector<8x1xf32>
    %71 = tpu.reciprocal %70 {approx = true} : vector<8x1xf32> -> vector<8x1xf32>
    %72 = vector.broadcast %71 : vector<8x1xf32> to vector<8x8xf32>
    %73 = arith.mulf %68, %72 : vector<8x8xf32>
    %74 = vector.extract_strided_slice %16 {offsets = [0, 64], sizes = [8, 32], strides = [1, 1]} : vector<8x128xf32> to vector<8x32xf32>
    %cst_28 = arith.constant dense<0.000000e+00> : vector<8x32xf32>
    %75 = tpu.matmul %73, %74, %cst_28 {dimension_numbers = #tpu.dot_dimension_numbers<[1], [0], [0], [1], [0, 0, 1, 1], [], []>} : vector<8x8xf32>, vector<8x32xf32>, vector<8x32xf32> -> vector<8x32xf32>
    %76 = vector.extract_strided_slice %14 {offsets = [0, 96], sizes = [8, 32], strides = [1, 1]} : vector<8x128xf32> to vector<8x32xf32>
    %77 = vector.extract_strided_slice %15 {offsets = [0, 96], sizes = [8, 32], strides = [1, 1]} : vector<8x128xf32> to vector<8x32xf32>
    %cst_29 = arith.constant dense<0.000000e+00> : vector<8x8xf32>
    %78 = tpu.matmul %76, %77, %cst_29 {dimension_numbers = #tpu.dot_dimension_numbers<[1], [1], [0], [0], [0, 0, 1, 0], [], []>} : vector<8x32xf32>, vector<8x32xf32>, vector<8x8xf32> -> vector<8x8xf32>
    %cst_30 = arith.constant 0.176776692 : f32
    %79 = vector.broadcast %cst_30 : f32 to vector<8x8xf32>
    %80 = arith.mulf %78, %79 : vector<8x8xf32>
    %81 = vector.broadcast %18 : vector<1x8xf32> to vector<8x8xf32>
    %82 = arith.addf %80, %81 : vector<8x8xf32>
    %cst_31 = arith.constant dense<0xFF800000> : vector<8xf32>
    %83 = vector.multi_reduction <maximumf>, %82, %cst_31 [1] : vector<8x8xf32> to vector<8xf32>
    %84 = vector.shape_cast %83 : vector<8xf32> to vector<8x1xf32>
    %85 = vector.broadcast %84 : vector<8x1xf32> to vector<8x8xf32>
    %86 = arith.subf %82, %85 : vector<8x8xf32>
    %87 = math.exp %86 : vector<8x8xf32>
    %cst_32 = arith.constant dense<0.000000e+00> : vector<8xf32>
    %88 = vector.multi_reduction <add>, %87, %cst_32 [1] : vector<8x8xf32> to vector<8xf32>
    %89 = vector.shape_cast %88 : vector<8xf32> to vector<8x1xf32>
    %90 = tpu.reciprocal %89 {approx = true} : vector<8x1xf32> -> vector<8x1xf32>
    %91 = vector.broadcast %90 : vector<8x1xf32> to vector<8x8xf32>
    %92 = arith.mulf %87, %91 : vector<8x8xf32>
    %93 = vector.extract_strided_slice %16 {offsets = [0, 96], sizes = [8, 32], strides = [1, 1]} : vector<8x128xf32> to vector<8x32xf32>
    %cst_33 = arith.constant dense<0.000000e+00> : vector<8x32xf32>
    %94 = tpu.matmul %92, %93, %cst_33 {dimension_numbers = #tpu.dot_dimension_numbers<[1], [0], [0], [1], [0, 0, 1, 1], [], []>} : vector<8x8xf32>, vector<8x32xf32>, vector<8x32xf32> -> vector<8x32xf32>
    %95 = tpu.concatenate %37, %56, %75, %94 in 1 : vector<8x32xf32>, vector<8x32xf32>, vector<8x32xf32>, vector<8x32xf32> -> vector<8x128xf32>
    %96 = vector.extract_strided_slice %10 {offsets = [8, 0], sizes = [8, 128], strides = [1, 1]} : vector<16x128xf32> to vector<8x128xf32>
    %97 = vector.extract_strided_slice %11 {offsets = [8, 0], sizes = [8, 128], strides = [1, 1]} : vector<16x128xf32> to vector<8x128xf32>
    %98 = vector.extract_strided_slice %12 {offsets = [8, 0], sizes = [8, 128], strides = [1, 1]} : vector<16x128xf32> to vector<8x128xf32>
    %99 = vector.extract_strided_slice %13 {offsets = [1, 0, 0], sizes = [1, 1, 8], strides = [1, 1, 1]} : vector<2x1x8xf32> to vector<1x1x8xf32>
    %100 = vector.shape_cast %99 : vector<1x1x8xf32> to vector<1x8xf32>
    %101 = vector.extract_strided_slice %96 {offsets = [0, 0], sizes = [8, 32], strides = [1, 1]} : vector<8x128xf32> to vector<8x32xf32>
    %102 = vector.extract_strided_slice %97 {offsets = [0, 0], sizes = [8, 32], strides = [1, 1]} : vector<8x128xf32> to vector<8x32xf32>
    %cst_34 = arith.constant dense<0.000000e+00> : vector<8x8xf32>
    %103 = tpu.matmul %101, %102, %cst_34 {dimension_numbers = #tpu.dot_dimension_numbers<[1], [1], [0], [0], [0, 0, 1, 0], [], []>} : vector<8x32xf32>, vector<8x32xf32>, vector<8x8xf32> -> vector<8x8xf32>
    %cst_35 = arith.constant 0.176776692 : f32
    %104 = vector.broadcast %cst_35 : f32 to vector<8x8xf32>
    %105 = arith.mulf %103, %104 : vector<8x8xf32>
    %106 = vector.broadcast %100 : vector<1x8xf32> to vector<8x8xf32>
    %107 = arith.addf %105, %106 : vector<8x8xf32>
    %cst_36 = arith.constant dense<0xFF800000> : vector<8xf32>
    %108 = vector.multi_reduction <maximumf>, %107, %cst_36 [1] : vector<8x8xf32> to vector<8xf32>
    %109 = vector.shape_cast %108 : vector<8xf32> to vector<8x1xf32>
    %110 = vector.broadcast %109 : vector<8x1xf32> to vector<8x8xf32>
    %111 = arith.subf %107, %110 : vector<8x8xf32>
    %112 = math.exp %111 : vector<8x8xf32>
    %cst_37 = arith.constant dense<0.000000e+00> : vector<8xf32>
    %113 = vector.multi_reduction <add>, %112, %cst_37 [1] : vector<8x8xf32> to vector<8xf32>
    %114 = vector.shape_cast %113 : vector<8xf32> to vector<8x1xf32>
    %115 = tpu.reciprocal %114 {approx = true} : vector<8x1xf32> -> vector<8x1xf32>
    %116 = vector.broadcast %115 : vector<8x1xf32> to vector<8x8xf32>
    %117 = arith.mulf %112, %116 : vector<8x8xf32>
    %118 = vector.extract_strided_slice %98 {offsets = [0, 0], sizes = [8, 32], strides = [1, 1]} : vector<8x128xf32> to vector<8x32xf32>
    %cst_38 = arith.constant dense<0.000000e+00> : vector<8x32xf32>
    %119 = tpu.matmul %117, %118, %cst_38 {dimension_numbers = #tpu.dot_dimension_numbers<[1], [0], [0], [1], [0, 0, 1, 1], [], []>} : vector<8x8xf32>, vector<8x32xf32>, vector<8x32xf32> -> vector<8x32xf32>
    %120 = vector.extract_strided_slice %96 {offsets = [0, 32], sizes = [8, 32], strides = [1, 1]} : vector<8x128xf32> to vector<8x32xf32>
    %121 = vector.extract_strided_slice %97 {offsets = [0, 32], sizes = [8, 32], strides = [1, 1]} : vector<8x128xf32> to vector<8x32xf32>
    %cst_39 = arith.constant dense<0.000000e+00> : vector<8x8xf32>
    %122 = tpu.matmul %120, %121, %cst_39 {dimension_numbers = #tpu.dot_dimension_numbers<[1], [1], [0], [0], [0, 0, 1, 0], [], []>} : vector<8x32xf32>, vector<8x32xf32>, vector<8x8xf32> -> vector<8x8xf32>
    %cst_40 = arith.constant 0.176776692 : f32
    %123 = vector.broadcast %cst_40 : f32 to vector<8x8xf32>
    %124 = arith.mulf %122, %123 : vector<8x8xf32>
    %125 = vector.broadcast %100 : vector<1x8xf32> to vector<8x8xf32>
    %126 = arith.addf %124, %125 : vector<8x8xf32>
    %cst_41 = arith.constant dense<0xFF800000> : vector<8xf32>
    %127 = vector.multi_reduction <maximumf>, %126, %cst_41 [1] : vector<8x8xf32> to vector<8xf32>
    %128 = vector.shape_cast %127 : vector<8xf32> to vector<8x1xf32>
    %129 = vector.broadcast %128 : vector<8x1xf32> to vector<8x8xf32>
    %130 = arith.subf %126, %129 : vector<8x8xf32>
    %131 = math.exp %130 : vector<8x8xf32>
    %cst_42 = arith.constant dense<0.000000e+00> : vector<8xf32>
    %132 = vector.multi_reduction <add>, %131, %cst_42 [1] : vector<8x8xf32> to vector<8xf32>
    %133 = vector.shape_cast %132 : vector<8xf32> to vector<8x1xf32>
    %134 = tpu.reciprocal %133 {approx = true} : vector<8x1xf32> -> vector<8x1xf32>
    %135 = vector.broadcast %134 : vector<8x1xf32> to vector<8x8xf32>
    %136 = arith.mulf %131, %135 : vector<8x8xf32>
    %137 = vector.extract_strided_slice %98 {offsets = [0, 32], sizes = [8, 32], strides = [1, 1]} : vector<8x128xf32> to vector<8x32xf32>
    %cst_43 = arith.constant dense<0.000000e+00> : vector<8x32xf32>
    %138 = tpu.matmul %136, %137, %cst_43 {dimension_numbers = #tpu.dot_dimension_numbers<[1], [0], [0], [1], [0, 0, 1, 1], [], []>} : vector<8x8xf32>, vector<8x32xf32>, vector<8x32xf32> -> vector<8x32xf32>
    %139 = vector.extract_strided_slice %96 {offsets = [0, 64], sizes = [8, 32], strides = [1, 1]} : vector<8x128xf32> to vector<8x32xf32>
    %140 = vector.extract_strided_slice %97 {offsets = [0, 64], sizes = [8, 32], strides = [1, 1]} : vector<8x128xf32> to vector<8x32xf32>
    %cst_44 = arith.constant dense<0.000000e+00> : vector<8x8xf32>
    %141 = tpu.matmul %139, %140, %cst_44 {dimension_numbers = #tpu.dot_dimension_numbers<[1], [1], [0], [0], [0, 0, 1, 0], [], []>} : vector<8x32xf32>, vector<8x32xf32>, vector<8x8xf32> -> vector<8x8xf32>
    %cst_45 = arith.constant 0.176776692 : f32
    %142 = vector.broadcast %cst_45 : f32 to vector<8x8xf32>
    %143 = arith.mulf %141, %142 : vector<8x8xf32>
    %144 = vector.broadcast %100 : vector<1x8xf32> to vector<8x8xf32>
    %145 = arith.addf %143, %144 : vector<8x8xf32>
    %cst_46 = arith.constant dense<0xFF800000> : vector<8xf32>
    %146 = vector.multi_reduction <maximumf>, %145, %cst_46 [1] : vector<8x8xf32> to vector<8xf32>
    %147 = vector.shape_cast %146 : vector<8xf32> to vector<8x1xf32>
    %148 = vector.broadcast %147 : vector<8x1xf32> to vector<8x8xf32>
    %149 = arith.subf %145, %148 : vector<8x8xf32>
    %150 = math.exp %149 : vector<8x8xf32>
    %cst_47 = arith.constant dense<0.000000e+00> : vector<8xf32>
    %151 = vector.multi_reduction <add>, %150, %cst_47 [1] : vector<8x8xf32> to vector<8xf32>
    %152 = vector.shape_cast %151 : vector<8xf32> to vector<8x1xf32>
    %153 = tpu.reciprocal %152 {approx = true} : vector<8x1xf32> -> vector<8x1xf32>
    %154 = vector.broadcast %153 : vector<8x1xf32> to vector<8x8xf32>
    %155 = arith.mulf %150, %154 : vector<8x8xf32>
    %156 = vector.extract_strided_slice %98 {offsets = [0, 64], sizes = [8, 32], strides = [1, 1]} : vector<8x128xf32> to vector<8x32xf32>
    %cst_48 = arith.constant dense<0.000000e+00> : vector<8x32xf32>
    %157 = tpu.matmul %155, %156, %cst_48 {dimension_numbers = #tpu.dot_dimension_numbers<[1], [0], [0], [1], [0, 0, 1, 1], [], []>} : vector<8x8xf32>, vector<8x32xf32>, vector<8x32xf32> -> vector<8x32xf32>
    %158 = vector.extract_strided_slice %96 {offsets = [0, 96], sizes = [8, 32], strides = [1, 1]} : vector<8x128xf32> to vector<8x32xf32>
    %159 = vector.extract_strided_slice %97 {offsets = [0, 96], sizes = [8, 32], strides = [1, 1]} : vector<8x128xf32> to vector<8x32xf32>
    %cst_49 = arith.constant dense<0.000000e+00> : vector<8x8xf32>
    %160 = tpu.matmul %158, %159, %cst_49 {dimension_numbers = #tpu.dot_dimension_numbers<[1], [1], [0], [0], [0, 0, 1, 0], [], []>} : vector<8x32xf32>, vector<8x32xf32>, vector<8x8xf32> -> vector<8x8xf32>
    %cst_50 = arith.constant 0.176776692 : f32
    %161 = vector.broadcast %cst_50 : f32 to vector<8x8xf32>
    %162 = arith.mulf %160, %161 : vector<8x8xf32>
    %163 = vector.broadcast %100 : vector<1x8xf32> to vector<8x8xf32>
    %164 = arith.addf %162, %163 : vector<8x8xf32>
    %cst_51 = arith.constant dense<0xFF800000> : vector<8xf32>
    %165 = vector.multi_reduction <maximumf>, %164, %cst_51 [1] : vector<8x8xf32> to vector<8xf32>
    %166 = vector.shape_cast %165 : vector<8xf32> to vector<8x1xf32>
    %167 = vector.broadcast %166 : vector<8x1xf32> to vector<8x8xf32>
    %168 = arith.subf %164, %167 : vector<8x8xf32>
    %169 = math.exp %168 : vector<8x8xf32>
    %cst_52 = arith.constant dense<0.000000e+00> : vector<8xf32>
    %170 = vector.multi_reduction <add>, %169, %cst_52 [1] : vector<8x8xf32> to vector<8xf32>
    %171 = vector.shape_cast %170 : vector<8xf32> to vector<8x1xf32>
    %172 = tpu.reciprocal %171 {approx = true} : vector<8x1xf32> -> vector<8x1xf32>
    %173 = vector.broadcast %172 : vector<8x1xf32> to vector<8x8xf32>
    %174 = arith.mulf %169, %173 : vector<8x8xf32>
    %175 = vector.extract_strided_slice %98 {offsets = [0, 96], sizes = [8, 32], strides = [1, 1]} : vector<8x128xf32> to vector<8x32xf32>
    %cst_53 = arith.constant dense<0.000000e+00> : vector<8x32xf32>
    %176 = tpu.matmul %174, %175, %cst_53 {dimension_numbers = #tpu.dot_dimension_numbers<[1], [0], [0], [1], [0, 0, 1, 1], [], []>} : vector<8x8xf32>, vector<8x32xf32>, vector<8x32xf32> -> vector<8x32xf32>
    %177 = tpu.concatenate %119, %138, %157, %176 in 1 : vector<8x32xf32>, vector<8x32xf32>, vector<8x32xf32>, vector<8x32xf32> -> vector<8x128xf32>
    %178 = tpu.concatenate %95, %177 in 0 : vector<8x128xf32>, vector<8x128xf32> -> vector<16x128xf32>
    %179 = arith.truncf %178 : vector<16x128xf32> to vector<16x128xbf16>
    %c0_54 = arith.constant 0 : index
    %c0_55 = arith.constant 0 : index
    %180 = vector.load %arg7[%c0_54, %c0_55] : memref<128x128xbf16, #tpu.memory_space<vmem>>, vector<128x128xbf16>
    %cst_56 = arith.constant dense<0.000000e+00> : vector<16x128xf32>
    %181 = tpu.matmul %179, %180, %cst_56 {dimension_numbers = #tpu.dot_dimension_numbers<[1], [0], [0], [1], [0, 0, 1, 1], [], []>} : vector<16x128xbf16>, vector<128x128xbf16>, vector<16x128xf32> -> vector<16x128xf32>
    %c0_57 = arith.constant 0 : index
    %c0_58 = arith.constant 0 : index
    %182 = vector.load %arg8[%c0_57, %c0_58] : memref<1x128xf32, #tpu.memory_space<vmem>>, vector<1x128xf32>
    %183 = vector.broadcast %182 : vector<1x128xf32> to vector<16x128xf32>
    %184 = arith.addf %181, %183 : vector<16x128xf32>
    %185 = arith.addf %184, %2 : vector<16x128xf32>
    %cst_59 = arith.constant dense<0.000000e+00> : vector<16xf32>
    %186 = vector.multi_reduction <add>, %185, %cst_59 [1] : vector<16x128xf32> to vector<16xf32>
    %187 = vector.shape_cast %186 : vector<16xf32> to vector<16x1xf32>
    %cst_60 = arith.constant 1.280000e+02 : f32
    %188 = vector.broadcast %cst_60 : f32 to vector<16x1xf32>
    %189 = arith.divf %187, %188 : vector<16x1xf32>
    %190 = vector.broadcast %189 : vector<16x1xf32> to vector<16x128xf32>
    %191 = arith.subf %185, %190 : vector<16x128xf32>
    %192 = arith.mulf %191, %191 : vector<16x128xf32>
    %cst_61 = arith.constant dense<0.000000e+00> : vector<16xf32>
    %193 = vector.multi_reduction <add>, %192, %cst_61 [1] : vector<16x128xf32> to vector<16xf32>
    %194 = vector.shape_cast %193 : vector<16xf32> to vector<16x1xf32>
    %cst_62 = arith.constant 1.280000e+02 : f32
    %195 = vector.broadcast %cst_62 : f32 to vector<16x1xf32>
    %196 = arith.divf %194, %195 : vector<16x1xf32>
    %197 = vector.broadcast %189 : vector<16x1xf32> to vector<16x128xf32>
    %198 = arith.subf %185, %197 : vector<16x128xf32>
    %cst_63 = arith.constant 9.99999974E-6 : f32
    %199 = vector.broadcast %cst_63 : f32 to vector<16x1xf32>
    %200 = arith.addf %196, %199 : vector<16x1xf32>
    %201 = math.rsqrt %200 : vector<16x1xf32>
    %202 = vector.broadcast %201 : vector<16x1xf32> to vector<16x128xf32>
    %203 = arith.mulf %198, %202 : vector<16x128xf32>
    %204 = vector.broadcast %3 : vector<1x128xf32> to vector<16x128xf32>
    %205 = arith.mulf %203, %204 : vector<16x128xf32>
    %206 = vector.broadcast %4 : vector<1x128xf32> to vector<16x128xf32>
    %207 = arith.addf %205, %206 : vector<16x128xf32>
    %208 = arith.truncf %207 : vector<16x128xf32> to vector<16x128xbf16>
    %c0_64 = arith.constant 0 : index
    %c0_65 = arith.constant 0 : index
    %209 = vector.load %arg9[%c0_64, %c0_65] : memref<128x128xbf16, #tpu.memory_space<vmem>>, vector<128x128xbf16>
    %cst_66 = arith.constant dense<0.000000e+00> : vector<16x128xf32>
    %210 = tpu.matmul %208, %209, %cst_66 {dimension_numbers = #tpu.dot_dimension_numbers<[1], [0], [0], [1], [0, 0, 1, 1], [], []>} : vector<16x128xbf16>, vector<128x128xbf16>, vector<16x128xf32> -> vector<16x128xf32>
    %c0_67 = arith.constant 0 : index
    %c0_68 = arith.constant 0 : index
    %211 = vector.load %arg10[%c0_67, %c0_68] : memref<1x128xf32, #tpu.memory_space<vmem>>, vector<1x128xf32>
    %212 = vector.broadcast %211 : vector<1x128xf32> to vector<16x128xf32>
    %213 = arith.addf %210, %212 : vector<16x128xf32>
    %c0_69 = arith.constant 0 : index
    %c0_70 = arith.constant 0 : index
    %214 = vector.load %arg11[%c0_69, %c0_70] : memref<128x256xbf16, #tpu.memory_space<vmem>>, vector<128x256xbf16>
    %cst_71 = arith.constant dense<0.000000e+00> : vector<16x256xf32>
    %215 = tpu.matmul %1, %214, %cst_71 {dimension_numbers = #tpu.dot_dimension_numbers<[1], [0], [0], [1], [0, 0, 1, 1], [], []>} : vector<16x128xbf16>, vector<128x256xbf16>, vector<16x256xf32> -> vector<16x256xf32>
    %c0_72 = arith.constant 0 : index
    %c0_73 = arith.constant 0 : index
    %216 = vector.load %arg12[%c0_72, %c0_73] : memref<1x256xf32, #tpu.memory_space<vmem>>, vector<1x256xf32>
    %217 = vector.broadcast %216 : vector<1x256xf32> to vector<16x256xf32>
    %218 = arith.addf %215, %217 : vector<16x256xf32>
    %219 = vector.extract_strided_slice %218 {offsets = [0, 0], sizes = [16, 128], strides = [1, 1]} : vector<16x256xf32> to vector<16x128xf32>
    %220 = vector.extract_strided_slice %218 {offsets = [0, 128], sizes = [16, 128], strides = [1, 1]} : vector<16x256xf32> to vector<16x128xf32>
    %c0_74 = arith.constant 0 : index
    %c0_75 = arith.constant 0 : index
    %c0_76 = arith.constant 0 : index
    %221 = vector.load %arg3[%c0_74, %c0_75, %c0_76] : memref<2x1x8xf32, #tpu.memory_space<vmem>>, vector<2x1x8xf32>
    %222 = vector.extract_strided_slice %213 {offsets = [0, 0], sizes = [8, 128], strides = [1, 1]} : vector<16x128xf32> to vector<8x128xf32>
    %223 = vector.extract_strided_slice %219 {offsets = [0, 0], sizes = [8, 128], strides = [1, 1]} : vector<16x128xf32> to vector<8x128xf32>
    %224 = vector.extract_strided_slice %220 {offsets = [0, 0], sizes = [8, 128], strides = [1, 1]} : vector<16x128xf32> to vector<8x128xf32>
    %225 = vector.extract_strided_slice %221 {offsets = [0, 0, 0], sizes = [1, 1, 8], strides = [1, 1, 1]} : vector<2x1x8xf32> to vector<1x1x8xf32>
    %226 = vector.shape_cast %225 : vector<1x1x8xf32> to vector<1x8xf32>
    %227 = vector.extract_strided_slice %222 {offsets = [0, 0], sizes = [8, 32], strides = [1, 1]} : vector<8x128xf32> to vector<8x32xf32>
    %228 = vector.extract_strided_slice %223 {offsets = [0, 0], sizes = [8, 32], strides = [1, 1]} : vector<8x128xf32> to vector<8x32xf32>
    %cst_77 = arith.constant dense<0.000000e+00> : vector<8x8xf32>
    %229 = tpu.matmul %227, %228, %cst_77 {dimension_numbers = #tpu.dot_dimension_numbers<[1], [1], [0], [0], [0, 0, 1, 0], [], []>} : vector<8x32xf32>, vector<8x32xf32>, vector<8x8xf32> -> vector<8x8xf32>
    %cst_78 = arith.constant 0.176776692 : f32
    %230 = vector.broadcast %cst_78 : f32 to vector<8x8xf32>
    %231 = arith.mulf %229, %230 : vector<8x8xf32>
    %232 = vector.broadcast %226 : vector<1x8xf32> to vector<8x8xf32>
    %233 = arith.addf %231, %232 : vector<8x8xf32>
    %cst_79 = arith.constant dense<0xFF800000> : vector<8xf32>
    %234 = vector.multi_reduction <maximumf>, %233, %cst_79 [1] : vector<8x8xf32> to vector<8xf32>
    %235 = vector.shape_cast %234 : vector<8xf32> to vector<8x1xf32>
    %236 = vector.broadcast %235 : vector<8x1xf32> to vector<8x8xf32>
    %237 = arith.subf %233, %236 : vector<8x8xf32>
    %238 = math.exp %237 : vector<8x8xf32>
    %cst_80 = arith.constant dense<0.000000e+00> : vector<8xf32>
    %239 = vector.multi_reduction <add>, %238, %cst_80 [1] : vector<8x8xf32> to vector<8xf32>
    %240 = vector.shape_cast %239 : vector<8xf32> to vector<8x1xf32>
    %241 = tpu.reciprocal %240 {approx = true} : vector<8x1xf32> -> vector<8x1xf32>
    %242 = vector.broadcast %241 : vector<8x1xf32> to vector<8x8xf32>
    %243 = arith.mulf %238, %242 : vector<8x8xf32>
    %244 = vector.extract_strided_slice %224 {offsets = [0, 0], sizes = [8, 32], strides = [1, 1]} : vector<8x128xf32> to vector<8x32xf32>
    %cst_81 = arith.constant dense<0.000000e+00> : vector<8x32xf32>
    %245 = tpu.matmul %243, %244, %cst_81 {dimension_numbers = #tpu.dot_dimension_numbers<[1], [0], [0], [1], [0, 0, 1, 1], [], []>} : vector<8x8xf32>, vector<8x32xf32>, vector<8x32xf32> -> vector<8x32xf32>
    %246 = vector.extract_strided_slice %222 {offsets = [0, 32], sizes = [8, 32], strides = [1, 1]} : vector<8x128xf32> to vector<8x32xf32>
    %247 = vector.extract_strided_slice %223 {offsets = [0, 32], sizes = [8, 32], strides = [1, 1]} : vector<8x128xf32> to vector<8x32xf32>
    %cst_82 = arith.constant dense<0.000000e+00> : vector<8x8xf32>
    %248 = tpu.matmul %246, %247, %cst_82 {dimension_numbers = #tpu.dot_dimension_numbers<[1], [1], [0], [0], [0, 0, 1, 0], [], []>} : vector<8x32xf32>, vector<8x32xf32>, vector<8x8xf32> -> vector<8x8xf32>
    %cst_83 = arith.constant 0.176776692 : f32
    %249 = vector.broadcast %cst_83 : f32 to vector<8x8xf32>
    %250 = arith.mulf %248, %249 : vector<8x8xf32>
    %251 = vector.broadcast %226 : vector<1x8xf32> to vector<8x8xf32>
    %252 = arith.addf %250, %251 : vector<8x8xf32>
    %cst_84 = arith.constant dense<0xFF800000> : vector<8xf32>
    %253 = vector.multi_reduction <maximumf>, %252, %cst_84 [1] : vector<8x8xf32> to vector<8xf32>
    %254 = vector.shape_cast %253 : vector<8xf32> to vector<8x1xf32>
    %255 = vector.broadcast %254 : vector<8x1xf32> to vector<8x8xf32>
    %256 = arith.subf %252, %255 : vector<8x8xf32>
    %257 = math.exp %256 : vector<8x8xf32>
    %cst_85 = arith.constant dense<0.000000e+00> : vector<8xf32>
    %258 = vector.multi_reduction <add>, %257, %cst_85 [1] : vector<8x8xf32> to vector<8xf32>
    %259 = vector.shape_cast %258 : vector<8xf32> to vector<8x1xf32>
    %260 = tpu.reciprocal %259 {approx = true} : vector<8x1xf32> -> vector<8x1xf32>
    %261 = vector.broadcast %260 : vector<8x1xf32> to vector<8x8xf32>
    %262 = arith.mulf %257, %261 : vector<8x8xf32>
    %263 = vector.extract_strided_slice %224 {offsets = [0, 32], sizes = [8, 32], strides = [1, 1]} : vector<8x128xf32> to vector<8x32xf32>
    %cst_86 = arith.constant dense<0.000000e+00> : vector<8x32xf32>
    %264 = tpu.matmul %262, %263, %cst_86 {dimension_numbers = #tpu.dot_dimension_numbers<[1], [0], [0], [1], [0, 0, 1, 1], [], []>} : vector<8x8xf32>, vector<8x32xf32>, vector<8x32xf32> -> vector<8x32xf32>
    %265 = vector.extract_strided_slice %222 {offsets = [0, 64], sizes = [8, 32], strides = [1, 1]} : vector<8x128xf32> to vector<8x32xf32>
    %266 = vector.extract_strided_slice %223 {offsets = [0, 64], sizes = [8, 32], strides = [1, 1]} : vector<8x128xf32> to vector<8x32xf32>
    %cst_87 = arith.constant dense<0.000000e+00> : vector<8x8xf32>
    %267 = tpu.matmul %265, %266, %cst_87 {dimension_numbers = #tpu.dot_dimension_numbers<[1], [1], [0], [0], [0, 0, 1, 0], [], []>} : vector<8x32xf32>, vector<8x32xf32>, vector<8x8xf32> -> vector<8x8xf32>
    %cst_88 = arith.constant 0.176776692 : f32
    %268 = vector.broadcast %cst_88 : f32 to vector<8x8xf32>
    %269 = arith.mulf %267, %268 : vector<8x8xf32>
    %270 = vector.broadcast %226 : vector<1x8xf32> to vector<8x8xf32>
    %271 = arith.addf %269, %270 : vector<8x8xf32>
    %cst_89 = arith.constant dense<0xFF800000> : vector<8xf32>
    %272 = vector.multi_reduction <maximumf>, %271, %cst_89 [1] : vector<8x8xf32> to vector<8xf32>
    %273 = vector.shape_cast %272 : vector<8xf32> to vector<8x1xf32>
    %274 = vector.broadcast %273 : vector<8x1xf32> to vector<8x8xf32>
    %275 = arith.subf %271, %274 : vector<8x8xf32>
    %276 = math.exp %275 : vector<8x8xf32>
    %cst_90 = arith.constant dense<0.000000e+00> : vector<8xf32>
    %277 = vector.multi_reduction <add>, %276, %cst_90 [1] : vector<8x8xf32> to vector<8xf32>
    %278 = vector.shape_cast %277 : vector<8xf32> to vector<8x1xf32>
    %279 = tpu.reciprocal %278 {approx = true} : vector<8x1xf32> -> vector<8x1xf32>
    %280 = vector.broadcast %279 : vector<8x1xf32> to vector<8x8xf32>
    %281 = arith.mulf %276, %280 : vector<8x8xf32>
    %282 = vector.extract_strided_slice %224 {offsets = [0, 64], sizes = [8, 32], strides = [1, 1]} : vector<8x128xf32> to vector<8x32xf32>
    %cst_91 = arith.constant dense<0.000000e+00> : vector<8x32xf32>
    %283 = tpu.matmul %281, %282, %cst_91 {dimension_numbers = #tpu.dot_dimension_numbers<[1], [0], [0], [1], [0, 0, 1, 1], [], []>} : vector<8x8xf32>, vector<8x32xf32>, vector<8x32xf32> -> vector<8x32xf32>
    %284 = vector.extract_strided_slice %222 {offsets = [0, 96], sizes = [8, 32], strides = [1, 1]} : vector<8x128xf32> to vector<8x32xf32>
    %285 = vector.extract_strided_slice %223 {offsets = [0, 96], sizes = [8, 32], strides = [1, 1]} : vector<8x128xf32> to vector<8x32xf32>
    %cst_92 = arith.constant dense<0.000000e+00> : vector<8x8xf32>
    %286 = tpu.matmul %284, %285, %cst_92 {dimension_numbers = #tpu.dot_dimension_numbers<[1], [1], [0], [0], [0, 0, 1, 0], [], []>} : vector<8x32xf32>, vector<8x32xf32>, vector<8x8xf32> -> vector<8x8xf32>
    %cst_93 = arith.constant 0.176776692 : f32
    %287 = vector.broadcast %cst_93 : f32 to vector<8x8xf32>
    %288 = arith.mulf %286, %287 : vector<8x8xf32>
    %289 = vector.broadcast %226 : vector<1x8xf32> to vector<8x8xf32>
    %290 = arith.addf %288, %289 : vector<8x8xf32>
    %cst_94 = arith.constant dense<0xFF800000> : vector<8xf32>
    %291 = vector.multi_reduction <maximumf>, %290, %cst_94 [1] : vector<8x8xf32> to vector<8xf32>
    %292 = vector.shape_cast %291 : vector<8xf32> to vector<8x1xf32>
    %293 = vector.broadcast %292 : vector<8x1xf32> to vector<8x8xf32>
    %294 = arith.subf %290, %293 : vector<8x8xf32>
    %295 = math.exp %294 : vector<8x8xf32>
    %cst_95 = arith.constant dense<0.000000e+00> : vector<8xf32>
    %296 = vector.multi_reduction <add>, %295, %cst_95 [1] : vector<8x8xf32> to vector<8xf32>
    %297 = vector.shape_cast %296 : vector<8xf32> to vector<8x1xf32>
    %298 = tpu.reciprocal %297 {approx = true} : vector<8x1xf32> -> vector<8x1xf32>
    %299 = vector.broadcast %298 : vector<8x1xf32> to vector<8x8xf32>
    %300 = arith.mulf %295, %299 : vector<8x8xf32>
    %301 = vector.extract_strided_slice %224 {offsets = [0, 96], sizes = [8, 32], strides = [1, 1]} : vector<8x128xf32> to vector<8x32xf32>
    %cst_96 = arith.constant dense<0.000000e+00> : vector<8x32xf32>
    %302 = tpu.matmul %300, %301, %cst_96 {dimension_numbers = #tpu.dot_dimension_numbers<[1], [0], [0], [1], [0, 0, 1, 1], [], []>} : vector<8x8xf32>, vector<8x32xf32>, vector<8x32xf32> -> vector<8x32xf32>
    %303 = tpu.concatenate %245, %264, %283, %302 in 1 : vector<8x32xf32>, vector<8x32xf32>, vector<8x32xf32>, vector<8x32xf32> -> vector<8x128xf32>
    %304 = vector.extract_strided_slice %213 {offsets = [8, 0], sizes = [8, 128], strides = [1, 1]} : vector<16x128xf32> to vector<8x128xf32>
    %305 = vector.extract_strided_slice %219 {offsets = [8, 0], sizes = [8, 128], strides = [1, 1]} : vector<16x128xf32> to vector<8x128xf32>
    %306 = vector.extract_strided_slice %220 {offsets = [8, 0], sizes = [8, 128], strides = [1, 1]} : vector<16x128xf32> to vector<8x128xf32>
    %307 = vector.extract_strided_slice %221 {offsets = [1, 0, 0], sizes = [1, 1, 8], strides = [1, 1, 1]} : vector<2x1x8xf32> to vector<1x1x8xf32>
    %308 = vector.shape_cast %307 : vector<1x1x8xf32> to vector<1x8xf32>
    %309 = vector.extract_strided_slice %304 {offsets = [0, 0], sizes = [8, 32], strides = [1, 1]} : vector<8x128xf32> to vector<8x32xf32>
    %310 = vector.extract_strided_slice %305 {offsets = [0, 0], sizes = [8, 32], strides = [1, 1]} : vector<8x128xf32> to vector<8x32xf32>
    %cst_97 = arith.constant dense<0.000000e+00> : vector<8x8xf32>
    %311 = tpu.matmul %309, %310, %cst_97 {dimension_numbers = #tpu.dot_dimension_numbers<[1], [1], [0], [0], [0, 0, 1, 0], [], []>} : vector<8x32xf32>, vector<8x32xf32>, vector<8x8xf32> -> vector<8x8xf32>
    %cst_98 = arith.constant 0.176776692 : f32
    %312 = vector.broadcast %cst_98 : f32 to vector<8x8xf32>
    %313 = arith.mulf %311, %312 : vector<8x8xf32>
    %314 = vector.broadcast %308 : vector<1x8xf32> to vector<8x8xf32>
    %315 = arith.addf %313, %314 : vector<8x8xf32>
    %cst_99 = arith.constant dense<0xFF800000> : vector<8xf32>
    %316 = vector.multi_reduction <maximumf>, %315, %cst_99 [1] : vector<8x8xf32> to vector<8xf32>
    %317 = vector.shape_cast %316 : vector<8xf32> to vector<8x1xf32>
    %318 = vector.broadcast %317 : vector<8x1xf32> to vector<8x8xf32>
    %319 = arith.subf %315, %318 : vector<8x8xf32>
    %320 = math.exp %319 : vector<8x8xf32>
    %cst_100 = arith.constant dense<0.000000e+00> : vector<8xf32>
    %321 = vector.multi_reduction <add>, %320, %cst_100 [1] : vector<8x8xf32> to vector<8xf32>
    %322 = vector.shape_cast %321 : vector<8xf32> to vector<8x1xf32>
    %323 = tpu.reciprocal %322 {approx = true} : vector<8x1xf32> -> vector<8x1xf32>
    %324 = vector.broadcast %323 : vector<8x1xf32> to vector<8x8xf32>
    %325 = arith.mulf %320, %324 : vector<8x8xf32>
    %326 = vector.extract_strided_slice %306 {offsets = [0, 0], sizes = [8, 32], strides = [1, 1]} : vector<8x128xf32> to vector<8x32xf32>
    %cst_101 = arith.constant dense<0.000000e+00> : vector<8x32xf32>
    %327 = tpu.matmul %325, %326, %cst_101 {dimension_numbers = #tpu.dot_dimension_numbers<[1], [0], [0], [1], [0, 0, 1, 1], [], []>} : vector<8x8xf32>, vector<8x32xf32>, vector<8x32xf32> -> vector<8x32xf32>
    %328 = vector.extract_strided_slice %304 {offsets = [0, 32], sizes = [8, 32], strides = [1, 1]} : vector<8x128xf32> to vector<8x32xf32>
    %329 = vector.extract_strided_slice %305 {offsets = [0, 32], sizes = [8, 32], strides = [1, 1]} : vector<8x128xf32> to vector<8x32xf32>
    %cst_102 = arith.constant dense<0.000000e+00> : vector<8x8xf32>
    %330 = tpu.matmul %328, %329, %cst_102 {dimension_numbers = #tpu.dot_dimension_numbers<[1], [1], [0], [0], [0, 0, 1, 0], [], []>} : vector<8x32xf32>, vector<8x32xf32>, vector<8x8xf32> -> vector<8x8xf32>
    %cst_103 = arith.constant 0.176776692 : f32
    %331 = vector.broadcast %cst_103 : f32 to vector<8x8xf32>
    %332 = arith.mulf %330, %331 : vector<8x8xf32>
    %333 = vector.broadcast %308 : vector<1x8xf32> to vector<8x8xf32>
    %334 = arith.addf %332, %333 : vector<8x8xf32>
    %cst_104 = arith.constant dense<0xFF800000> : vector<8xf32>
    %335 = vector.multi_reduction <maximumf>, %334, %cst_104 [1] : vector<8x8xf32> to vector<8xf32>
    %336 = vector.shape_cast %335 : vector<8xf32> to vector<8x1xf32>
    %337 = vector.broadcast %336 : vector<8x1xf32> to vector<8x8xf32>
    %338 = arith.subf %334, %337 : vector<8x8xf32>
    %339 = math.exp %338 : vector<8x8xf32>
    %cst_105 = arith.constant dense<0.000000e+00> : vector<8xf32>
    %340 = vector.multi_reduction <add>, %339, %cst_105 [1] : vector<8x8xf32> to vector<8xf32>
    %341 = vector.shape_cast %340 : vector<8xf32> to vector<8x1xf32>
    %342 = tpu.reciprocal %341 {approx = true} : vector<8x1xf32> -> vector<8x1xf32>
    %343 = vector.broadcast %342 : vector<8x1xf32> to vector<8x8xf32>
    %344 = arith.mulf %339, %343 : vector<8x8xf32>
    %345 = vector.extract_strided_slice %306 {offsets = [0, 32], sizes = [8, 32], strides = [1, 1]} : vector<8x128xf32> to vector<8x32xf32>
    %cst_106 = arith.constant dense<0.000000e+00> : vector<8x32xf32>
    %346 = tpu.matmul %344, %345, %cst_106 {dimension_numbers = #tpu.dot_dimension_numbers<[1], [0], [0], [1], [0, 0, 1, 1], [], []>} : vector<8x8xf32>, vector<8x32xf32>, vector<8x32xf32> -> vector<8x32xf32>
    %347 = vector.extract_strided_slice %304 {offsets = [0, 64], sizes = [8, 32], strides = [1, 1]} : vector<8x128xf32> to vector<8x32xf32>
    %348 = vector.extract_strided_slice %305 {offsets = [0, 64], sizes = [8, 32], strides = [1, 1]} : vector<8x128xf32> to vector<8x32xf32>
    %cst_107 = arith.constant dense<0.000000e+00> : vector<8x8xf32>
    %349 = tpu.matmul %347, %348, %cst_107 {dimension_numbers = #tpu.dot_dimension_numbers<[1], [1], [0], [0], [0, 0, 1, 0], [], []>} : vector<8x32xf32>, vector<8x32xf32>, vector<8x8xf32> -> vector<8x8xf32>
    %cst_108 = arith.constant 0.176776692 : f32
    %350 = vector.broadcast %cst_108 : f32 to vector<8x8xf32>
    %351 = arith.mulf %349, %350 : vector<8x8xf32>
    %352 = vector.broadcast %308 : vector<1x8xf32> to vector<8x8xf32>
    %353 = arith.addf %351, %352 : vector<8x8xf32>
    %cst_109 = arith.constant dense<0xFF800000> : vector<8xf32>
    %354 = vector.multi_reduction <maximumf>, %353, %cst_109 [1] : vector<8x8xf32> to vector<8xf32>
    %355 = vector.shape_cast %354 : vector<8xf32> to vector<8x1xf32>
    %356 = vector.broadcast %355 : vector<8x1xf32> to vector<8x8xf32>
    %357 = arith.subf %353, %356 : vector<8x8xf32>
    %358 = math.exp %357 : vector<8x8xf32>
    %cst_110 = arith.constant dense<0.000000e+00> : vector<8xf32>
    %359 = vector.multi_reduction <add>, %358, %cst_110 [1] : vector<8x8xf32> to vector<8xf32>
    %360 = vector.shape_cast %359 : vector<8xf32> to vector<8x1xf32>
    %361 = tpu.reciprocal %360 {approx = true} : vector<8x1xf32> -> vector<8x1xf32>
    %362 = vector.broadcast %361 : vector<8x1xf32> to vector<8x8xf32>
    %363 = arith.mulf %358, %362 : vector<8x8xf32>
    %364 = vector.extract_strided_slice %306 {offsets = [0, 64], sizes = [8, 32], strides = [1, 1]} : vector<8x128xf32> to vector<8x32xf32>
    %cst_111 = arith.constant dense<0.000000e+00> : vector<8x32xf32>
    %365 = tpu.matmul %363, %364, %cst_111 {dimension_numbers = #tpu.dot_dimension_numbers<[1], [0], [0], [1], [0, 0, 1, 1], [], []>} : vector<8x8xf32>, vector<8x32xf32>, vector<8x32xf32> -> vector<8x32xf32>
    %366 = vector.extract_strided_slice %304 {offsets = [0, 96], sizes = [8, 32], strides = [1, 1]} : vector<8x128xf32> to vector<8x32xf32>
    %367 = vector.extract_strided_slice %305 {offsets = [0, 96], sizes = [8, 32], strides = [1, 1]} : vector<8x128xf32> to vector<8x32xf32>
    %cst_112 = arith.constant dense<0.000000e+00> : vector<8x8xf32>
    %368 = tpu.matmul %366, %367, %cst_112 {dimension_numbers = #tpu.dot_dimension_numbers<[1], [1], [0], [0], [0, 0, 1, 0], [], []>} : vector<8x32xf32>, vector<8x32xf32>, vector<8x8xf32> -> vector<8x8xf32>
    %cst_113 = arith.constant 0.176776692 : f32
    %369 = vector.broadcast %cst_113 : f32 to vector<8x8xf32>
    %370 = arith.mulf %368, %369 : vector<8x8xf32>
    %371 = vector.broadcast %308 : vector<1x8xf32> to vector<8x8xf32>
    %372 = arith.addf %370, %371 : vector<8x8xf32>
    %cst_114 = arith.constant dense<0xFF800000> : vector<8xf32>
    %373 = vector.multi_reduction <maximumf>, %372, %cst_114 [1] : vector<8x8xf32> to vector<8xf32>
    %374 = vector.shape_cast %373 : vector<8xf32> to vector<8x1xf32>
    %375 = vector.broadcast %374 : vector<8x1xf32> to vector<8x8xf32>
    %376 = arith.subf %372, %375 : vector<8x8xf32>
    %377 = math.exp %376 : vector<8x8xf32>
    %cst_115 = arith.constant dense<0.000000e+00> : vector<8xf32>
    %378 = vector.multi_reduction <add>, %377, %cst_115 [1] : vector<8x8xf32> to vector<8xf32>
    %379 = vector.shape_cast %378 : vector<8xf32> to vector<8x1xf32>
    %380 = tpu.reciprocal %379 {approx = true} : vector<8x1xf32> -> vector<8x1xf32>
    %381 = vector.broadcast %380 : vector<8x1xf32> to vector<8x8xf32>
    %382 = arith.mulf %377, %381 : vector<8x8xf32>
    %383 = vector.extract_strided_slice %306 {offsets = [0, 96], sizes = [8, 32], strides = [1, 1]} : vector<8x128xf32> to vector<8x32xf32>
    %cst_116 = arith.constant dense<0.000000e+00> : vector<8x32xf32>
    %384 = tpu.matmul %382, %383, %cst_116 {dimension_numbers = #tpu.dot_dimension_numbers<[1], [0], [0], [1], [0, 0, 1, 1], [], []>} : vector<8x8xf32>, vector<8x32xf32>, vector<8x32xf32> -> vector<8x32xf32>
    %385 = tpu.concatenate %327, %346, %365, %384 in 1 : vector<8x32xf32>, vector<8x32xf32>, vector<8x32xf32>, vector<8x32xf32> -> vector<8x128xf32>
    %386 = tpu.concatenate %303, %385 in 0 : vector<8x128xf32>, vector<8x128xf32> -> vector<16x128xf32>
    %387 = arith.truncf %386 : vector<16x128xf32> to vector<16x128xbf16>
    %c0_117 = arith.constant 0 : index
    %c0_118 = arith.constant 0 : index
    %388 = vector.load %arg13[%c0_117, %c0_118] : memref<128x128xbf16, #tpu.memory_space<vmem>>, vector<128x128xbf16>
    %cst_119 = arith.constant dense<0.000000e+00> : vector<16x128xf32>
    %389 = tpu.matmul %387, %388, %cst_119 {dimension_numbers = #tpu.dot_dimension_numbers<[1], [0], [0], [1], [0, 0, 1, 1], [], []>} : vector<16x128xbf16>, vector<128x128xbf16>, vector<16x128xf32> -> vector<16x128xf32>
    %c0_120 = arith.constant 0 : index
    %c0_121 = arith.constant 0 : index
    %390 = vector.load %arg14[%c0_120, %c0_121] : memref<1x128xf32, #tpu.memory_space<vmem>>, vector<1x128xf32>
    %391 = vector.broadcast %390 : vector<1x128xf32> to vector<16x128xf32>
    %392 = arith.addf %389, %391 : vector<16x128xf32>
    %393 = arith.addf %392, %207 : vector<16x128xf32>
    %cst_122 = arith.constant dense<0.000000e+00> : vector<16xf32>
    %394 = vector.multi_reduction <add>, %393, %cst_122 [1] : vector<16x128xf32> to vector<16xf32>
    %395 = vector.shape_cast %394 : vector<16xf32> to vector<16x1xf32>
    %cst_123 = arith.constant 1.280000e+02 : f32
    %396 = vector.broadcast %cst_123 : f32 to vector<16x1xf32>
    %397 = arith.divf %395, %396 : vector<16x1xf32>
    %398 = vector.broadcast %397 : vector<16x1xf32> to vector<16x128xf32>
    %399 = arith.subf %393, %398 : vector<16x128xf32>
    %400 = arith.mulf %399, %399 : vector<16x128xf32>
    %cst_124 = arith.constant dense<0.000000e+00> : vector<16xf32>
    %401 = vector.multi_reduction <add>, %400, %cst_124 [1] : vector<16x128xf32> to vector<16xf32>
    %402 = vector.shape_cast %401 : vector<16xf32> to vector<16x1xf32>
    %cst_125 = arith.constant 1.280000e+02 : f32
    %403 = vector.broadcast %cst_125 : f32 to vector<16x1xf32>
    %404 = arith.divf %402, %403 : vector<16x1xf32>
    %405 = vector.broadcast %397 : vector<16x1xf32> to vector<16x128xf32>
    %406 = arith.subf %393, %405 : vector<16x128xf32>
    %cst_126 = arith.constant 9.99999974E-6 : f32
    %407 = vector.broadcast %cst_126 : f32 to vector<16x1xf32>
    %408 = arith.addf %404, %407 : vector<16x1xf32>
    %409 = math.rsqrt %408 : vector<16x1xf32>
    %410 = vector.broadcast %409 : vector<16x1xf32> to vector<16x128xf32>
    %411 = arith.mulf %406, %410 : vector<16x128xf32>
    %412 = vector.broadcast %3 : vector<1x128xf32> to vector<16x128xf32>
    %413 = arith.mulf %411, %412 : vector<16x128xf32>
    %414 = vector.broadcast %4 : vector<1x128xf32> to vector<16x128xf32>
    %415 = arith.addf %413, %414 : vector<16x128xf32>
    %416 = arith.truncf %415 : vector<16x128xf32> to vector<16x128xbf16>
    %c0_127 = arith.constant 0 : index
    %c0_128 = arith.constant 0 : index
    %417 = vector.load %arg15[%c0_127, %c0_128] : memref<128x256xbf16, #tpu.memory_space<vmem>>, vector<128x256xbf16>
    %cst_129 = arith.constant dense<0.000000e+00> : vector<16x256xf32>
    %418 = tpu.matmul %416, %417, %cst_129 {dimension_numbers = #tpu.dot_dimension_numbers<[1], [0], [0], [1], [0, 0, 1, 1], [], []>} : vector<16x128xbf16>, vector<128x256xbf16>, vector<16x256xf32> -> vector<16x256xf32>
    %c0_130 = arith.constant 0 : index
    %c0_131 = arith.constant 0 : index
    %419 = vector.load %arg16[%c0_130, %c0_131] : memref<1x256xf32, #tpu.memory_space<vmem>>, vector<1x256xf32>
    %420 = vector.broadcast %419 : vector<1x256xf32> to vector<16x256xf32>
    %421 = arith.addf %418, %420 : vector<16x256xf32>
    %cst_132 = arith.constant 0.000000e+00 : f32
    %422 = vector.broadcast %cst_132 : f32 to vector<16x256xf32>
    %423 = arith.maximumf %421, %422 : vector<16x256xf32>
    %424 = arith.truncf %423 : vector<16x256xf32> to vector<16x256xbf16>
    %c0_133 = arith.constant 0 : index
    %c0_134 = arith.constant 0 : index
    %425 = vector.load %arg17[%c0_133, %c0_134] : memref<256x128xbf16, #tpu.memory_space<vmem>>, vector<256x128xbf16>
    %cst_135 = arith.constant dense<0.000000e+00> : vector<16x128xf32>
    %426 = tpu.matmul %424, %425, %cst_135 {dimension_numbers = #tpu.dot_dimension_numbers<[1], [0], [0], [1], [0, 0, 1, 1], [], []>} : vector<16x256xbf16>, vector<256x128xbf16>, vector<16x128xf32> -> vector<16x128xf32>
    %c0_136 = arith.constant 0 : index
    %c0_137 = arith.constant 0 : index
    %427 = vector.load %arg18[%c0_136, %c0_137] : memref<1x128xf32, #tpu.memory_space<vmem>>, vector<1x128xf32>
    %428 = vector.broadcast %427 : vector<1x128xf32> to vector<16x128xf32>
    %429 = arith.addf %426, %428 : vector<16x128xf32>
    %430 = arith.addf %429, %415 : vector<16x128xf32>
    %cst_138 = arith.constant dense<0.000000e+00> : vector<16xf32>
    %431 = vector.multi_reduction <add>, %430, %cst_138 [1] : vector<16x128xf32> to vector<16xf32>
    %432 = vector.shape_cast %431 : vector<16xf32> to vector<16x1xf32>
    %cst_139 = arith.constant 1.280000e+02 : f32
    %433 = vector.broadcast %cst_139 : f32 to vector<16x1xf32>
    %434 = arith.divf %432, %433 : vector<16x1xf32>
    %435 = vector.broadcast %434 : vector<16x1xf32> to vector<16x128xf32>
    %436 = arith.subf %430, %435 : vector<16x128xf32>
    %437 = arith.mulf %436, %436 : vector<16x128xf32>
    %cst_140 = arith.constant dense<0.000000e+00> : vector<16xf32>
    %438 = vector.multi_reduction <add>, %437, %cst_140 [1] : vector<16x128xf32> to vector<16xf32>
    %439 = vector.shape_cast %438 : vector<16xf32> to vector<16x1xf32>
    %cst_141 = arith.constant 1.280000e+02 : f32
    %440 = vector.broadcast %cst_141 : f32 to vector<16x1xf32>
    %441 = arith.divf %439, %440 : vector<16x1xf32>
    %442 = vector.broadcast %434 : vector<16x1xf32> to vector<16x128xf32>
    %443 = arith.subf %430, %442 : vector<16x128xf32>
    %cst_142 = arith.constant 9.99999974E-6 : f32
    %444 = vector.broadcast %cst_142 : f32 to vector<16x1xf32>
    %445 = arith.addf %441, %444 : vector<16x1xf32>
    %446 = math.rsqrt %445 : vector<16x1xf32>
    %447 = vector.broadcast %446 : vector<16x1xf32> to vector<16x128xf32>
    %448 = arith.mulf %443, %447 : vector<16x128xf32>
    %449 = vector.broadcast %3 : vector<1x128xf32> to vector<16x128xf32>
    %450 = arith.mulf %448, %449 : vector<16x128xf32>
    %451 = vector.broadcast %4 : vector<1x128xf32> to vector<16x128xf32>
    %452 = arith.addf %450, %451 : vector<16x128xf32>
    %453 = arith.truncf %452 : vector<16x128xf32> to vector<16x128xbf16>
    %c0_143 = arith.constant 0 : index
    %c0_144 = arith.constant 0 : index
    %454 = vector.load %arg21[%c0_143, %c0_144] : memref<16x128xbf16, #tpu.memory_space<vmem>>, vector<16x128xbf16>
    tpu.vector_store %arg21[%c0_143, %c0_144], %453 {strides = array<i32>} : memref<16x128xbf16, #tpu.memory_space<vmem>>, vector<16x128xbf16>,
    return
  }
  func.func @transform_0(%arg0: i32) -> (i32, i32) {
    %c0_i32 = arith.constant 0 : i32
    %c0_i32_0 = arith.constant 0 : i32
    return %arg0, %c0_i32 : i32, i32
  }
  func.func @transform_1(%arg0: i32) -> (i32, i32) {
    %c0_i32 = arith.constant 0 : i32
    %c0_i32_0 = arith.constant 0 : i32
    return %arg0, %c0_i32 : i32, i32
  }
  func.func @transform_2(%arg0: i32) -> (i32, i32, i32) {
    %c0_i32 = arith.constant 0 : i32
    %c0_i32_0 = arith.constant 0 : i32
    %c0_i32_1 = arith.constant 0 : i32
    return %arg0, %c0_i32, %c0_i32_0 : i32, i32, i32
  }
  func.func @transform_3(%arg0: i32) -> (i32, i32, i32) {
    %c0_i32 = arith.constant 0 : i32
    %c0_i32_0 = arith.constant 0 : i32
    %c0_i32_1 = arith.constant 0 : i32
    return %arg0, %c0_i32, %c0_i32_0 : i32, i32, i32
  }
  func.func @transform_4(%arg0: i32) -> (i32, i32) {
    %c0_i32 = arith.constant 0 : i32
    %c0_i32_0 = arith.constant 0 : i32
    %c0_i32_1 = arith.constant 0 : i32
    return %c0_i32, %c0_i32_0 : i32, i32
  }
  func.func @transform_5(%arg0: i32) -> (i32, i32) {
    %c0_i32 = arith.constant 0 : i32
    %c0_i32_0 = arith.constant 0 : i32
    %c0_i32_1 = arith.constant 0 : i32
    return %c0_i32, %c0_i32_0 : i32, i32
  }
  func.func @transform_6(%arg0: i32) -> (i32, i32) {
    %c0_i32 = arith.constant 0 : i32
    %c0_i32_0 = arith.constant 0 : i32
    %c0_i32_1 = arith.constant 0 : i32
    return %c0_i32, %c0_i32_0 : i32, i32
  }
  func.func @transform_7(%arg0: i32) -> (i32, i32) {
    %c0_i32 = arith.constant 0 : i32
    %c0_i32_0 = arith.constant 0 : i32
    %c0_i32_1 = arith.constant 0 : i32
    return %c0_i32, %c0_i32_0 : i32, i32
  }
  func.func @transform_8(%arg0: i32) -> (i32, i32) {
    %c0_i32 = arith.constant 0 : i32
    %c0_i32_0 = arith.constant 0 : i32
    %c0_i32_1 = arith.constant 0 : i32
    return %c0_i32, %c0_i32_0 : i32, i32
  }
  func.func @transform_9(%arg0: i32) -> (i32, i32) {
    %c0_i32 = arith.constant 0 : i32
    %c0_i32_0 = arith.constant 0 : i32
    %c0_i32_1 = arith.constant 0 : i32
    return %c0_i32, %c0_i32_0 : i32, i32
  }
  func.func @transform_10(%arg0: i32) -> (i32, i32) {
    %c0_i32 = arith.constant 0 : i32
    %c0_i32_0 = arith.constant 0 : i32
    %c0_i32_1 = arith.constant 0 : i32
    return %c0_i32, %c0_i32_0 : i32, i32
  }
  func.func @transform_11(%arg0: i32) -> (i32, i32) {
    %c0_i32 = arith.constant 0 : i32
    %c0_i32_0 = arith.constant 0 : i32
    %c0_i32_1 = arith.constant 0 : i32
    return %c0_i32, %c0_i32_0 : i32, i32
  }
  func.func @transform_12(%arg0: i32) -> (i32, i32) {
    %c0_i32 = arith.constant 0 : i32
    %c0_i32_0 = arith.constant 0 : i32
    %c0_i32_1 = arith.constant 0 : i32
    return %c0_i32, %c0_i32_0 : i32, i32
  }
  func.func @transform_13(%arg0: i32) -> (i32, i32) {
    %c0_i32 = arith.constant 0 : i32
    %c0_i32_0 = arith.constant 0 : i32
    %c0_i32_1 = arith.constant 0 : i32
    return %c0_i32, %c0_i32_0 : i32, i32
  }
  func.func @transform_14(%arg0: i32) -> (i32, i32) {
    %c0_i32 = arith.constant 0 : i32
    %c0_i32_0 = arith.constant 0 : i32
    %c0_i32_1 = arith.constant 0 : i32
    return %c0_i32, %c0_i32_0 : i32, i32
  }
  func.func @transform_15(%arg0: i32) -> (i32, i32) {
    %c0_i32 = arith.constant 0 : i32
    %c0_i32_0 = arith.constant 0 : i32
    %c0_i32_1 = arith.constant 0 : i32
    return %c0_i32, %c0_i32_0 : i32, i32
  }
  func.func @transform_16(%arg0: i32) -> (i32, i32) {
    %c0_i32 = arith.constant 0 : i32
    %c0_i32_0 = arith.constant 0 : i32
    %c0_i32_1 = arith.constant 0 : i32
    return %c0_i32, %c0_i32_0 : i32, i32
  }
  func.func @transform_17(%arg0: i32) -> (i32, i32) {
    %c0_i32 = arith.constant 0 : i32
    %c0_i32_0 = arith.constant 0 : i32
    %c0_i32_1 = arith.constant 0 : i32
    return %c0_i32, %c0_i32_0 : i32, i32
  }
  func.func @transform_18(%arg0: i32) -> (i32, i32) {
    %c0_i32 = arith.constant 0 : i32
    %c0_i32_0 = arith.constant 0 : i32
    %c0_i32_1 = arith.constant 0 : i32
    return %c0_i32, %c0_i32_0 : i32, i32
  }
  func.func @transform_19(%arg0: i32) -> (i32, i32) {
    %c0_i32 = arith.constant 0 : i32
    %c0_i32_0 = arith.constant 0 : i32
    %c0_i32_1 = arith.constant 0 : i32
    return %c0_i32, %c0_i32_0 : i32, i32
  }
  func.func @transform_20(%arg0: i32) -> (i32, i32) {
    %c0_i32 = arith.constant 0 : i32
    %c0_i32_0 = arith.constant 0 : i32
    return %arg0, %c0_i32 : i32, i32
  }
}

</mosaic_0001>

<llo_original>
// kernel: tpu_custom_call.1
$region0: #{tpu_custom_call.1}
  #allocation0 [shape = 'u32[]', space=smem, size = 0x4, offset = 0x4, fixed_abs, tag = 'smem constant byte address 0x4 - core index']
  #allocation1 [shape = 'u32[72,128]{1,0:T(1,128)}', space=vmem, size = 0x9000, scoped, tag = 'internal scratch']
  %s0 = inlined_call_operand.hbm [shape: bf16[16,128], index: 0, kind: input, shape index: {}]
  %s1 = inlined_call_operand.hbm [shape: bf16[16,128], index: 1, kind: input, shape index: {}]
  %s2 = inlined_call_operand.hbm [shape: f32[2,1,8], index: 2, kind: input, shape index: {}]
  %s3 = inlined_call_operand.hbm [shape: f32[2,1,8], index: 3, kind: input, shape index: {}]
  %s4 = inlined_call_operand.hbm [shape: bf16[128,384], index: 4, kind: input, shape index: {}]
  %s5 = inlined_call_operand.vmem [shape: f32[1,384], index: 5, kind: input, shape index: {}]
  %s6 = inlined_call_operand.hbm [shape: bf16[128,128], index: 6, kind: input, shape index: {}]
  %s7 = inlined_call_operand.hbm [shape: f32[1,128], index: 7, kind: input, shape index: {}]
  %s8 = inlined_call_operand.hbm [shape: bf16[128,128], index: 8, kind: input, shape index: {}]
  %s9 = inlined_call_operand.vmem [shape: f32[1,128], index: 9, kind: input, shape index: {}]
  %s10 = inlined_call_operand.hbm [shape: bf16[128,256], index: 10, kind: input, shape index: {}]
  %s11 = inlined_call_operand.vmem [shape: f32[1,256], index: 11, kind: input, shape index: {}]
  %s12 = inlined_call_operand.hbm [shape: bf16[128,128], index: 12, kind: input, shape index: {}]
  %s13 = inlined_call_operand.vmem [shape: f32[1,128], index: 13, kind: input, shape index: {}]
  %s14 = inlined_call_operand.hbm [shape: bf16[128,256], index: 14, kind: input, shape index: {}]
  %s15 = inlined_call_operand.vmem [shape: f32[1,256], index: 15, kind: input, shape index: {}]
  %s16 = inlined_call_operand.hbm [shape: bf16[256,128], index: 16, kind: input, shape index: {}]
  %s17 = inlined_call_operand.vmem [shape: f32[1,128], index: 17, kind: input, shape index: {}]
  %s18 = inlined_call_operand.vmem [shape: f32[1,128], index: 18, kind: input, shape index: {}]
  %s19 = inlined_call_operand.vmem [shape: f32[1,128], index: 19, kind: input, shape index: {}]
  %s20 = inlined_call_operand.hbm [shape: bf16[16,128], index: 20, kind: output, shape index: {}]
  %s21 = sld [smem:[#allocation0]]
  $region138: #{tpu_custom_call.1} parent=0
    _
  %s23 = ssub.s32 1, %s21
  %s24 = scalar_select 0, %s23, %s21
  $region1: #{tpu_custom_call.1} parent=0
    #allocation2 [shape = 'u8[4096]{0}', space=vmem, size = 0x1000, scoped, tag = 'input window, operand 0, single buffered']
    #allocation3 [shape = 's32[1]{0}', space=sflag, size = 0x4, scoped, tag = 'scoped memory for tpu_custom_call.1']
    #allocation4 [shape = 's32[1]{0}', space=sflag, size = 0x4, scoped, tag = 'scoped memory for tpu_custom_call.1']
    #allocation5 [shape = 'u8[4096]{0}', space=vmem, size = 0x1000, scoped, tag = 'input window, operand 1, single buffered']
    #allocation6 [shape = 's32[1]{0}', space=sflag, size = 0x4, scoped, tag = 'scoped memory for tpu_custom_call.1']
    #allocation7 [shape = 'u8[1024]{0}', space=vmem, size = 0x400, scoped, tag = 'input window, operand 2, single buffered']
    #allocation8 [shape = 'u8[1024]{0}', space=vmem, size = 0x400, scoped, tag = 'input window, operand 3, single buffered']
    #allocation9 [shape = 's32[1]{0}', space=sflag, size = 0x4, scoped, tag = 'scoped memory for tpu_custom_call.1']
    #allocation10 [shape = 'u8[98304]{0}', space=vmem, size = 0x18000, scoped, tag = 'input window, operand 4, single buffered']
    #allocation11 [shape = 'u8[32768]{0}', space=vmem, size = 0x8000, scoped, tag = 'input window, operand 6, single buffered']
    #allocation12 [shape = 's32[1]{0}', space=sflag, size = 0x4, scoped, tag = 'scoped memory for tpu_custom_call.1']
    #allocation13 [shape = 'u8[512]{0}', space=vmem, size = 0x400, scoped, tag = 'input window, operand 7, single buffered']
    #allocation14 [shape = 'u8[32768]{0}', space=vmem, size = 0x8000, scoped, tag = 'input window, operand 8, single buffered']
    #allocation15 [shape = 's32[1]{0}', space=sflag, size = 0x4, scoped, tag = 'scoped memory for tpu_custom_call.1']
    #allocation16 [shape = 'u8[65536]{0}', space=vmem, size = 0x10000, scoped, tag = 'input window, operand 10, single buffered']
    #allocation17 [shape = 'u8[32768]{0}', space=vmem, size = 0x8000, scoped, tag = 'input window, operand 12, single buffered']
    #allocation18 [shape = 's32[1]{0}', space=sflag, size = 0x4, scoped, tag = 'scoped memory for tpu_custom_call.1']
    #allocation19 [shape = 'u8[65536]{0}', space=vmem, size = 0x10000, scoped, tag = 'input window, operand 14, single buffered']
    #allocation20 [shape = 'u8[65536]{0}', space=vmem, size = 0x10000, scoped, tag = 'input window, operand 16, single buffered']
    #allocation21 [shape = 's32[1]{0}', space=sflag, size = 0x4, scoped, tag = 'scoped memory for tpu_custom_call.1']
    #allocation22 [shape = 'u8[4096]{0}', space=vmem, size = 0x1000, scoped, tag = 'output window, operand 0, single buffered']
    %25 = vsyncpa [#allocation3], 0
    %26 = vsyncpa [#allocation6], 0
    %27 = vsyncpa [#allocation9], 0
    %28 = vsyncpa [#allocation12], 0
    %29 = vsyncpa [#allocation15], 0
    %30 = vsyncpa [#allocation18], 0
    %31 = vsyncpa [#allocation21], 0
    %32 = vsyncpa [#allocation4], 0
    // Predicated region
    $region2: #{tpu_custom_call.1} parent=1 // pred_check
      _
    $region3: #{tpu_custom_call.1} parent=1 // pred_check_branch
      %34 = sbr.rel (0) target = $region5
    $region4: #{tpu_custom_call.1} parent=1 // pred_region
      %36 = vsyncadd [#allocation3], 0
      %s37 = sshll.u32 %s0, 4
      %s38 = int_to_ptr.hbm [resolvable:$true] %s37
      %s39 = sshll.u32 [#allocation2], 4
      %s40 = int_to_ptr.vmem [resolvable:$true] %s39
      %45 = dma.hbm_to_vmem [thread:$0]  %s38, 128, %s40, [#allocation3], 64, 64, 4
    $region5: #{tpu_custom_call.1} parent=1 // pred_fallthru
      _
    // Predicated region
    $region6: #{tpu_custom_call.1} parent=1 // pred_check
      _
    $region7: #{tpu_custom_call.1} parent=1 // pred_check_branch
      %47 = sbr.rel (0) target = $region9
    $region8: #{tpu_custom_call.1} parent=1 // pred_region
      %49 = vsyncadd [#allocation6], 0
      %s50 = sshll.u32 %s1, 4
      %s51 = int_to_ptr.hbm [resolvable:$true] %s50
      %s52 = sshll.u32 [#allocation5], 4
      %s53 = int_to_ptr.vmem [resolvable:$true] %s52
      %58 = dma.hbm_to_vmem [thread:$0]  %s51, 128, %s53, [#allocation6], 64, 64, 4
    $region9: #{tpu_custom_call.1} parent=1 // pred_fallthru
      _
    // Predicated region
    $region10: #{tpu_custom_call.1} parent=1 // pred_check
      _
    $region11: #{tpu_custom_call.1} parent=1 // pred_check_branch
      %60 = sbr.rel (0) target = $region13
    $region12: #{tpu_custom_call.1} parent=1 // pred_region
      %62 = vsyncadd [#allocation6], 0
      %s63 = sshll.u32 %s2, 4
      %s64 = int_to_ptr.hbm [resolvable:$true] %s63
      %s65 = sshll.u32 [#allocation7], 4
      %s66 = int_to_ptr.vmem [resolvable:$true] %s65
      %71 = dma.hbm_to_vmem [thread:$0]  %s64, 32, %s66, [#allocation6], 16, 16, 1
    $region13: #{tpu_custom_call.1} parent=1 // pred_fallthru
      _
    // Predicated region
    $region14: #{tpu_custom_call.1} parent=1 // pred_check
      _
    $region15: #{tpu_custom_call.1} parent=1 // pred_check_branch
      %73 = sbr.rel (0) target = $region17
    $region16: #{tpu_custom_call.1} parent=1 // pred_region
      %75 = vsyncadd [#allocation9], 0
      %s76 = sshll.u32 %s3, 4
      %s77 = int_to_ptr.hbm [resolvable:$true] %s76
      %s78 = sshll.u32 [#allocation8], 4
      %s79 = int_to_ptr.vmem [resolvable:$true] %s78
      %84 = dma.hbm_to_vmem [thread:$0]  %s77, 32, %s79, [#allocation9], 16, 16, 1
    $region17: #{tpu_custom_call.1} parent=1 // pred_fallthru
      _
    // Predicated region
    $region18: #{tpu_custom_call.1} parent=1 // pred_check
      _
    $region19: #{tpu_custom_call.1} parent=1 // pred_check_branch
      %86 = sbr.rel (0) target = $region21
    $region20: #{tpu_custom_call.1} parent=1 // pred_region
      %88 = vsyncadd [#allocation9], 0
      %s89 = sshll.u32 %s4, 4
      %s90 = int_to_ptr.hbm [resolvable:$true] %s89
      %s91 = sshll.u32 [#allocation10], 4
      %s92 = int_to_ptr.vmem [resolvable:$true] %s91
      %97 = dma.hbm_to_vmem [thread:$0]  %s90, 3072, %s92, [#allocation9], 192, 192, 12
    $region21: #{tpu_custom_call.1} parent=1 // pred_fallthru
      _
    // Predicated region
    $region22: #{tpu_custom_call.1} parent=1 // pred_check
      _
    $region23: #{tpu_custom_call.1} parent=1 // pred_check_branch
      %99 = sbr.rel (0) target = $region25
    $region24: #{tpu_custom_call.1} parent=1 // pred_region
      _
    $region25: #{tpu_custom_call.1} parent=1 // pred_fallthru
      _
    // Predicated region
    $region26: #{tpu_custom_call.1} parent=1 // pred_check
      _
    $region27: #{tpu_custom_call.1} parent=1 // pred_check_branch
      %101 = sbr.rel (0) target = $region29
    $region28: #{tpu_custom_call.1} parent=1 // pred_region
      %103 = vsyncadd [#allocation12], 0
      %s104 = sshll.u32 %s6, 4
      %s105 = int_to_ptr.hbm [resolvable:$true] %s104
      %s106 = sshll.u32 [#allocation11], 4
      %s107 = int_to_ptr.vmem [resolvable:$true] %s106
      %112 = dma.hbm_to_vmem [thread:$0]  %s105, 1024, %s107, [#allocation12], 64, 64, 4
    $region29: #{tpu_custom_call.1} parent=1 // pred_fallthru
      _
    // Predicated region
    $region30: #{tpu_custom_call.1} parent=1 // pred_check
      _
    $region31: #{tpu_custom_call.1} parent=1 // pred_check_branch
      %114 = sbr.rel (0) target = $region33
    $region32: #{tpu_custom_call.1} parent=1 // pred_region
      %116 = vsyncadd [#allocation12], 0
      %s118 = sshll.u32 %s7, 4
      %s119 = int_to_ptr.hbm [resolvable:$true] %s118
      %s120 = sshll.u32 [#allocation13], 4
      %s121 = int_to_ptr.vmem [resolvable:$true] %s120
      %123 = dma.hbm_to_vmem [thread:$0]  %s119, 16, %s121, [#allocation12]
    $region33: #{tpu_custom_call.1} parent=1 // pred_fallthru
      _
    // Predicated region
    $region34: #{tpu_custom_call.1} parent=1 // pred_check
      _
    $region35: #{tpu_custom_call.1} parent=1 // pred_check_branch
      %125 = sbr.rel (0) target = $region37
    $region36: #{tpu_custom_call.1} parent=1 // pred_region
      %127 = vsyncadd [#allocation15], 0
      %s128 = sshll.u32 %s8, 4
      %s129 = int_to_ptr.hbm [resolvable:$true] %s128
      %s130 = sshll.u32 [#allocation14], 4
      %s131 = int_to_ptr.vmem [resolvable:$true] %s130
      %136 = dma.hbm_to_vmem [thread:$0]  %s129, 1024, %s131, [#allocation15], 64, 64, 4
    $region37: #{tpu_custom_call.1} parent=1 // pred_fallthru
      _
    // Predicated region
    $region38: #{tpu_custom_call.1} parent=1 // pred_check
      _
    $region39: #{tpu_custom_call.1} parent=1 // pred_check_branch
      %138 = sbr.rel (0) target = $region41
    $region40: #{tpu_custom_call.1} parent=1 // pred_region
      _
    $region41: #{tpu_custom_call.1} parent=1 // pred_fallthru
      _
    // Predicated region
    $region42: #{tpu_custom_call.1} parent=1 // pred_check
      _
    $region43: #{tpu_custom_call.1} parent=1 // pred_check_branch
      %140 = sbr.rel (0) target = $region45
    $region44: #{tpu_custom_call.1} parent=1 // pred_region
      %142 = vsyncadd [#allocation15], 0
      %s143 = sshll.u32 %s10, 4
      %s144 = int_to_ptr.hbm [resolvable:$true] %s143
      %s145 = sshll.u32 [#allocation16], 4
      %s146 = int_to_ptr.vmem [resolvable:$true] %s145
      %151 = dma.hbm_to_vmem [thread:$0]  %s144, 2048, %s146, [#allocation15], 128, 128, 8
    $region45: #{tpu_custom_call.1} parent=1 // pred_fallthru
      _
    // Predicated region
    $region46: #{tpu_custom_call.1} parent=1 // pred_check
      _
    $region47: #{tpu_custom_call.1} parent=1 // pred_check_branch
      %153 = sbr.rel (0) target = $region49
    $region48: #{tpu_custom_call.1} parent=1 // pred_region
      _
    $region49: #{tpu_custom_call.1} parent=1 // pred_fallthru
      _
    // Predicated region
    $region50: #{tpu_custom_call.1} parent=1 // pred_check
      _
    $region51: #{tpu_custom_call.1} parent=1 // pred_check_branch
      %155 = sbr.rel (0) target = $region53
    $region52: #{tpu_custom_call.1} parent=1 // pred_region
      %157 = vsyncadd [#allocation18], 0
      %s158 = sshll.u32 %s12, 4
      %s159 = int_to_ptr.hbm [resolvable:$true] %s158
      %s160 = sshll.u32 [#allocation17], 4
      %s161 = int_to_ptr.vmem [resolvable:$true] %s160
      %166 = dma.hbm_to_vmem [thread:$0]  %s159, 1024, %s161, [#allocation18], 64, 64, 4
    $region53: #{tpu_custom_call.1} parent=1 // pred_fallthru
      _
    // Predicated region
    $region54: #{tpu_custom_call.1} parent=1 // pred_check
      _
    $region55: #{tpu_custom_call.1} parent=1 // pred_check_branch
      %168 = sbr.rel (0) target = $region57
    $region56: #{tpu_custom_call.1} parent=1 // pred_region
      _
    $region57: #{tpu_custom_call.1} parent=1 // pred_fallthru
      _
    // Predicated region
    $region58: #{tpu_custom_call.1} parent=1 // pred_check
      _
    $region59: #{tpu_custom_call.1} parent=1 // pred_check_branch
      %170 = sbr.rel (0) target = $region61
    $region60: #{tpu_custom_call.1} parent=1 // pred_region
      %172 = vsyncadd [#allocation18], 0
      %s173 = sshll.u32 %s14, 4
      %s174 = int_to_ptr.hbm [resolvable:$true] %s173
      %s175 = sshll.u32 [#allocation19], 4
      %s176 = int_to_ptr.vmem [resolvable:$true] %s175
      %181 = dma.hbm_to_vmem [thread:$0]  %s174, 2048, %s176, [#allocation18], 128, 128, 8
    $region61: #{tpu_custom_call.1} parent=1 // pred_fallthru
      _
    // Predicated region
    $region62: #{tpu_custom_call.1} parent=1 // pred_check
      _
    $region63: #{tpu_custom_call.1} parent=1 // pred_check_branch
      %183 = sbr.rel (0) target = $region65
    $region64: #{tpu_custom_call.1} parent=1 // pred_region
      _
    $region65: #{tpu_custom_call.1} parent=1 // pred_fallthru
      _
    // Predicated region
    $region66: #{tpu_custom_call.1} parent=1 // pred_check
      _
    $region67: #{tpu_custom_call.1} parent=1 // pred_check_branch
      %185 = sbr.rel (0) target = $region69
    $region68: #{tpu_custom_call.1} parent=1 // pred_region
      %187 = vsyncadd [#allocation21], 0
      %s188 = sshll.u32 %s16, 4
      %s189 = int_to_ptr.hbm [resolvable:$true] %s188
      %s190 = sshll.u32 [#allocation20], 4
      %s191 = int_to_ptr.vmem [resolvable:$true] %s190
      %196 = dma.hbm_to_vmem [thread:$0]  %s189, 2048, %s191, [#allocation21], 64, 64, 4
    $region69: #{tpu_custom_call.1} parent=1 // pred_fallthru
      _
    // Predicated region
    $region70: #{tpu_custom_call.1} parent=1 // pred_check
      _
    $region71: #{tpu_custom_call.1} parent=1 // pred_check_branch
      %198 = sbr.rel (0) target = $region73
    $region72: #{tpu_custom_call.1} parent=1 // pred_region
      _
    $region73: #{tpu_custom_call.1} parent=1 // pred_fallthru
      _
    // Predicated region
    $region74: #{tpu_custom_call.1} parent=1 // pred_check
      _
    $region75: #{tpu_custom_call.1} parent=1 // pred_check_branch
      %200 = sbr.rel (0) target = $region77
    $region76: #{tpu_custom_call.1} parent=1 // pred_region
      _
    $region77: #{tpu_custom_call.1} parent=1 // pred_fallthru
      _
    // Predicated region
    $region78: #{tpu_custom_call.1} parent=1 // pred_check
      _
    $region79: #{tpu_custom_call.1} parent=1 // pred_check_branch
      %202 = sbr.rel (0) target = $region81
    $region80: #{tpu_custom_call.1} parent=1 // pred_region
      _
    $region81: #{tpu_custom_call.1} parent=1 // pred_fallthru
      _
    // Predicated region
    $region82: #{tpu_custom_call.1} parent=1 // pred_check
      _
    $region83: #{tpu_custom_call.1} parent=1 // pred_check_branch
      %204 = sbr.rel (0) target = $region85
    $region84: #{tpu_custom_call.1} parent=1 // pred_region
      %206 = dma.done [#allocation3], 128
    $region85: #{tpu_custom_call.1} parent=1 // pred_fallthru
      _
    // Predicated region
    $region86: #{tpu_custom_call.1} parent=1 // pred_check
      _
    $region87: #{tpu_custom_call.1} parent=1 // pred_check_branch
      %208 = sbr.rel (0) target = $region89
    $region88: #{tpu_custom_call.1} parent=1 // pred_region
      %210 = dma.done [#allocation6], 128
    $region89: #{tpu_custom_call.1} parent=1 // pred_fallthru
      _
    // Predicated region
    $region90: #{tpu_custom_call.1} parent=1 // pred_check
      _
    $region91: #{tpu_custom_call.1} parent=1 // pred_check_branch
      %212 = sbr.rel (0) target = $region93
    $region92: #{tpu_custom_call.1} parent=1 // pred_region
      %214 = dma.done [#allocation6], 32
    $region93: #{tpu_custom_call.1} parent=1 // pred_fallthru
      _
    // Predicated region
    $region94: #{tpu_custom_call.1} parent=1 // pred_check
      _
    $region95: #{tpu_custom_call.1} parent=1 // pred_check_branch
      %216 = sbr.rel (0) target = $region97
    $region96: #{tpu_custom_call.1} parent=1 // pred_region
      %218 = dma.done [#allocation9], 32
    $region97: #{tpu_custom_call.1} parent=1 // pred_fallthru
      _
    // Predicated region
    $region98: #{tpu_custom_call.1} parent=1 // pred_check
      _
    $region99: #{tpu_custom_call.1} parent=1 // pred_check_branch
      %220 = sbr.rel (0) target = $region101
    $region100: #{tpu_custom_call.1} parent=1 // pred_region
      %222 = dma.done [#allocation9], 3072
    $region101: #{tpu_custom_call.1} parent=1 // pred_fallthru
      _
    // Predicated region
    $region102: #{tpu_custom_call.1} parent=1 // pred_check
      _
    $region103: #{tpu_custom_call.1} parent=1 // pred_check_branch
      %224 = sbr.rel (0) target = $region105
    $region104: #{tpu_custom_call.1} parent=1 // pred_region
      %226 = dma.done [#allocation12], 1024
    $region105: #{tpu_custom_call.1} parent=1 // pred_fallthru
      _
    // Predicated region
    $region106: #{tpu_custom_call.1} parent=1 // pred_check
      _
    $region107: #{tpu_custom_call.1} parent=1 // pred_check_branch
      %228 = sbr.rel (0) target = $region109
    $region108: #{tpu_custom_call.1} parent=1 // pred_region
      %230 = dma.done [#allocation12], 16
    $region109: #{tpu_custom_call.1} parent=1 // pred_fallthru
      _
    // Predicated region
    $region110: #{tpu_custom_call.1} parent=1 // pred_check
      _
    $region111: #{tpu_custom_call.1} parent=1 // pred_check_branch
      %232 = sbr.rel (0) target = $region113
    $region112: #{tpu_custom_call.1} parent=1 // pred_region
      %234 = dma.done [#allocation15], 1024
    $region113: #{tpu_custom_call.1} parent=1 // pred_fallthru
      _
    // Predicated region
    $region114: #{tpu_custom_call.1} parent=1 // pred_check
      _
    $region115: #{tpu_custom_call.1} parent=1 // pred_check_branch
      %236 = sbr.rel (0) target = $region117
    $region116: #{tpu_custom_call.1} parent=1 // pred_region
      %238 = dma.done [#allocation15], 2048
    $region117: #{tpu_custom_call.1} parent=1 // pred_fallthru
      _
    // Predicated region
    $region118: #{tpu_custom_call.1} parent=1 // pred_check
      _
    $region119: #{tpu_custom_call.1} parent=1 // pred_check_branch
      %240 = sbr.rel (0) target = $region121
    $region120: #{tpu_custom_call.1} parent=1 // pred_region
      %242 = dma.done [#allocation18], 1024
    $region121: #{tpu_custom_call.1} parent=1 // pred_fallthru
      _
    // Predicated region
    $region122: #{tpu_custom_call.1} parent=1 // pred_check
      _
    $region123: #{tpu_custom_call.1} parent=1 // pred_check_branch
      %244 = sbr.rel (0) target = $region125
    $region124: #{tpu_custom_call.1} parent=1 // pred_region
      %246 = dma.done [#allocation18], 2048
    $region125: #{tpu_custom_call.1} parent=1 // pred_fallthru
      _
    // Predicated region
    $region126: #{tpu_custom_call.1} parent=1 // pred_check
      _
    $region127: #{tpu_custom_call.1} parent=1 // pred_check_branch
      %248 = sbr.rel (0) target = $region129
    $region128: #{tpu_custom_call.1} parent=1 // pred_region
      %250 = dma.done [#allocation21], 2048
    $region129: #{tpu_custom_call.1} parent=1 // pred_fallthru
      _
    %v251 = vld [vmem:[#allocation2] sm:$0xf]
    %v252 = vld [vmem:[#allocation2 + $0x4] sm:$0xf]
    %v253 = vld [vmem:[#allocation5] sm:$0xf]
    %v254 = vld [vmem:[#allocation5 + $0x4] sm:$0xf]
    %v255 = vunpack.c.l.bf16 %v251
    %v256 = vunpack.c.l.bf16 %v252
    %v257 = vld [vmem:[%s18] sm:$0x1]
    %v258 = vld [vmem:[%s19] sm:$0x1]
    %v259 = vld [vmem:[#allocation10] sm:$0xff]
    %v260 = vld [vmem:[#allocation10 + $0x8] sm:$0xf]
    %v261 = vld [vmem:[#allocation10 + $0xc] sm:$0xff]
    %v262 = vld [vmem:[#allocation10 + $0x14] sm:$0xf]
    %v263 = vld [vmem:[#allocation10 + $0x18] sm:$0xff]
    %v264 = vld [vmem:[#allocation10 + $0x20] sm:$0xf]
    %v265 = vld [vmem:[#allocation10 + $0x24] sm:$0xff]
    %v266 = vld [vmem:[#allocation10 + $0x2c] sm:$0xf]
    %v267 = vld [vmem:[#allocation10 + $0x30] sm:$0xff]
    %v268 = vld [vmem:[#allocation10 + $0x38] sm:$0xf]
    %v269 = vld [vmem:[#allocation10 + $0x3c] sm:$0xff]
    %v270 = vld [vmem:[#allocation10 + $0x44] sm:$0xf]
    %v271 = vld [vmem:[#allocation10 + $0x48] sm:$0xff]
    %v272 = vld [vmem:[#allocation10 + $0x50] sm:$0xf]
    %v273 = vld [vmem:[#allocation10 + $0x54] sm:$0xff]
    %v274 = vld [vmem:[#allocation10 + $0x5c] sm:$0xf]
    %v275 = vld [vmem:[#allocation10 + $0x60] sm:$0xff]
    %v276 = vld [vmem:[#allocation10 + $0x68] sm:$0xf]
    %v277 = vld [vmem:[#allocation10 + $0x6c] sm:$0xff]
    %v278 = vld [vmem:[#allocation10 + $0x74] sm:$0xf]
    %v279 = vld [vmem:[#allocation10 + $0x78] sm:$0xff]
    %v280 = vld [vmem:[#allocation10 + $0x80] sm:$0xf]
    %v281 = vld [vmem:[#allocation10 + $0x84] sm:$0xff]
    %v282 = vld [vmem:[#allocation10 + $0x8c] sm:$0xf]
    %v283 = vld [vmem:[#allocation10 + $0x90] sm:$0xff]
    %v284 = vld [vmem:[#allocation10 + $0x98] sm:$0xf]
    %v285 = vld [vmem:[#allocation10 + $0x9c] sm:$0xff]
    %v286 = vld [vmem:[#allocation10 + $0xa4] sm:$0xf]
    %v287 = vld [vmem:[#allocation10 + $0xa8] sm:$0xff]
    %v288 = vld [vmem:[#allocation10 + $0xb0] sm:$0xf]
    %v289 = vld [vmem:[#allocation10 + $0xb4] sm:$0xff]
    %v290 = vld [vmem:[#allocation10 + $0xbc] sm:$0xf]
    %v291 = vld [vmem:[%s5] sm:$0x7]
    %v293 = vperm.slane %v291, 0
    %v294 = vperm.slane %v291, 1
    %v295 = vperm.slane %v291, 2
    %v301 = vunpack.c.l.b16 %v251
    %v302 = vunpack.c.l.b16 %v252
    %v303 = vpack.c.b16 %v302, %v301
    %v337 = vunpack.c.l.b16 %v259
    %v338 = vunpack.c.h.b16 %v259
    %v339 = vunpack.c.l.b16 %v260
    %v340 = vunpack.c.l.b16 %v261
    %v341 = vunpack.c.h.b16 %v261
    %v342 = vunpack.c.l.b16 %v262
    %v343 = vunpack.c.l.b16 %v263
    %v344 = vunpack.c.h.b16 %v263
    %v345 = vunpack.c.l.b16 %v264
    %v346 = vunpack.c.l.b16 %v265
    %v347 = vunpack.c.h.b16 %v265
    %v348 = vunpack.c.l.b16 %v266
    %v349 = vunpack.c.l.b16 %v267
    %v350 = vunpack.c.h.b16 %v267
    %v351 = vunpack.c.l.b16 %v268
    %v352 = vunpack.c.l.b16 %v269
    %v353 = vunpack.c.h.b16 %v269
    %v354 = vunpack.c.l.b16 %v270
    %v355 = vunpack.c.l.b16 %v271
    %v356 = vunpack.c.h.b16 %v271
    %v357 = vunpack.c.l.b16 %v272
    %v358 = vunpack.c.l.b16 %v273
    %v359 = vunpack.c.h.b16 %v273
    %v360 = vunpack.c.l.b16 %v274
    %v361 = vunpack.c.l.b16 %v275
    %v362 = vunpack.c.h.b16 %v275
    %v363 = vunpack.c.l.b16 %v276
    %v364 = vunpack.c.l.b16 %v277
    %v365 = vunpack.c.h.b16 %v277
    %v366 = vunpack.c.l.b16 %v278
    %v367 = vunpack.c.l.b16 %v279
    %v368 = vunpack.c.h.b16 %v279
    %v369 = vunpack.c.l.b16 %v280
    %v370 = vunpack.c.l.b16 %v281
    %v371 = vunpack.c.h.b16 %v281
    %v372 = vunpack.c.l.b16 %v282
    %v373 = vunpack.c.l.b16 %v283
    %v374 = vunpack.c.h.b16 %v283
    %v375 = vunpack.c.l.b16 %v284
    %v376 = vunpack.c.l.b16 %v285
    %v377 = vunpack.c.h.b16 %v285
    %v378 = vunpack.c.l.b16 %v286
    %v379 = vunpack.c.l.b16 %v287
    %v380 = vunpack.c.h.b16 %v287
    %v381 = vunpack.c.l.b16 %v288
    %v382 = vunpack.c.l.b16 %v289
    %v383 = vunpack.c.h.b16 %v289
    %v384 = vunpack.c.l.b16 %v290
    %v385 = vpack.c.b16 %v340, %v337
    %v386 = vpack.c.b16 %v341, %v338
    %v387 = vpack.c.b16 %v342, %v339
    %v388 = vpack.c.b16 %v346, %v343
    %v389 = vpack.c.b16 %v347, %v344
    %v390 = vpack.c.b16 %v348, %v345
    %v391 = vpack.c.b16 %v352, %v349
    %v392 = vpack.c.b16 %v353, %v350
    %v393 = vpack.c.b16 %v354, %v351
    %v394 = vpack.c.b16 %v358, %v355
    %v395 = vpack.c.b16 %v359, %v356
    %v396 = vpack.c.b16 %v360, %v357
    %v397 = vpack.c.b16 %v364, %v361
    %v398 = vpack.c.b16 %v365, %v362
    %v399 = vpack.c.b16 %v366, %v363
    %v400 = vpack.c.b16 %v370, %v367
    %v401 = vpack.c.b16 %v371, %v368
    %v402 = vpack.c.b16 %v372, %v369
    %v403 = vpack.c.b16 %v376, %v373
    %v404 = vpack.c.b16 %v377, %v374
    %v405 = vpack.c.b16 %v378, %v375
    %v406 = vpack.c.b16 %v382, %v379
    %v407 = vpack.c.b16 %v383, %v380
    %v408 = vpack.c.b16 %v384, %v381
    %433 = vmatpush.bf16.msra.mxu0 %v406
    %434 = vmatpush.bf16.msra.mxu0 %v403
    %435 = vmatpush.bf16.msra.mxu0 %v400
    %436 = vmatpush.bf16.msra.mxu0 %v397
    %437 = vmatpush.bf16.msra.mxu0 %v394
    %438 = vmatpush.bf16.msra.mxu0 %v391
    %439 = vmatpush.bf16.msra.mxu0 %v388
    %440 = vmatpush.bf16.msra.mxu0 %v385
    %441 = vmatmul.bf16.gmra.mxu0 %v303
    %v442 = vpop.f32.mrf.mxu0
    %v443 = vadd.f32 %v293, %v442
    %v444 = vpop.f32.mrf.mxu0
    %v445 = vadd.f32 %v293, %v444
    %446 = vdwg.mxu0
    %447 = vmatpush.bf16.msra.mxu0 %v407
    %448 = vmatpush.bf16.msra.mxu0 %v404
    %449 = vmatpush.bf16.msra.mxu0 %v401
    %450 = vmatpush.bf16.msra.mxu0 %v398
    %451 = vmatpush.bf16.msra.mxu0 %v395
    %452 = vmatpush.bf16.msra.mxu0 %v392
    %453 = vmatpush.bf16.msra.mxu0 %v389
    %454 = vmatpush.bf16.msra.mxu0 %v386
    %455 = vmatmul.bf16.gmra.mxu0 %v303
    %v456 = vpop.f32.mrf.mxu0
    %v457 = vadd.f32 %v294, %v456
    %v458 = vpop.f32.mrf.mxu0
    %v459 = vadd.f32 %v294, %v458
    %460 = vdwg.mxu0
    %461 = vmatpush.bf16.msra.mxu0 %v408
    %462 = vmatpush.bf16.msra.mxu0 %v405
    %463 = vmatpush.bf16.msra.mxu0 %v402
    %464 = vmatpush.bf16.msra.mxu0 %v399
    %465 = vmatpush.bf16.msra.mxu0 %v396
    %466 = vmatpush.bf16.msra.mxu0 %v393
    %467 = vmatpush.bf16.msra.mxu0 %v390
    %468 = vmatpush.bf16.msra.mxu0 %v387
    %469 = vmatmul.bf16.gmra.mxu0 %v303
    %v470 = vpop.f32.mrf.mxu0
    %v471 = vadd.f32 %v295, %v470
    %v472 = vpop.f32.mrf.mxu0
    %v473 = vadd.f32 %v295, %v472
    %474 = vdwg.mxu0
    %v475 = vld [vmem:[#allocation8] sm:$0x1]
    %v476 = vld [vmem:[#allocation8 + $0x1] sm:$0x1]
    %vm477 = vcmask 261120
    %v479 = vsel %vm477, %v443, 0
    %v482 = vsel %vm477, %v457, 0
    %484 = vmatpush.xpose.msra.mxu0 0.0
    %485 = vmatpush.xpose.msra.mxu0 0.0
    %486 = vmatpush.xpose.msra.mxu0 0.0
    %487 = vmatpush.xpose.msra.mxu0 0.0
    %488 = vmatpush.xpose.msra.mxu0 0.0
    %489 = vmatpush.xpose.msra.mxu0 0.0
    %490 = vmatpush.xpose.msra.mxu0 0.0
    %491 = vmatpush.xpose.msra.mxu0 0.0
    %492 = vmatpush.xpose.msra.mxu0 0.0
    %493 = vmatpush.xpose.msra.mxu0 0.0
    %494 = vmatpush.xpose.msra.mxu0 0.0
    %495 = vmatpush.xpose.msra.mxu0 0.0
    %496 = vmatpush.xpose.msra.mxu0 0.0
    %497 = vmatpush.xpose.msra.mxu0 0.0
    %498 = vmatpush.xpose.msra.mxu0 0.0
    %499 = vmatpush.xpose.msra.mxu0 %v482
    %500 = vmatmul.f32.gmra.mxu0 %v479
    %v501 = vpop.f32.mrf.mxu0
    %v502 = vadd.f32 0.0, %v501
    %503 = vdwg.mxu0
    %v504 = vmul.f32 %v502, 0.17677669
    %v506 = vperm.slane %v475, 0
    %v508 = vadd.f32 %v504, %v506
    %vm509 = vcmask 64512
    %v510 = vsel %vm509, %v508, -inf
    %511 = vmax.xlane.f32.xlu0 %v510
    %v512 = vpop.xlane.xlu0 %511
    %v513 = vsub.f32 %v508, %v512
    %v514 = vmul.f32 %v513, 1.442695
    %v515 = vpow.pop %v514
    %v516 = vsel %vm509, %v515, 0.0
    %517 = vadd.xlane.f32.xlu0 %v516
    %v518 = vpop.xlane.xlu0 %517
    %v519 = vrcp.pop %v518
    %v520 = vmul.f32 %v515, %v519
    %v522 = vsel %vm509, %v520, 0
    %524 = vmatpush.msra.mxu0 0.0
    %525 = vmatpush.msra.mxu0 0.0
    %526 = vmatpush.msra.mxu0 0.0
    %527 = vmatpush.msra.mxu0 0.0
    %528 = vmatpush.msra.mxu0 0.0
    %529 = vmatpush.msra.mxu0 0.0
    %530 = vmatpush.msra.mxu0 0.0
    %531 = vmatpush.msra.mxu0 0.0
    %532 = vmatpush.msra.mxu0 0.0
    %533 = vmatpush.msra.mxu0 0.0
    %534 = vmatpush.msra.mxu0 0.0
    %535 = vmatpush.msra.mxu0 0.0
    %536 = vmatpush.msra.mxu0 0.0
    %537 = vmatpush.msra.mxu0 0.0
    %538 = vmatpush.msra.mxu0 0.0
    %539 = vmatpush.msra.mxu0 %v471
    %540 = vmatmul.f32.gmra.mxu0 %v522
    %v541 = vpop.f32.mrf.mxu0
    %v542 = vadd.f32 0.0, %v541
    %543 = vdwg.mxu0
    %544 = vrot.lane.b32.xlu0 %v443, 96
    %v545 = vpop.permute.xlu0 %544
    %546 = vrot.lane.b32.xlu0 %v457, 96
    %v547 = vpop.permute.xlu0 %546
    %v548 = vsel %vm477, %v545, 0
    %v550 = vsel %vm477, %v547, 0
    %552 = vmatpush.xpose.msra.mxu0 0.0
    %553 = vmatpush.xpose.msra.mxu0 0.0
    %554 = vmatpush.xpose.msra.mxu0 0.0
    %555 = vmatpush.xpose.msra.mxu0 0.0
    %556 = vmatpush.xpose.msra.mxu0 0.0
    %557 = vmatpush.xpose.msra.mxu0 0.0
    %558 = vmatpush.xpose.msra.mxu0 0.0
    %559 = vmatpush.xpose.msra.mxu0 0.0
    %560 = vmatpush.xpose.msra.mxu0 0.0
    %561 = vmatpush.xpose.msra.mxu0 0.0
    %562 = vmatpush.xpose.msra.mxu0 0.0
    %563 = vmatpush.xpose.msra.mxu0 0.0
    %564 = vmatpush.xpose.msra.mxu0 0.0
    %565 = vmatpush.xpose.msra.mxu0 0.0
    %566 = vmatpush.xpose.msra.mxu0 0.0
    %567 = vmatpush.xpose.msra.mxu0 %v550
    %568 = vmatmul.f32.gmra.mxu0 %v548
    %v569 = vpop.f32.mrf.mxu0
    %v570 = vadd.f32 0.0, %v569
    %571 = vdwg.mxu0
    %v572 = vmul.f32 %v570, 0.17677669
    %v573 = vadd.f32 %v572, %v506
    %v574 = vsel %vm509, %v573, -inf
    %575 = vmax.xlane.f32.xlu0 %v574
    %v576 = vpop.xlane.xlu0 %575
    %v577 = vsub.f32 %v573, %v576
    %v578 = vmul.f32 %v577, 1.442695
    %v579 = vpow.pop %v578
    %v580 = vsel %vm509, %v579, 0.0
    %581 = vadd.xlane.f32.xlu0 %v580
    %v582 = vpop.xlane.xlu0 %581
    %v583 = vrcp.pop %v582
    %v584 = vmul.f32 %v579, %v583
    %586 = vrot.lane.b32.xlu0 %v471, 96
    %v587 = vpop.permute.xlu0 %586
    %v590 = vsel %vm509, %v584, 0
    %592 = vmatpush.msra.mxu0 0.0
    %593 = vmatpush.msra.mxu0 0.0
    %594 = vmatpush.msra.mxu0 0.0
    %595 = vmatpush.msra.mxu0 0.0
    %596 = vmatpush.msra.mxu0 0.0
    %597 = vmatpush.msra.mxu0 0.0
    %598 = vmatpush.msra.mxu0 0.0
    %599 = vmatpush.msra.mxu0 0.0
    %600 = vmatpush.msra.mxu0 0.0
    %601 = vmatpush.msra.mxu0 0.0
    %602 = vmatpush.msra.mxu0 0.0
    %603 = vmatpush.msra.mxu0 0.0
    %604 = vmatpush.msra.mxu0 0.0
    %605 = vmatpush.msra.mxu0 0.0
    %606 = vmatpush.msra.mxu0 0.0
    %607 = vmatpush.msra.mxu0 %v587
    %608 = vmatmul.f32.gmra.mxu0 %v590
    %v609 = vpop.f32.mrf.mxu0
    %v610 = vadd.f32 0.0, %v609
    %611 = vdwg.mxu0
    %612 = vrot.lane.b32.xlu0 %v443, 64
    %v613 = vpop.permute.xlu0 %612
    %614 = vrot.lane.b32.xlu0 %v457, 64
    %v615 = vpop.permute.xlu0 %614
    %v616 = vsel %vm477, %v613, 0
    %v618 = vsel %vm477, %v615, 0
    %620 = vmatpush.xpose.msra.mxu0 0.0
    %621 = vmatpush.xpose.msra.mxu0 0.0
    %622 = vmatpush.xpose.msra.mxu0 0.0
    %623 = vmatpush.xpose.msra.mxu0 0.0
    %624 = vmatpush.xpose.msra.mxu0 0.0
    %625 = vmatpush.xpose.msra.mxu0 0.0
    %626 = vmatpush.xpose.msra.mxu0 0.0
    %627 = vmatpush.xpose.msra.mxu0 0.0
    %628 = vmatpush.xpose.msra.mxu0 0.0
    %629 = vmatpush.xpose.msra.mxu0 0.0
    %630 = vmatpush.xpose.msra.mxu0 0.0
    %631 = vmatpush.xpose.msra.mxu0 0.0
    %632 = vmatpush.xpose.msra.mxu0 0.0
    %633 = vmatpush.xpose.msra.mxu0 0.0
    %634 = vmatpush.xpose.msra.mxu0 0.0
    %635 = vmatpush.xpose.msra.mxu0 %v618
    %636 = vmatmul.f32.gmra.mxu0 %v616
    %v637 = vpop.f32.mrf.mxu0
    %v638 = vadd.f32 0.0, %v637
    %639 = vdwg.mxu0
    %v640 = vmul.f32 %v638, 0.17677669
    %v641 = vadd.f32 %v640, %v506
    %v642 = vsel %vm509, %v641, -inf
    %643 = vmax.xlane.f32.xlu0 %v642
    %v644 = vpop.xlane.xlu0 %643
    %v645 = vsub.f32 %v641, %v644
    %v646 = vmul.f32 %v645, 1.442695
    %v647 = vpow.pop %v646
    %v648 = vsel %vm509, %v647, 0.0
    %649 = vadd.xlane.f32.xlu0 %v648
    %v650 = vpop.xlane.xlu0 %649
    %v651 = vrcp.pop %v650
    %v652 = vmul.f32 %v647, %v651
    %653 = vrot.lane.b32.xlu0 %v471, 64
    %v654 = vpop.permute.xlu0 %653
    %v657 = vsel %vm509, %v652, 0
    %659 = vmatpush.msra.mxu0 0.0
    %660 = vmatpush.msra.mxu0 0.0
    %661 = vmatpush.msra.mxu0 0.0
    %662 = vmatpush.msra.mxu0 0.0
    %663 = vmatpush.msra.mxu0 0.0
    %664 = vmatpush.msra.mxu0 0.0
    %665 = vmatpush.msra.mxu0 0.0
    %666 = vmatpush.msra.mxu0 0.0
    %667 = vmatpush.msra.mxu0 0.0
    %668 = vmatpush.msra.mxu0 0.0
    %669 = vmatpush.msra.mxu0 0.0
    %670 = vmatpush.msra.mxu0 0.0
    %671 = vmatpush.msra.mxu0 0.0
    %672 = vmatpush.msra.mxu0 0.0
    %673 = vmatpush.msra.mxu0 0.0
    %674 = vmatpush.msra.mxu0 %v654
    %675 = vmatmul.f32.gmra.mxu0 %v657
    %v676 = vpop.f32.mrf.mxu0
    %v677 = vadd.f32 0.0, %v676
    %678 = vdwg.mxu0
    %679 = vrot.lane.b32.xlu0 %v443, 32
    %v680 = vpop.permute.xlu0 %679
    %681 = vrot.lane.b32.xlu0 %v457, 32
    %v682 = vpop.permute.xlu0 %681
    %v683 = vsel %vm477, %v680, 0
    %v685 = vsel %vm477, %v682, 0
    %687 = vmatpush.xpose.msra.mxu0 0.0
    %688 = vmatpush.xpose.msra.mxu0 0.0
    %689 = vmatpush.xpose.msra.mxu0 0.0
    %690 = vmatpush.xpose.msra.mxu0 0.0
    %691 = vmatpush.xpose.msra.mxu0 0.0
    %692 = vmatpush.xpose.msra.mxu0 0.0
    %693 = vmatpush.xpose.msra.mxu0 0.0
    %694 = vmatpush.xpose.msra.mxu0 0.0
    %695 = vmatpush.xpose.msra.mxu0 0.0
    %696 = vmatpush.xpose.msra.mxu0 0.0
    %697 = vmatpush.xpose.msra.mxu0 0.0
    %698 = vmatpush.xpose.msra.mxu0 0.0
    %699 = vmatpush.xpose.msra.mxu0 0.0
    %700 = vmatpush.xpose.msra.mxu0 0.0
    %701 = vmatpush.xpose.msra.mxu0 0.0
    %702 = vmatpush.xpose.msra.mxu0 %v685
    %703 = vmatmul.f32.gmra.mxu0 %v683
    %v704 = vpop.f32.mrf.mxu0
    %v705 = vadd.f32 0.0, %v704
    %706 = vdwg.mxu0
    %v707 = vmul.f32 %v705, 0.17677669
    %v708 = vadd.f32 %v707, %v506
    %v709 = vsel %vm509, %v708, -inf
    %710 = vmax.xlane.f32.xlu0 %v709
    %v711 = vpop.xlane.xlu0 %710
    %v712 = vsub.f32 %v708, %v711
    %v713 = vmul.f32 %v712, 1.442695
    %v714 = vpow.pop %v713
    %v715 = vsel %vm509, %v714, 0.0
    %716 = vadd.xlane.f32.xlu0 %v715
    %v717 = vpop.xlane.xlu0 %716
    %v718 = vrcp.pop %v717
    %v719 = vmul.f32 %v714, %v718
    %720 = vrot.lane.b32.xlu0 %v471, 32
    %v721 = vpop.permute.xlu0 %720
    %v724 = vsel %vm509, %v719, 0
    %726 = vmatpush.msra.mxu0 0.0
    %727 = vmatpush.msra.mxu0 0.0
    %728 = vmatpush.msra.mxu0 0.0
    %729 = vmatpush.msra.mxu0 0.0
    %730 = vmatpush.msra.mxu0 0.0
    %731 = vmatpush.msra.mxu0 0.0
    %732 = vmatpush.msra.mxu0 0.0
    %733 = vmatpush.msra.mxu0 0.0
    %734 = vmatpush.msra.mxu0 0.0
    %735 = vmatpush.msra.mxu0 0.0
    %736 = vmatpush.msra.mxu0 0.0
    %737 = vmatpush.msra.mxu0 0.0
    %738 = vmatpush.msra.mxu0 0.0
    %739 = vmatpush.msra.mxu0 0.0
    %740 = vmatpush.msra.mxu0 0.0
    %741 = vmatpush.msra.mxu0 %v721
    %742 = vmatmul.f32.gmra.mxu0 %v724
    %v743 = vpop.f32.mrf.mxu0
    %v744 = vadd.f32 0.0, %v743
    %745 = vdwg.mxu0
    %747 = vrot.lane.b32.xlu0 %v610, 32
    %v748 = vpop.permute.xlu0 %747
    %751 = vrot.lane.b32.xlu0 %v677, 64
    %v752 = vpop.permute.xlu0 %751
    %755 = vrot.lane.b32.xlu0 %v744, 96
    %v756 = vpop.permute.xlu0 %755
    %v758 = vsel %vm477, %v542, %v748
    %vm759 = vcmask 523264
    %v760 = vsel %vm759, %v758, %v752
    %vm761 = vcmask 785408
    %v762 = vsel %vm761, %v760, %v756
    %v764 = vsel %vm477, %v445, 0
    %v767 = vsel %vm477, %v459, 0
    %769 = vmatpush.xpose.msra.mxu0 0.0
    %770 = vmatpush.xpose.msra.mxu0 0.0
    %771 = vmatpush.xpose.msra.mxu0 0.0
    %772 = vmatpush.xpose.msra.mxu0 0.0
    %773 = vmatpush.xpose.msra.mxu0 0.0
    %774 = vmatpush.xpose.msra.mxu0 0.0
    %775 = vmatpush.xpose.msra.mxu0 0.0
    %776 = vmatpush.xpose.msra.mxu0 0.0
    %777 = vmatpush.xpose.msra.mxu0 0.0
    %778 = vmatpush.xpose.msra.mxu0 0.0
    %779 = vmatpush.xpose.msra.mxu0 0.0
    %780 = vmatpush.xpose.msra.mxu0 0.0
    %781 = vmatpush.xpose.msra.mxu0 0.0
    %782 = vmatpush.xpose.msra.mxu0 0.0
    %783 = vmatpush.xpose.msra.mxu0 0.0
    %784 = vmatpush.xpose.msra.mxu0 %v767
    %785 = vmatmul.f32.gmra.mxu0 %v764
    %v786 = vpop.f32.mrf.mxu0
    %v787 = vadd.f32 0.0, %v786
    %788 = vdwg.mxu0
    %v789 = vmul.f32 %v787, 0.17677669
    %v791 = vperm.slane %v476, 0
    %v793 = vadd.f32 %v789, %v791
    %v794 = vsel %vm509, %v793, -inf
    %795 = vmax.xlane.f32.xlu0 %v794
    %v796 = vpop.xlane.xlu0 %795
    %v797 = vsub.f32 %v793, %v796
    %v798 = vmul.f32 %v797, 1.442695
    %v799 = vpow.pop %v798
    %v800 = vsel %vm509, %v799, 0.0
    %801 = vadd.xlane.f32.xlu0 %v800
    %v802 = vpop.xlane.xlu0 %801
    %v803 = vrcp.pop %v802
    %v804 = vmul.f32 %v799, %v803
    %v806 = vsel %vm509, %v804, 0
    %808 = vmatpush.msra.mxu0 0.0
    %809 = vmatpush.msra.mxu0 0.0
    %810 = vmatpush.msra.mxu0 0.0
    %811 = vmatpush.msra.mxu0 0.0
    %812 = vmatpush.msra.mxu0 0.0
    %813 = vmatpush.msra.mxu0 0.0
    %814 = vmatpush.msra.mxu0 0.0
    %815 = vmatpush.msra.mxu0 0.0
    %816 = vmatpush.msra.mxu0 0.0
    %817 = vmatpush.msra.mxu0 0.0
    %818 = vmatpush.msra.mxu0 0.0
    %819 = vmatpush.msra.mxu0 0.0
    %820 = vmatpush.msra.mxu0 0.0
    %821 = vmatpush.msra.mxu0 0.0
    %822 = vmatpush.msra.mxu0 0.0
    %823 = vmatpush.msra.mxu0 %v473
    %824 = vmatmul.f32.gmra.mxu0 %v806
    %v825 = vpop.f32.mrf.mxu0
    %v826 = vadd.f32 0.0, %v825
    %827 = vdwg.mxu0
    %828 = vrot.lane.b32.xlu0 %v445, 96
    %v829 = vpop.permute.xlu0 %828
    %830 = vrot.lane.b32.xlu0 %v459, 96
    %v831 = vpop.permute.xlu0 %830
    %v832 = vsel %vm477, %v829, 0
    %v834 = vsel %vm477, %v831, 0
    %836 = vmatpush.xpose.msra.mxu0 0.0
    %837 = vmatpush.xpose.msra.mxu0 0.0
    %838 = vmatpush.xpose.msra.mxu0 0.0
    %839 = vmatpush.xpose.msra.mxu0 0.0
    %840 = vmatpush.xpose.msra.mxu0 0.0
    %841 = vmatpush.xpose.msra.mxu0 0.0
    %842 = vmatpush.xpose.msra.mxu0 0.0
    %843 = vmatpush.xpose.msra.mxu0 0.0
    %844 = vmatpush.xpose.msra.mxu0 0.0
    %845 = vmatpush.xpose.msra.mxu0 0.0
    %846 = vmatpush.xpose.msra.mxu0 0.0
    %847 = vmatpush.xpose.msra.mxu0 0.0
    %848 = vmatpush.xpose.msra.mxu0 0.0
    %849 = vmatpush.xpose.msra.mxu0 0.0
    %850 = vmatpush.xpose.msra.mxu0 0.0
    %851 = vmatpush.xpose.msra.mxu0 %v834
    %852 = vmatmul.f32.gmra.mxu0 %v832
    %v853 = vpop.f32.mrf.mxu0
    %v854 = vadd.f32 0.0, %v853
    %855 = vdwg.mxu0
    %v856 = vmul.f32 %v854, 0.17677669
    %v857 = vadd.f32 %v856, %v791
    %v858 = vsel %vm509, %v857, -inf
    %859 = vmax.xlane.f32.xlu0 %v858
    %v860 = vpop.xlane.xlu0 %859
    %v861 = vsub.f32 %v857, %v860
    %v862 = vmul.f32 %v861, 1.442695
    %v863 = vpow.pop %v862
    %v864 = vsel %vm509, %v863, 0.0
    %865 = vadd.xlane.f32.xlu0 %v864
    %v866 = vpop.xlane.xlu0 %865
    %v867 = vrcp.pop %v866
    %v868 = vmul.f32 %v863, %v867
    %870 = vrot.lane.b32.xlu0 %v473, 96
    %v871 = vpop.permute.xlu0 %870
    %v874 = vsel %vm509, %v868, 0
    %876 = vmatpush.msra.mxu0 0.0
    %877 = vmatpush.msra.mxu0 0.0
    %878 = vmatpush.msra.mxu0 0.0
    %879 = vmatpush.msra.mxu0 0.0
    %880 = vmatpush.msra.mxu0 0.0
    %881 = vmatpush.msra.mxu0 0.0
    %882 = vmatpush.msra.mxu0 0.0
    %883 = vmatpush.msra.mxu0 0.0
    %884 = vmatpush.msra.mxu0 0.0
    %885 = vmatpush.msra.mxu0 0.0
    %886 = vmatpush.msra.mxu0 0.0
    %887 = vmatpush.msra.mxu0 0.0
    %888 = vmatpush.msra.mxu0 0.0
    %889 = vmatpush.msra.mxu0 0.0
    %890 = vmatpush.msra.mxu0 0.0
    %891 = vmatpush.msra.mxu0 %v871
    %892 = vmatmul.f32.gmra.mxu0 %v874
    %v893 = vpop.f32.mrf.mxu0
    %v894 = vadd.f32 0.0, %v893
    %895 = vdwg.mxu0
    %896 = vrot.lane.b32.xlu0 %v445, 64
    %v897 = vpop.permute.xlu0 %896
    %898 = vrot.lane.b32.xlu0 %v459, 64
    %v899 = vpop.permute.xlu0 %898
    %v900 = vsel %vm477, %v897, 0
    %v902 = vsel %vm477, %v899, 0
    %904 = vmatpush.xpose.msra.mxu0 0.0
    %905 = vmatpush.xpose.msra.mxu0 0.0
    %906 = vmatpush.xpose.msra.mxu0 0.0
    %907 = vmatpush.xpose.msra.mxu0 0.0
    %908 = vmatpush.xpose.msra.mxu0 0.0
    %909 = vmatpush.xpose.msra.mxu0 0.0
    %910 = vmatpush.xpose.msra.mxu0 0.0
    %911 = vmatpush.xpose.msra.mxu0 0.0
    %912 = vmatpush.xpose.msra.mxu0 0.0
    %913 = vmatpush.xpose.msra.mxu0 0.0
    %914 = vmatpush.xpose.msra.mxu0 0.0
    %915 = vmatpush.xpose.msra.mxu0 0.0
    %916 = vmatpush.xpose.msra.mxu0 0.0
    %917 = vmatpush.xpose.msra.mxu0 0.0
    %918 = vmatpush.xpose.msra.mxu0 0.0
    %919 = vmatpush.xpose.msra.mxu0 %v902
    %920 = vmatmul.f32.gmra.mxu0 %v900
    %v921 = vpop.f32.mrf.mxu0
    %v922 = vadd.f32 0.0, %v921
    %923 = vdwg.mxu0
    %v924 = vmul.f32 %v922, 0.17677669
    %v925 = vadd.f32 %v924, %v791
    %v926 = vsel %vm509, %v925, -inf
    %927 = vmax.xlane.f32.xlu0 %v926
    %v928 = vpop.xlane.xlu0 %927
    %v929 = vsub.f32 %v925, %v928
    %v930 = vmul.f32 %v929, 1.442695
    %v931 = vpow.pop %v930
    %v932 = vsel %vm509, %v931, 0.0
    %933 = vadd.xlane.f32.xlu0 %v932
    %v934 = vpop.xlane.xlu0 %933
    %v935 = vrcp.pop %v934
    %v936 = vmul.f32 %v931, %v935
    %937 = vrot.lane.b32.xlu0 %v473, 64
    %v938 = vpop.permute.xlu0 %937
    %v941 = vsel %vm509, %v936, 0
    %943 = vmatpush.msra.mxu0 0.0
    %944 = vmatpush.msra.mxu0 0.0
    %945 = vmatpush.msra.mxu0 0.0
    %946 = vmatpush.msra.mxu0 0.0
    %947 = vmatpush.msra.mxu0 0.0
    %948 = vmatpush.msra.mxu0 0.0
    %949 = vmatpush.msra.mxu0 0.0
    %950 = vmatpush.msra.mxu0 0.0
    %951 = vmatpush.msra.mxu0 0.0
    %952 = vmatpush.msra.mxu0 0.0
    %953 = vmatpush.msra.mxu0 0.0
    %954 = vmatpush.msra.mxu0 0.0
    %955 = vmatpush.msra.mxu0 0.0
    %956 = vmatpush.msra.mxu0 0.0
    %957 = vmatpush.msra.mxu0 0.0
    %958 = vmatpush.msra.mxu0 %v938
    %959 = vmatmul.f32.gmra.mxu0 %v941
    %v960 = vpop.f32.mrf.mxu0
    %v961 = vadd.f32 0.0, %v960
    %962 = vdwg.mxu0
    %963 = vrot.lane.b32.xlu0 %v445, 32
    %v964 = vpop.permute.xlu0 %963
    %965 = vrot.lane.b32.xlu0 %v459, 32
    %v966 = vpop.permute.xlu0 %965
    %v967 = vsel %vm477, %v964, 0
    %v969 = vsel %vm477, %v966, 0
    %971 = vmatpush.xpose.msra.mxu0 0.0
    %972 = vmatpush.xpose.msra.mxu0 0.0
    %973 = vmatpush.xpose.msra.mxu0 0.0
    %974 = vmatpush.xpose.msra.mxu0 0.0
    %975 = vmatpush.xpose.msra.mxu0 0.0
    %976 = vmatpush.xpose.msra.mxu0 0.0
    %977 = vmatpush.xpose.msra.mxu0 0.0
    %978 = vmatpush.xpose.msra.mxu0 0.0
    %979 = vmatpush.xpose.msra.mxu0 0.0
    %980 = vmatpush.xpose.msra.mxu0 0.0
    %981 = vmatpush.xpose.msra.mxu0 0.0
    %982 = vmatpush.xpose.msra.mxu0 0.0
    %983 = vmatpush.xpose.msra.mxu0 0.0
    %984 = vmatpush.xpose.msra.mxu0 0.0
    %985 = vmatpush.xpose.msra.mxu0 0.0
    %986 = vmatpush.xpose.msra.mxu0 %v969
    %987 = vmatmul.f32.gmra.mxu0 %v967
    %v988 = vpop.f32.mrf.mxu0
    %v989 = vadd.f32 0.0, %v988
    %990 = vdwg.mxu0
    %v991 = vmul.f32 %v989, 0.17677669
    %v992 = vadd.f32 %v991, %v791
    %v993 = vsel %vm509, %v992, -inf
    %994 = vmax.xlane.f32.xlu0 %v993
    %v995 = vpop.xlane.xlu0 %994
    %v996 = vsub.f32 %v992, %v995
    %v997 = vmul.f32 %v996, 1.442695
    %v998 = vpow.pop %v997
    %v999 = vsel %vm509, %v998, 0.0
    %1000 = vadd.xlane.f32.xlu0 %v999
    %v1001 = vpop.xlane.xlu0 %1000
    %v1002 = vrcp.pop %v1001
    %v1003 = vmul.f32 %v998, %v1002
    %1004 = vrot.lane.b32.xlu0 %v473, 32
    %v1005 = vpop.permute.xlu0 %1004
    %v1008 = vsel %vm509, %v1003, 0
    %1010 = vmatpush.msra.mxu0 0.0
    %1011 = vmatpush.msra.mxu0 0.0
    %1012 = vmatpush.msra.mxu0 0.0
    %1013 = vmatpush.msra.mxu0 0.0
    %1014 = vmatpush.msra.mxu0 0.0
    %1015 = vmatpush.msra.mxu0 0.0
    %1016 = vmatpush.msra.mxu0 0.0
    %1017 = vmatpush.msra.mxu0 0.0
    %1018 = vmatpush.msra.mxu0 0.0
    %1019 = vmatpush.msra.mxu0 0.0
    %1020 = vmatpush.msra.mxu0 0.0
    %1021 = vmatpush.msra.mxu0 0.0
    %1022 = vmatpush.msra.mxu0 0.0
    %1023 = vmatpush.msra.mxu0 0.0
    %1024 = vmatpush.msra.mxu0 0.0
    %1025 = vmatpush.msra.mxu0 %v1005
    %1026 = vmatmul.f32.gmra.mxu0 %v1008
    %v1027 = vpop.f32.mrf.mxu0
    %v1028 = vadd.f32 0.0, %v1027
    %1029 = vdwg.mxu0
    %1031 = vrot.lane.b32.xlu0 %v894, 32
    %v1032 = vpop.permute.xlu0 %1031
    %1035 = vrot.lane.b32.xlu0 %v961, 64
    %v1036 = vpop.permute.xlu0 %1035
    %1039 = vrot.lane.b32.xlu0 %v1028, 96
    %v1040 = vpop.permute.xlu0 %1039
    %v1042 = vsel %vm477, %v826, %v1032
    %v1043 = vsel %vm759, %v1042, %v1036
    %v1044 = vsel %vm761, %v1043, %v1040
    %v1045 = vpack.c.bf16 %v1044, %v762
    %v1046 = vld [vmem:[#allocation11] sm:$0xf]
    %v1047 = vld [vmem:[#allocation11 + $0x4] sm:$0xf]
    %v1048 = vld [vmem:[#allocation11 + $0x8] sm:$0xf]
    %v1049 = vld [vmem:[#allocation11 + $0xc] sm:$0xf]
    %v1050 = vld [vmem:[#allocation11 + $0x10] sm:$0xf]
    %v1051 = vld [vmem:[#allocation11 + $0x14] sm:$0xf]
    %v1052 = vld [vmem:[#allocation11 + $0x18] sm:$0xf]
    %v1053 = vld [vmem:[#allocation11 + $0x1c] sm:$0xf]
    %v1054 = vld [vmem:[#allocation11 + $0x20] sm:$0xf]
    %v1055 = vld [vmem:[#allocation11 + $0x24] sm:$0xf]
    %v1056 = vld [vmem:[#allocation11 + $0x28] sm:$0xf]
    %v1057 = vld [vmem:[#allocation11 + $0x2c] sm:$0xf]
    %v1058 = vld [vmem:[#allocation11 + $0x30] sm:$0xf]
    %v1059 = vld [vmem:[#allocation11 + $0x34] sm:$0xf]
    %v1060 = vld [vmem:[#allocation11 + $0x38] sm:$0xf]
    %v1061 = vld [vmem:[#allocation11 + $0x3c] sm:$0xf]
    %v1062 = vld [vmem:[#allocation13] sm:$0x1]
    %v1064 = vperm.slane %v1062, 0
    %v1082 = vunpack.c.l.b16 %v1046
    %v1083 = vunpack.c.l.b16 %v1047
    %v1084 = vunpack.c.l.b16 %v1048
    %v1085 = vunpack.c.l.b16 %v1049
    %v1086 = vunpack.c.l.b16 %v1050
    %v1087 = vunpack.c.l.b16 %v1051
    %v1088 = vunpack.c.l.b16 %v1052
    %v1089 = vunpack.c.l.b16 %v1053
    %v1090 = vunpack.c.l.b16 %v1054
    %v1091 = vunpack.c.l.b16 %v1055
    %v1092 = vunpack.c.l.b16 %v1056
    %v1093 = vunpack.c.l.b16 %v1057
    %v1094 = vunpack.c.l.b16 %v1058
    %v1095 = vunpack.c.l.b16 %v1059
    %v1096 = vunpack.c.l.b16 %v1060
    %v1097 = vunpack.c.l.b16 %v1061
    %v1098 = vpack.c.b16 %v1083, %v1082
    %v1099 = vpack.c.b16 %v1085, %v1084
    %v1100 = vpack.c.b16 %v1087, %v1086
    %v1101 = vpack.c.b16 %v1089, %v1088
    %v1102 = vpack.c.b16 %v1091, %v1090
    %v1103 = vpack.c.b16 %v1093, %v1092
    %v1104 = vpack.c.b16 %v1095, %v1094
    %v1105 = vpack.c.b16 %v1097, %v1096
    %1114 = vmatpush.bf16.msra.mxu0 %v1105
    %1115 = vmatpush.bf16.msra.mxu0 %v1104
    %1116 = vmatpush.bf16.msra.mxu0 %v1103
    %1117 = vmatpush.bf16.msra.mxu0 %v1102
    %1118 = vmatpush.bf16.msra.mxu0 %v1101
    %1119 = vmatpush.bf16.msra.mxu0 %v1100
    %1120 = vmatpush.bf16.msra.mxu0 %v1099
    %1121 = vmatpush.bf16.msra.mxu0 %v1098
    %1122 = vmatmul.bf16.gmra.mxu0 %v1045
    %v1123 = vpop.f32.mrf.mxu0
    %v1124 = vadd.f32 %v1064, %v1123
    %v1125 = vpop.f32.mrf.mxu0
    %v1126 = vadd.f32 %v1064, %v1125
    %1127 = vdwg.mxu0
    %v1128 = vadd.f32 %v1124, %v255
    %v1129 = vadd.f32 %v1126, %v256
    %1130 = vadd.xlane.f32.xlu0 %v1128
    %v1131 = vpop.xlane.xlu0 %1130
    %1132 = vadd.xlane.f32.xlu0 %v1129
    %v1133 = vpop.xlane.xlu0 %1132
    %v1134 = vrcp.pop 128.0
    %v1135 = vmul.f32 128.0, %v1134
    %v1136 = vsub.f32 1.0, %v1135
    %v1137 = vmul.f32 %v1134, %v1136
    %v1138 = vadd.f32 %v1134, %v1137
    %vm1139 = vweird.f32 %v1134
    %v1140 = vsel %vm1139, %v1134, %v1138
    %v1141 = vmul.f32 %v1131, %v1140
    %v1142 = vmul.f32 %v1133, %v1140
    %v1143 = vsub.f32 %v1128, %v1141
    %v1144 = vsub.f32 %v1129, %v1142
    %v1145 = vmul.f32 %v1143, %v1143
    %v1146 = vmul.f32 %v1144, %v1144
    %1147 = vadd.xlane.f32.xlu0 %v1145
    %v1148 = vpop.xlane.xlu0 %1147
    %1149 = vadd.xlane.f32.xlu0 %v1146
    %v1150 = vpop.xlane.xlu0 %1149
    %v1151 = vmul.f32 %v1148, %v1140
    %v1152 = vmul.f32 %v1150, %v1140
    %v1153 = vadd.f32 %v1151, 1e-05
    %v1154 = vadd.f32 %v1152, 1e-05
    %v1155 = vrsqrt.pop %v1153
    %v1156 = vmul.f32 %v1155, %v1153
    %v1157 = vmul.f32 %v1156, %v1155
    %v1158 = vmul.f32 0.5, %v1157
    %v1159 = vsub.f32 1.5, %v1158
    %v1160 = vmul.f32 %v1155, %v1159
    %vm1161 = vweird.f32 %v1153
    %vm1162 = vweird.f32 %v1155
    %vm1163 = vmor %vm1161, %vm1162
    %v1164 = vsel %vm1163, %v1155, %v1160
    %v1165 = vrsqrt.pop %v1154
    %v1166 = vmul.f32 %v1165, %v1154
    %v1167 = vmul.f32 %v1166, %v1165
    %v1168 = vmul.f32 0.5, %v1167
    %v1169 = vsub.f32 1.5, %v1168
    %v1170 = vmul.f32 %v1165, %v1169
    %vm1171 = vweird.f32 %v1154
    %vm1172 = vweird.f32 %v1165
    %vm1173 = vmor %vm1171, %vm1172
    %v1174 = vsel %vm1173, %v1165, %v1170
    %v1175 = vmul.f32 %v1143, %v1164
    %v1176 = vmul.f32 %v1144, %v1174
    %v1178 = vperm.slane %v257, 0
    %v1180 = vmul.f32 %v1175, %v1178
    %v1181 = vmul.f32 %v1176, %v1178
    %v1183 = vperm.slane %v258, 0
    %v1185 = vadd.f32 %v1180, %v1183
    %v1186 = vadd.f32 %v1181, %v1183
    %v1187 = vpack.c.bf16 %v1186, %v1185
    %v1188 = vld [vmem:[#allocation14] sm:$0xf]
    %v1189 = vld [vmem:[#allocation14 + $0x4] sm:$0xf]
    %v1190 = vld [vmem:[#allocation14 + $0x8] sm:$0xf]
    %v1191 = vld [vmem:[#allocation14 + $0xc] sm:$0xf]
    %v1192 = vld [vmem:[#allocation14 + $0x10] sm:$0xf]
    %v1193 = vld [vmem:[#allocation14 + $0x14] sm:$0xf]
    %v1194 = vld [vmem:[#allocation14 + $0x18] sm:$0xf]
    %v1195 = vld [vmem:[#allocation14 + $0x1c] sm:$0xf]
    %v1196 = vld [vmem:[#allocation14 + $0x20] sm:$0xf]
    %v1197 = vld [vmem:[#allocation14 + $0x24] sm:$0xf]
    %v1198 = vld [vmem:[#allocation14 + $0x28] sm:$0xf]
    %v1199 = vld [vmem:[#allocation14 + $0x2c] sm:$0xf]
    %v1200 = vld [vmem:[#allocation14 + $0x30] sm:$0xf]
    %v1201 = vld [vmem:[#allocation14 + $0x34] sm:$0xf]
    %v1202 = vld [vmem:[#allocation14 + $0x38] sm:$0xf]
    %v1203 = vld [vmem:[#allocation14 + $0x3c] sm:$0xf]
    %v1204 = vld [vmem:[%s9] sm:$0x1]
    %v1206 = vperm.slane %v1204, 0
    %v1224 = vunpack.c.l.b16 %v1188
    %v1225 = vunpack.c.l.b16 %v1189
    %v1226 = vunpack.c.l.b16 %v1190
    %v1227 = vunpack.c.l.b16 %v1191
    %v1228 = vunpack.c.l.b16 %v1192
    %v1229 = vunpack.c.l.b16 %v1193
    %v1230 = vunpack.c.l.b16 %v1194
    %v1231 = vunpack.c.l.b16 %v1195
    %v1232 = vunpack.c.l.b16 %v1196
    %v1233 = vunpack.c.l.b16 %v1197
    %v1234 = vunpack.c.l.b16 %v1198
    %v1235 = vunpack.c.l.b16 %v1199
    %v1236 = vunpack.c.l.b16 %v1200
    %v1237 = vunpack.c.l.b16 %v1201
    %v1238 = vunpack.c.l.b16 %v1202
    %v1239 = vunpack.c.l.b16 %v1203
    %v1240 = vpack.c.b16 %v1225, %v1224
    %v1241 = vpack.c.b16 %v1227, %v1226
    %v1242 = vpack.c.b16 %v1229, %v1228
    %v1243 = vpack.c.b16 %v1231, %v1230
    %v1244 = vpack.c.b16 %v1233, %v1232
    %v1245 = vpack.c.b16 %v1235, %v1234
    %v1246 = vpack.c.b16 %v1237, %v1236
    %v1247 = vpack.c.b16 %v1239, %v1238
    %1256 = vmatpush.bf16.msra.mxu0 %v1247
    %1257 = vmatpush.bf16.msra.mxu0 %v1246
    %1258 = vmatpush.bf16.msra.mxu0 %v1245
    %1259 = vmatpush.bf16.msra.mxu0 %v1244
    %1260 = vmatpush.bf16.msra.mxu0 %v1243
    %1261 = vmatpush.bf16.msra.mxu0 %v1242
    %1262 = vmatpush.bf16.msra.mxu0 %v1241
    %1263 = vmatpush.bf16.msra.mxu0 %v1240
    %1264 = vmatmul.bf16.gmra.mxu0 %v1187
    %v1265 = vpop.f32.mrf.mxu0
    %v1266 = vadd.f32 %v1206, %v1265
    %v1267 = vpop.f32.mrf.mxu0
    %v1268 = vadd.f32 %v1206, %v1267
    %1269 = vdwg.mxu0
    %v1270 = vld [vmem:[#allocation16] sm:$0xff]
    %v1271 = vld [vmem:[#allocation16 + $0x8] sm:$0xff]
    %v1272 = vld [vmem:[#allocation16 + $0x10] sm:$0xff]
    %v1273 = vld [vmem:[#allocation16 + $0x18] sm:$0xff]
    %v1274 = vld [vmem:[#allocation16 + $0x20] sm:$0xff]
    %v1275 = vld [vmem:[#allocation16 + $0x28] sm:$0xff]
    %v1276 = vld [vmem:[#allocation16 + $0x30] sm:$0xff]
    %v1277 = vld [vmem:[#allocation16 + $0x38] sm:$0xff]
    %v1278 = vld [vmem:[#allocation16 + $0x40] sm:$0xff]
    %v1279 = vld [vmem:[#allocation16 + $0x48] sm:$0xff]
    %v1280 = vld [vmem:[#allocation16 + $0x50] sm:$0xff]
    %v1281 = vld [vmem:[#allocation16 + $0x58] sm:$0xff]
    %v1282 = vld [vmem:[#allocation16 + $0x60] sm:$0xff]
    %v1283 = vld [vmem:[#allocation16 + $0x68] sm:$0xff]
    %v1284 = vld [vmem:[#allocation16 + $0x70] sm:$0xff]
    %v1285 = vld [vmem:[#allocation16 + $0x78] sm:$0xff]
    %v1286 = vld [vmem:[%s11] sm:$0x3]
    %v1288 = vperm.slane %v1286, 0
    %v1289 = vperm.slane %v1286, 1
    %v1294 = vunpack.c.l.b16 %v253
    %v1295 = vunpack.c.l.b16 %v254
    %v1296 = vpack.c.b16 %v1295, %v1294
    %v1314 = vunpack.c.l.b16 %v1270
    %v1315 = vunpack.c.h.b16 %v1270
    %v1316 = vunpack.c.l.b16 %v1271
    %v1317 = vunpack.c.h.b16 %v1271
    %v1318 = vunpack.c.l.b16 %v1272
    %v1319 = vunpack.c.h.b16 %v1272
    %v1320 = vunpack.c.l.b16 %v1273
    %v1321 = vunpack.c.h.b16 %v1273
    %v1322 = vunpack.c.l.b16 %v1274
    %v1323 = vunpack.c.h.b16 %v1274
    %v1324 = vunpack.c.l.b16 %v1275
    %v1325 = vunpack.c.h.b16 %v1275
    %v1326 = vunpack.c.l.b16 %v1276
    %v1327 = vunpack.c.h.b16 %v1276
    %v1328 = vunpack.c.l.b16 %v1277
    %v1329 = vunpack.c.h.b16 %v1277
    %v1330 = vunpack.c.l.b16 %v1278
    %v1331 = vunpack.c.h.b16 %v1278
    %v1332 = vunpack.c.l.b16 %v1279
    %v1333 = vunpack.c.h.b16 %v1279
    %v1334 = vunpack.c.l.b16 %v1280
    %v1335 = vunpack.c.h.b16 %v1280
    %v1336 = vunpack.c.l.b16 %v1281
    %v1337 = vunpack.c.h.b16 %v1281
    %v1338 = vunpack.c.l.b16 %v1282
    %v1339 = vunpack.c.h.b16 %v1282
    %v1340 = vunpack.c.l.b16 %v1283
    %v1341 = vunpack.c.h.b16 %v1283
    %v1342 = vunpack.c.l.b16 %v1284
    %v1343 = vunpack.c.h.b16 %v1284
    %v1344 = vunpack.c.l.b16 %v1285
    %v1345 = vunpack.c.h.b16 %v1285
    %v1346 = vpack.c.b16 %v1316, %v1314
    %v1347 = vpack.c.b16 %v1317, %v1315
    %v1348 = vpack.c.b16 %v1320, %v1318
    %v1349 = vpack.c.b16 %v1321, %v1319
    %v1350 = vpack.c.b16 %v1324, %v1322
    %v1351 = vpack.c.b16 %v1325, %v1323
    %v1352 = vpack.c.b16 %v1328, %v1326
    %v1353 = vpack.c.b16 %v1329, %v1327
    %v1354 = vpack.c.b16 %v1332, %v1330
    %v1355 = vpack.c.b16 %v1333, %v1331
    %v1356 = vpack.c.b16 %v1336, %v1334
    %v1357 = vpack.c.b16 %v1337, %v1335
    %v1358 = vpack.c.b16 %v1340, %v1338
    %v1359 = vpack.c.b16 %v1341, %v1339
    %v1360 = vpack.c.b16 %v1344, %v1342
    %v1361 = vpack.c.b16 %v1345, %v1343
    %1378 = vmatpush.bf16.msra.mxu0 %v1360
    %1379 = vmatpush.bf16.msra.mxu0 %v1358
    %1380 = vmatpush.bf16.msra.mxu0 %v1356
    %1381 = vmatpush.bf16.msra.mxu0 %v1354
    %1382 = vmatpush.bf16.msra.mxu0 %v1352
    %1383 = vmatpush.bf16.msra.mxu0 %v1350
    %1384 = vmatpush.bf16.msra.mxu0 %v1348
    %1385 = vmatpush.bf16.msra.mxu0 %v1346
    %1386 = vmatmul.bf16.gmra.mxu0 %v1296
    %v1387 = vpop.f32.mrf.mxu0
    %v1388 = vadd.f32 %v1288, %v1387
    %v1389 = vpop.f32.mrf.mxu0
    %v1390 = vadd.f32 %v1288, %v1389
    %1391 = vdwg.mxu0
    %1392 = vmatpush.bf16.msra.mxu0 %v1361
    %1393 = vmatpush.bf16.msra.mxu0 %v1359
    %1394 = vmatpush.bf16.msra.mxu0 %v1357
    %1395 = vmatpush.bf16.msra.mxu0 %v1355
    %1396 = vmatpush.bf16.msra.mxu0 %v1353
    %1397 = vmatpush.bf16.msra.mxu0 %v1351
    %1398 = vmatpush.bf16.msra.mxu0 %v1349
    %1399 = vmatpush.bf16.msra.mxu0 %v1347
    %1400 = vmatmul.bf16.gmra.mxu0 %v1296
    %v1401 = vpop.f32.mrf.mxu0
    %v1402 = vadd.f32 %v1289, %v1401
    %v1403 = vpop.f32.mrf.mxu0
    %v1404 = vadd.f32 %v1289, %v1403
    %1405 = vdwg.mxu0
    %v1406 = vld [vmem:[#allocation7] sm:$0x1]
    %v1407 = vld [vmem:[#allocation7 + $0x1] sm:$0x1]
    %v1409 = vsel %vm477, %v1266, 0
    %v1412 = vsel %vm477, %v1388, 0
    %1414 = vmatpush.xpose.msra.mxu0 0.0
    %1415 = vmatpush.xpose.msra.mxu0 0.0
    %1416 = vmatpush.xpose.msra.mxu0 0.0
    %1417 = vmatpush.xpose.msra.mxu0 0.0
    %1418 = vmatpush.xpose.msra.mxu0 0.0
    %1419 = vmatpush.xpose.msra.mxu0 0.0
    %1420 = vmatpush.xpose.msra.mxu0 0.0
    %1421 = vmatpush.xpose.msra.mxu0 0.0
    %1422 = vmatpush.xpose.msra.mxu0 0.0
    %1423 = vmatpush.xpose.msra.mxu0 0.0
    %1424 = vmatpush.xpose.msra.mxu0 0.0
    %1425 = vmatpush.xpose.msra.mxu0 0.0
    %1426 = vmatpush.xpose.msra.mxu0 0.0
    %1427 = vmatpush.xpose.msra.mxu0 0.0
    %1428 = vmatpush.xpose.msra.mxu0 0.0
    %1429 = vmatpush.xpose.msra.mxu0 %v1412
    %1430 = vmatmul.f32.gmra.mxu0 %v1409
    %v1431 = vpop.f32.mrf.mxu0
    %v1432 = vadd.f32 0.0, %v1431
    %1433 = vdwg.mxu0
    %v1434 = vmul.f32 %v1432, 0.17677669
    %v1436 = vperm.slane %v1406, 0
    %v1438 = vadd.f32 %v1434, %v1436
    %v1439 = vsel %vm509, %v1438, -inf
    %1440 = vmax.xlane.f32.xlu0 %v1439
    %v1441 = vpop.xlane.xlu0 %1440
    %v1442 = vsub.f32 %v1438, %v1441
    %v1443 = vmul.f32 %v1442, 1.442695
    %v1444 = vpow.pop %v1443
    %v1445 = vsel %vm509, %v1444, 0.0
    %1446 = vadd.xlane.f32.xlu0 %v1445
    %v1447 = vpop.xlane.xlu0 %1446
    %v1448 = vrcp.pop %v1447
    %v1449 = vmul.f32 %v1444, %v1448
    %v1451 = vsel %vm509, %v1449, 0
    %1453 = vmatpush.msra.mxu0 0.0
    %1454 = vmatpush.msra.mxu0 0.0
    %1455 = vmatpush.msra.mxu0 0.0
    %1456 = vmatpush.msra.mxu0 0.0
    %1457 = vmatpush.msra.mxu0 0.0
    %1458 = vmatpush.msra.mxu0 0.0
    %1459 = vmatpush.msra.mxu0 0.0
    %1460 = vmatpush.msra.mxu0 0.0
    %1461 = vmatpush.msra.mxu0 0.0
    %1462 = vmatpush.msra.mxu0 0.0
    %1463 = vmatpush.msra.mxu0 0.0
    %1464 = vmatpush.msra.mxu0 0.0
    %1465 = vmatpush.msra.mxu0 0.0
    %1466 = vmatpush.msra.mxu0 0.0
    %1467 = vmatpush.msra.mxu0 0.0
    %1468 = vmatpush.msra.mxu0 %v1402
    %1469 = vmatmul.f32.gmra.mxu0 %v1451
    %v1470 = vpop.f32.mrf.mxu0
    %v1471 = vadd.f32 0.0, %v1470
    %1472 = vdwg.mxu0
    %1473 = vrot.lane.b32.xlu0 %v1266, 96
    %v1474 = vpop.permute.xlu0 %1473
    %1475 = vrot.lane.b32.xlu0 %v1388, 96
    %v1476 = vpop.permute.xlu0 %1475
    %v1477 = vsel %vm477, %v1474, 0
    %v1479 = vsel %vm477, %v1476, 0
    %1481 = vmatpush.xpose.msra.mxu0 0.0
    %1482 = vmatpush.xpose.msra.mxu0 0.0
    %1483 = vmatpush.xpose.msra.mxu0 0.0
    %1484 = vmatpush.xpose.msra.mxu0 0.0
    %1485 = vmatpush.xpose.msra.mxu0 0.0
    %1486 = vmatpush.xpose.msra.mxu0 0.0
    %1487 = vmatpush.xpose.msra.mxu0 0.0
    %1488 = vmatpush.xpose.msra.mxu0 0.0
    %1489 = vmatpush.xpose.msra.mxu0 0.0
    %1490 = vmatpush.xpose.msra.mxu0 0.0
    %1491 = vmatpush.xpose.msra.mxu0 0.0
    %1492 = vmatpush.xpose.msra.mxu0 0.0
    %1493 = vmatpush.xpose.msra.mxu0 0.0
    %1494 = vmatpush.xpose.msra.mxu0 0.0
    %1495 = vmatpush.xpose.msra.mxu0 0.0
    %1496 = vmatpush.xpose.msra.mxu0 %v1479
    %1497 = vmatmul.f32.gmra.mxu0 %v1477
    %v1498 = vpop.f32.mrf.mxu0
    %v1499 = vadd.f32 0.0, %v1498
    %1500 = vdwg.mxu0
    %v1501 = vmul.f32 %v1499, 0.17677669
    %v1502 = vadd.f32 %v1501, %v1436
    %v1503 = vsel %vm509, %v1502, -inf
    %1504 = vmax.xlane.f32.xlu0 %v1503
    %v1505 = vpop.xlane.xlu0 %1504
    %v1506 = vsub.f32 %v1502, %v1505
    %v1507 = vmul.f32 %v1506, 1.442695
    %v1508 = vpow.pop %v1507
    %v1509 = vsel %vm509, %v1508, 0.0
    %1510 = vadd.xlane.f32.xlu0 %v1509
    %v1511 = vpop.xlane.xlu0 %1510
    %v1512 = vrcp.pop %v1511
    %v1513 = vmul.f32 %v1508, %v1512
    %1515 = vrot.lane.b32.xlu0 %v1402, 96
    %v1516 = vpop.permute.xlu0 %1515
    %v1519 = vsel %vm509, %v1513, 0
    %1521 = vmatpush.msra.mxu0 0.0
    %1522 = vmatpush.msra.mxu0 0.0
    %1523 = vmatpush.msra.mxu0 0.0
    %1524 = vmatpush.msra.mxu0 0.0
    %1525 = vmatpush.msra.mxu0 0.0
    %1526 = vmatpush.msra.mxu0 0.0
    %1527 = vmatpush.msra.mxu0 0.0
    %1528 = vmatpush.msra.mxu0 0.0
    %1529 = vmatpush.msra.mxu0 0.0
    %1530 = vmatpush.msra.mxu0 0.0
    %1531 = vmatpush.msra.mxu0 0.0
    %1532 = vmatpush.msra.mxu0 0.0
    %1533 = vmatpush.msra.mxu0 0.0
    %1534 = vmatpush.msra.mxu0 0.0
    %1535 = vmatpush.msra.mxu0 0.0
    %1536 = vmatpush.msra.mxu0 %v1516
    %1537 = vmatmul.f32.gmra.mxu0 %v1519
    %v1538 = vpop.f32.mrf.mxu0
    %v1539 = vadd.f32 0.0, %v1538
    %1540 = vdwg.mxu0
    %1541 = vrot.lane.b32.xlu0 %v1266, 64
    %v1542 = vpop.permute.xlu0 %1541
    %1543 = vrot.lane.b32.xlu0 %v1388, 64
    %v1544 = vpop.permute.xlu0 %1543
    %v1545 = vsel %vm477, %v1542, 0
    %v1547 = vsel %vm477, %v1544, 0
    %1549 = vmatpush.xpose.msra.mxu0 0.0
    %1550 = vmatpush.xpose.msra.mxu0 0.0
    %1551 = vmatpush.xpose.msra.mxu0 0.0
    %1552 = vmatpush.xpose.msra.mxu0 0.0
    %1553 = vmatpush.xpose.msra.mxu0 0.0
    %1554 = vmatpush.xpose.msra.mxu0 0.0
    %1555 = vmatpush.xpose.msra.mxu0 0.0
    %1556 = vmatpush.xpose.msra.mxu0 0.0
    %1557 = vmatpush.xpose.msra.mxu0 0.0
    %1558 = vmatpush.xpose.msra.mxu0 0.0
    %1559 = vmatpush.xpose.msra.mxu0 0.0
    %1560 = vmatpush.xpose.msra.mxu0 0.0
    %1561 = vmatpush.xpose.msra.mxu0 0.0
    %1562 = vmatpush.xpose.msra.mxu0 0.0
    %1563 = vmatpush.xpose.msra.mxu0 0.0
    %1564 = vmatpush.xpose.msra.mxu0 %v1547
    %1565 = vmatmul.f32.gmra.mxu0 %v1545
    %v1566 = vpop.f32.mrf.mxu0
    %v1567 = vadd.f32 0.0, %v1566
    %1568 = vdwg.mxu0
    %v1569 = vmul.f32 %v1567, 0.17677669
    %v1570 = vadd.f32 %v1569, %v1436
    %v1571 = vsel %vm509, %v1570, -inf
    %1572 = vmax.xlane.f32.xlu0 %v1571
    %v1573 = vpop.xlane.xlu0 %1572
    %v1574 = vsub.f32 %v1570, %v1573
    %v1575 = vmul.f32 %v1574, 1.442695
    %v1576 = vpow.pop %v1575
    %v1577 = vsel %vm509, %v1576, 0.0
    %1578 = vadd.xlane.f32.xlu0 %v1577
    %v1579 = vpop.xlane.xlu0 %1578
    %v1580 = vrcp.pop %v1579
    %v1581 = vmul.f32 %v1576, %v1580
    %1582 = vrot.lane.b32.xlu0 %v1402, 64
    %v1583 = vpop.permute.xlu0 %1582
    %v1586 = vsel %vm509, %v1581, 0
    %1588 = vmatpush.msra.mxu0 0.0
    %1589 = vmatpush.msra.mxu0 0.0
    %1590 = vmatpush.msra.mxu0 0.0
    %1591 = vmatpush.msra.mxu0 0.0
    %1592 = vmatpush.msra.mxu0 0.0
    %1593 = vmatpush.msra.mxu0 0.0
    %1594 = vmatpush.msra.mxu0 0.0
    %1595 = vmatpush.msra.mxu0 0.0
    %1596 = vmatpush.msra.mxu0 0.0
    %1597 = vmatpush.msra.mxu0 0.0
    %1598 = vmatpush.msra.mxu0 0.0
    %1599 = vmatpush.msra.mxu0 0.0
    %1600 = vmatpush.msra.mxu0 0.0
    %1601 = vmatpush.msra.mxu0 0.0
    %1602 = vmatpush.msra.mxu0 0.0
    %1603 = vmatpush.msra.mxu0 %v1583
    %1604 = vmatmul.f32.gmra.mxu0 %v1586
    %v1605 = vpop.f32.mrf.mxu0
    %v1606 = vadd.f32 0.0, %v1605
    %1607 = vdwg.mxu0
    %1608 = vrot.lane.b32.xlu0 %v1266, 32
    %v1609 = vpop.permute.xlu0 %1608
    %1610 = vrot.lane.b32.xlu0 %v1388, 32
    %v1611 = vpop.permute.xlu0 %1610
    %v1612 = vsel %vm477, %v1609, 0
    %v1614 = vsel %vm477, %v1611, 0
    %1616 = vmatpush.xpose.msra.mxu0 0.0
    %1617 = vmatpush.xpose.msra.mxu0 0.0
    %1618 = vmatpush.xpose.msra.mxu0 0.0
    %1619 = vmatpush.xpose.msra.mxu0 0.0
    %1620 = vmatpush.xpose.msra.mxu0 0.0
    %1621 = vmatpush.xpose.msra.mxu0 0.0
    %1622 = vmatpush.xpose.msra.mxu0 0.0
    %1623 = vmatpush.xpose.msra.mxu0 0.0
    %1624 = vmatpush.xpose.msra.mxu0 0.0
    %1625 = vmatpush.xpose.msra.mxu0 0.0
    %1626 = vmatpush.xpose.msra.mxu0 0.0
    %1627 = vmatpush.xpose.msra.mxu0 0.0
    %1628 = vmatpush.xpose.msra.mxu0 0.0
    %1629 = vmatpush.xpose.msra.mxu0 0.0
    %1630 = vmatpush.xpose.msra.mxu0 0.0
    %1631 = vmatpush.xpose.msra.mxu0 %v1614
    %1632 = vmatmul.f32.gmra.mxu0 %v1612
    %v1633 = vpop.f32.mrf.mxu0
    %v1634 = vadd.f32 0.0, %v1633
    %1635 = vdwg.mxu0
    %v1636 = vmul.f32 %v1634, 0.17677669
    %v1637 = vadd.f32 %v1636, %v1436
    %v1638 = vsel %vm509, %v1637, -inf
    %1639 = vmax.xlane.f32.xlu0 %v1638
    %v1640 = vpop.xlane.xlu0 %1639
    %v1641 = vsub.f32 %v1637, %v1640
    %v1642 = vmul.f32 %v1641, 1.442695
    %v1643 = vpow.pop %v1642
    %v1644 = vsel %vm509, %v1643, 0.0
    %1645 = vadd.xlane.f32.xlu0 %v1644
    %v1646 = vpop.xlane.xlu0 %1645
    %v1647 = vrcp.pop %v1646
    %v1648 = vmul.f32 %v1643, %v1647
    %1649 = vrot.lane.b32.xlu0 %v1402, 32
    %v1650 = vpop.permute.xlu0 %1649
    %v1653 = vsel %vm509, %v1648, 0
    %1655 = vmatpush.msra.mxu0 0.0
    %1656 = vmatpush.msra.mxu0 0.0
    %1657 = vmatpush.msra.mxu0 0.0
    %1658 = vmatpush.msra.mxu0 0.0
    %1659 = vmatpush.msra.mxu0 0.0
    %1660 = vmatpush.msra.mxu0 0.0
    %1661 = vmatpush.msra.mxu0 0.0
    %1662 = vmatpush.msra.mxu0 0.0
    %1663 = vmatpush.msra.mxu0 0.0
    %1664 = vmatpush.msra.mxu0 0.0
    %1665 = vmatpush.msra.mxu0 0.0
    %1666 = vmatpush.msra.mxu0 0.0
    %1667 = vmatpush.msra.mxu0 0.0
    %1668 = vmatpush.msra.mxu0 0.0
    %1669 = vmatpush.msra.mxu0 0.0
    %1670 = vmatpush.msra.mxu0 %v1650
    %1671 = vmatmul.f32.gmra.mxu0 %v1653
    %v1672 = vpop.f32.mrf.mxu0
    %v1673 = vadd.f32 0.0, %v1672
    %1674 = vdwg.mxu0
    %1676 = vrot.lane.b32.xlu0 %v1539, 32
    %v1677 = vpop.permute.xlu0 %1676
    %1680 = vrot.lane.b32.xlu0 %v1606, 64
    %v1681 = vpop.permute.xlu0 %1680
    %1684 = vrot.lane.b32.xlu0 %v1673, 96
    %v1685 = vpop.permute.xlu0 %1684
    %v1687 = vsel %vm477, %v1471, %v1677
    %v1688 = vsel %vm759, %v1687, %v1681
    %v1689 = vsel %vm761, %v1688, %v1685
    %v1691 = vsel %vm477, %v1268, 0
    %v1694 = vsel %vm477, %v1390, 0
    %1696 = vmatpush.xpose.msra.mxu0 0.0
    %1697 = vmatpush.xpose.msra.mxu0 0.0
    %1698 = vmatpush.xpose.msra.mxu0 0.0
    %1699 = vmatpush.xpose.msra.mxu0 0.0
    %1700 = vmatpush.xpose.msra.mxu0 0.0
    %1701 = vmatpush.xpose.msra.mxu0 0.0
    %1702 = vmatpush.xpose.msra.mxu0 0.0
    %1703 = vmatpush.xpose.msra.mxu0 0.0
    %1704 = vmatpush.xpose.msra.mxu0 0.0
    %1705 = vmatpush.xpose.msra.mxu0 0.0
    %1706 = vmatpush.xpose.msra.mxu0 0.0
    %1707 = vmatpush.xpose.msra.mxu0 0.0
    %1708 = vmatpush.xpose.msra.mxu0 0.0
    %1709 = vmatpush.xpose.msra.mxu0 0.0
    %1710 = vmatpush.xpose.msra.mxu0 0.0
    %1711 = vmatpush.xpose.msra.mxu0 %v1694
    %1712 = vmatmul.f32.gmra.mxu0 %v1691
    %v1713 = vpop.f32.mrf.mxu0
    %v1714 = vadd.f32 0.0, %v1713
    %1715 = vdwg.mxu0
    %v1716 = vmul.f32 %v1714, 0.17677669
    %v1718 = vperm.slane %v1407, 0
    %v1720 = vadd.f32 %v1716, %v1718
    %v1721 = vsel %vm509, %v1720, -inf
    %1722 = vmax.xlane.f32.xlu0 %v1721
    %v1723 = vpop.xlane.xlu0 %1722
    %v1724 = vsub.f32 %v1720, %v1723
    %v1725 = vmul.f32 %v1724, 1.442695
    %v1726 = vpow.pop %v1725
    %v1727 = vsel %vm509, %v1726, 0.0
    %1728 = vadd.xlane.f32.xlu0 %v1727
    %v1729 = vpop.xlane.xlu0 %1728
    %v1730 = vrcp.pop %v1729
    %v1731 = vmul.f32 %v1726, %v1730
    %v1733 = vsel %vm509, %v1731, 0
    %1735 = vmatpush.msra.mxu0 0.0
    %1736 = vmatpush.msra.mxu0 0.0
    %1737 = vmatpush.msra.mxu0 0.0
    %1738 = vmatpush.msra.mxu0 0.0
    %1739 = vmatpush.msra.mxu0 0.0
    %1740 = vmatpush.msra.mxu0 0.0
    %1741 = vmatpush.msra.mxu0 0.0
    %1742 = vmatpush.msra.mxu0 0.0
    %1743 = vmatpush.msra.mxu0 0.0
    %1744 = vmatpush.msra.mxu0 0.0
    %1745 = vmatpush.msra.mxu0 0.0
    %1746 = vmatpush.msra.mxu0 0.0
    %1747 = vmatpush.msra.mxu0 0.0
    %1748 = vmatpush.msra.mxu0 0.0
    %1749 = vmatpush.msra.mxu0 0.0
    %1750 = vmatpush.msra.mxu0 %v1404
    %1751 = vmatmul.f32.gmra.mxu0 %v1733
    %v1752 = vpop.f32.mrf.mxu0
    %v1753 = vadd.f32 0.0, %v1752
    %1754 = vdwg.mxu0
    %1755 = vrot.lane.b32.xlu0 %v1268, 96
    %v1756 = vpop.permute.xlu0 %1755
    %1757 = vrot.lane.b32.xlu0 %v1390, 96
    %v1758 = vpop.permute.xlu0 %1757
    %v1759 = vsel %vm477, %v1756, 0
    %v1761 = vsel %vm477, %v1758, 0
    %1763 = vmatpush.xpose.msra.mxu0 0.0
    %1764 = vmatpush.xpose.msra.mxu0 0.0
    %1765 = vmatpush.xpose.msra.mxu0 0.0
    %1766 = vmatpush.xpose.msra.mxu0 0.0
    %1767 = vmatpush.xpose.msra.mxu0 0.0
    %1768 = vmatpush.xpose.msra.mxu0 0.0
    %1769 = vmatpush.xpose.msra.mxu0 0.0
    %1770 = vmatpush.xpose.msra.mxu0 0.0
    %1771 = vmatpush.xpose.msra.mxu0 0.0
    %1772 = vmatpush.xpose.msra.mxu0 0.0
    %1773 = vmatpush.xpose.msra.mxu0 0.0
    %1774 = vmatpush.xpose.msra.mxu0 0.0
    %1775 = vmatpush.xpose.msra.mxu0 0.0
    %1776 = vmatpush.xpose.msra.mxu0 0.0
    %1777 = vmatpush.xpose.msra.mxu0 0.0
    %1778 = vmatpush.xpose.msra.mxu0 %v1761
    %1779 = vmatmul.f32.gmra.mxu0 %v1759
    %v1780 = vpop.f32.mrf.mxu0
    %v1781 = vadd.f32 0.0, %v1780
    %1782 = vdwg.mxu0
    %v1783 = vmul.f32 %v1781, 0.17677669
    %v1784 = vadd.f32 %v1783, %v1718
    %v1785 = vsel %vm509, %v1784, -inf
    %1786 = vmax.xlane.f32.xlu0 %v1785
    %v1787 = vpop.xlane.xlu0 %1786
    %v1788 = vsub.f32 %v1784, %v1787
    %v1789 = vmul.f32 %v1788, 1.442695
    %v1790 = vpow.pop %v1789
    %v1791 = vsel %vm509, %v1790, 0.0
    %1792 = vadd.xlane.f32.xlu0 %v1791
    %v1793 = vpop.xlane.xlu0 %1792
    %v1794 = vrcp.pop %v1793
    %v1795 = vmul.f32 %v1790, %v1794
    %1797 = vrot.lane.b32.xlu0 %v1404, 96
    %v1798 = vpop.permute.xlu0 %1797
    %v1801 = vsel %vm509, %v1795, 0
    %1803 = vmatpush.msra.mxu0 0.0
    %1804 = vmatpush.msra.mxu0 0.0
    %1805 = vmatpush.msra.mxu0 0.0
    %1806 = vmatpush.msra.mxu0 0.0
    %1807 = vmatpush.msra.mxu0 0.0
    %1808 = vmatpush.msra.mxu0 0.0
    %1809 = vmatpush.msra.mxu0 0.0
    %1810 = vmatpush.msra.mxu0 0.0
    %1811 = vmatpush.msra.mxu0 0.0
    %1812 = vmatpush.msra.mxu0 0.0
    %1813 = vmatpush.msra.mxu0 0.0
    %1814 = vmatpush.msra.mxu0 0.0
    %1815 = vmatpush.msra.mxu0 0.0
    %1816 = vmatpush.msra.mxu0 0.0
    %1817 = vmatpush.msra.mxu0 0.0
    %1818 = vmatpush.msra.mxu0 %v1798
    %1819 = vmatmul.f32.gmra.mxu0 %v1801
    %v1820 = vpop.f32.mrf.mxu0
    %v1821 = vadd.f32 0.0, %v1820
    %1822 = vdwg.mxu0
    %1823 = vrot.lane.b32.xlu0 %v1268, 64
    %v1824 = vpop.permute.xlu0 %1823
    %1825 = vrot.lane.b32.xlu0 %v1390, 64
    %v1826 = vpop.permute.xlu0 %1825
    %v1827 = vsel %vm477, %v1824, 0
    %v1829 = vsel %vm477, %v1826, 0
    %1831 = vmatpush.xpose.msra.mxu0 0.0
    %1832 = vmatpush.xpose.msra.mxu0 0.0
    %1833 = vmatpush.xpose.msra.mxu0 0.0
    %1834 = vmatpush.xpose.msra.mxu0 0.0
    %1835 = vmatpush.xpose.msra.mxu0 0.0
    %1836 = vmatpush.xpose.msra.mxu0 0.0
    %1837 = vmatpush.xpose.msra.mxu0 0.0
    %1838 = vmatpush.xpose.msra.mxu0 0.0
    %1839 = vmatpush.xpose.msra.mxu0 0.0
    %1840 = vmatpush.xpose.msra.mxu0 0.0
    %1841 = vmatpush.xpose.msra.mxu0 0.0
    %1842 = vmatpush.xpose.msra.mxu0 0.0
    %1843 = vmatpush.xpose.msra.mxu0 0.0
    %1844 = vmatpush.xpose.msra.mxu0 0.0
    %1845 = vmatpush.xpose.msra.mxu0 0.0
    %1846 = vmatpush.xpose.msra.mxu0 %v1829
    %1847 = vmatmul.f32.gmra.mxu0 %v1827
    %v1848 = vpop.f32.mrf.mxu0
    %v1849 = vadd.f32 0.0, %v1848
    %1850 = vdwg.mxu0
    %v1851 = vmul.f32 %v1849, 0.17677669
    %v1852 = vadd.f32 %v1851, %v1718
    %v1853 = vsel %vm509, %v1852, -inf
    %1854 = vmax.xlane.f32.xlu0 %v1853
    %v1855 = vpop.xlane.xlu0 %1854
    %v1856 = vsub.f32 %v1852, %v1855
    %v1857 = vmul.f32 %v1856, 1.442695
    %v1858 = vpow.pop %v1857
    %v1859 = vsel %vm509, %v1858, 0.0
    %1860 = vadd.xlane.f32.xlu0 %v1859
    %v1861 = vpop.xlane.xlu0 %1860
    %v1862 = vrcp.pop %v1861
    %v1863 = vmul.f32 %v1858, %v1862
    %1864 = vrot.lane.b32.xlu0 %v1404, 64
    %v1865 = vpop.permute.xlu0 %1864
    %v1868 = vsel %vm509, %v1863, 0
    %1870 = vmatpush.msra.mxu0 0.0
    %1871 = vmatpush.msra.mxu0 0.0
    %1872 = vmatpush.msra.mxu0 0.0
    %1873 = vmatpush.msra.mxu0 0.0
    %1874 = vmatpush.msra.mxu0 0.0
    %1875 = vmatpush.msra.mxu0 0.0
    %1876 = vmatpush.msra.mxu0 0.0
    %1877 = vmatpush.msra.mxu0 0.0
    %1878 = vmatpush.msra.mxu0 0.0
    %1879 = vmatpush.msra.mxu0 0.0
    %1880 = vmatpush.msra.mxu0 0.0
    %1881 = vmatpush.msra.mxu0 0.0
    %1882 = vmatpush.msra.mxu0 0.0
    %1883 = vmatpush.msra.mxu0 0.0
    %1884 = vmatpush.msra.mxu0 0.0
    %1885 = vmatpush.msra.mxu0 %v1865
    %1886 = vmatmul.f32.gmra.mxu0 %v1868
    %v1887 = vpop.f32.mrf.mxu0
    %v1888 = vadd.f32 0.0, %v1887
    %1889 = vdwg.mxu0
    %1890 = vrot.lane.b32.xlu0 %v1268, 32
    %v1891 = vpop.permute.xlu0 %1890
    %1892 = vrot.lane.b32.xlu0 %v1390, 32
    %v1893 = vpop.permute.xlu0 %1892
    %v1894 = vsel %vm477, %v1891, 0
    %v1896 = vsel %vm477, %v1893, 0
    %1898 = vmatpush.xpose.msra.mxu0 0.0
    %1899 = vmatpush.xpose.msra.mxu0 0.0
    %1900 = vmatpush.xpose.msra.mxu0 0.0
    %1901 = vmatpush.xpose.msra.mxu0 0.0
    %1902 = vmatpush.xpose.msra.mxu0 0.0
    %1903 = vmatpush.xpose.msra.mxu0 0.0
    %1904 = vmatpush.xpose.msra.mxu0 0.0
    %1905 = vmatpush.xpose.msra.mxu0 0.0
    %1906 = vmatpush.xpose.msra.mxu0 0.0
    %1907 = vmatpush.xpose.msra.mxu0 0.0
    %1908 = vmatpush.xpose.msra.mxu0 0.0
    %1909 = vmatpush.xpose.msra.mxu0 0.0
    %1910 = vmatpush.xpose.msra.mxu0 0.0
    %1911 = vmatpush.xpose.msra.mxu0 0.0
    %1912 = vmatpush.xpose.msra.mxu0 0.0
    %1913 = vmatpush.xpose.msra.mxu0 %v1896
    %1914 = vmatmul.f32.gmra.mxu0 %v1894
    %v1915 = vpop.f32.mrf.mxu0
    %v1916 = vadd.f32 0.0, %v1915
    %1917 = vdwg.mxu0
    %v1918 = vmul.f32 %v1916, 0.17677669
    %v1919 = vadd.f32 %v1918, %v1718
    %v1920 = vsel %vm509, %v1919, -inf
    %1921 = vmax.xlane.f32.xlu0 %v1920
    %v1922 = vpop.xlane.xlu0 %1921
    %v1923 = vsub.f32 %v1919, %v1922
    %v1924 = vmul.f32 %v1923, 1.442695
    %v1925 = vpow.pop %v1924
    %v1926 = vsel %vm509, %v1925, 0.0
    %1927 = vadd.xlane.f32.xlu0 %v1926
    %v1928 = vpop.xlane.xlu0 %1927
    %v1929 = vrcp.pop %v1928
    %v1930 = vmul.f32 %v1925, %v1929
    %1931 = vrot.lane.b32.xlu0 %v1404, 32
    %v1932 = vpop.permute.xlu0 %1931
    %v1935 = vsel %vm509, %v1930, 0
    %1937 = vmatpush.msra.mxu0 0.0
    %1938 = vmatpush.msra.mxu0 0.0
    %1939 = vmatpush.msra.mxu0 0.0
    %1940 = vmatpush.msra.mxu0 0.0
    %1941 = vmatpush.msra.mxu0 0.0
    %1942 = vmatpush.msra.mxu0 0.0
    %1943 = vmatpush.msra.mxu0 0.0
    %1944 = vmatpush.msra.mxu0 0.0
    %1945 = vmatpush.msra.mxu0 0.0
    %1946 = vmatpush.msra.mxu0 0.0
    %1947 = vmatpush.msra.mxu0 0.0
    %1948 = vmatpush.msra.mxu0 0.0
    %1949 = vmatpush.msra.mxu0 0.0
    %1950 = vmatpush.msra.mxu0 0.0
    %1951 = vmatpush.msra.mxu0 0.0
    %1952 = vmatpush.msra.mxu0 %v1932
    %1953 = vmatmul.f32.gmra.mxu0 %v1935
    %v1954 = vpop.f32.mrf.mxu0
    %v1955 = vadd.f32 0.0, %v1954
    %1956 = vdwg.mxu0
    %1958 = vrot.lane.b32.xlu0 %v1821, 32
    %v1959 = vpop.permute.xlu0 %1958
    %1962 = vrot.lane.b32.xlu0 %v1888, 64
    %v1963 = vpop.permute.xlu0 %1962
    %1966 = vrot.lane.b32.xlu0 %v1955, 96
    %v1967 = vpop.permute.xlu0 %1966
    %v1969 = vsel %vm477, %v1753, %v1959
    %v1970 = vsel %vm759, %v1969, %v1963
    %v1971 = vsel %vm761, %v1970, %v1967
    %v1972 = vpack.c.bf16 %v1971, %v1689
    %v1973 = vld [vmem:[#allocation17] sm:$0xf]
    %v1974 = vld [vmem:[#allocation17 + $0x4] sm:$0xf]
    %v1975 = vld [vmem:[#allocation17 + $0x8] sm:$0xf]
    %v1976 = vld [vmem:[#allocation17 + $0xc] sm:$0xf]
    %v1977 = vld [vmem:[#allocation17 + $0x10] sm:$0xf]
    %v1978 = vld [vmem:[#allocation17 + $0x14] sm:$0xf]
    %v1979 = vld [vmem:[#allocation17 + $0x18] sm:$0xf]
    %v1980 = vld [vmem:[#allocation17 + $0x1c] sm:$0xf]
    %v1981 = vld [vmem:[#allocation17 + $0x20] sm:$0xf]
    %v1982 = vld [vmem:[#allocation17 + $0x24] sm:$0xf]
    %v1983 = vld [vmem:[#allocation17 + $0x28] sm:$0xf]
    %v1984 = vld [vmem:[#allocation17 + $0x2c] sm:$0xf]
    %v1985 = vld [vmem:[#allocation17 + $0x30] sm:$0xf]
    %v1986 = vld [vmem:[#allocation17 + $0x34] sm:$0xf]
    %v1987 = vld [vmem:[#allocation17 + $0x38] sm:$0xf]
    %v1988 = vld [vmem:[#allocation17 + $0x3c] sm:$0xf]
    %v1989 = vld [vmem:[%s13] sm:$0x1]
    %v1991 = vperm.slane %v1989, 0
    %v2009 = vunpack.c.l.b16 %v1973
    %v2010 = vunpack.c.l.b16 %v1974
    %v2011 = vunpack.c.l.b16 %v1975
    %v2012 = vunpack.c.l.b16 %v1976
    %v2013 = vunpack.c.l.b16 %v1977
    %v2014 = vunpack.c.l.b16 %v1978
    %v2015 = vunpack.c.l.b16 %v1979
    %v2016 = vunpack.c.l.b16 %v1980
    %v2017 = vunpack.c.l.b16 %v1981
    %v2018 = vunpack.c.l.b16 %v1982
    %v2019 = vunpack.c.l.b16 %v1983
    %v2020 = vunpack.c.l.b16 %v1984
    %v2021 = vunpack.c.l.b16 %v1985
    %v2022 = vunpack.c.l.b16 %v1986
    %v2023 = vunpack.c.l.b16 %v1987
    %v2024 = vunpack.c.l.b16 %v1988
    %v2025 = vpack.c.b16 %v2010, %v2009
    %v2026 = vpack.c.b16 %v2012, %v2011
    %v2027 = vpack.c.b16 %v2014, %v2013
    %v2028 = vpack.c.b16 %v2016, %v2015
    %v2029 = vpack.c.b16 %v2018, %v2017
    %v2030 = vpack.c.b16 %v2020, %v2019
    %v2031 = vpack.c.b16 %v2022, %v2021
    %v2032 = vpack.c.b16 %v2024, %v2023
    %2041 = vmatpush.bf16.msra.mxu0 %v2032
    %2042 = vmatpush.bf16.msra.mxu0 %v2031
    %2043 = vmatpush.bf16.msra.mxu0 %v2030
    %2044 = vmatpush.bf16.msra.mxu0 %v2029
    %2045 = vmatpush.bf16.msra.mxu0 %v2028
    %2046 = vmatpush.bf16.msra.mxu0 %v2027
    %2047 = vmatpush.bf16.msra.mxu0 %v2026
    %2048 = vmatpush.bf16.msra.mxu0 %v2025
    %2049 = vmatmul.bf16.gmra.mxu0 %v1972
    %v2050 = vpop.f32.mrf.mxu0
    %v2051 = vadd.f32 %v1991, %v2050
    %v2052 = vpop.f32.mrf.mxu0
    %v2053 = vadd.f32 %v1991, %v2052
    %2054 = vdwg.mxu0
    %v2055 = vadd.f32 %v2051, %v1185
    %v2056 = vadd.f32 %v2053, %v1186
    %2057 = vadd.xlane.f32.xlu0 %v2055
    %v2058 = vpop.xlane.xlu0 %2057
    %2059 = vadd.xlane.f32.xlu0 %v2056
    %v2060 = vpop.xlane.xlu0 %2059
    %v2061 = vmul.f32 %v2058, %v1140
    %v2062 = vmul.f32 %v2060, %v1140
    %v2063 = vsub.f32 %v2055, %v2061
    %v2064 = vsub.f32 %v2056, %v2062
    %v2065 = vmul.f32 %v2063, %v2063
    %v2066 = vmul.f32 %v2064, %v2064
    %2067 = vadd.xlane.f32.xlu0 %v2065
    %v2068 = vpop.xlane.xlu0 %2067
    %2069 = vadd.xlane.f32.xlu0 %v2066
    %v2070 = vpop.xlane.xlu0 %2069
    %v2071 = vmul.f32 %v2068, %v1140
    %v2072 = vmul.f32 %v2070, %v1140
    %v2073 = vadd.f32 %v2071, 1e-05
    %v2074 = vadd.f32 %v2072, 1e-05
    %v2075 = vrsqrt.pop %v2073
    %v2076 = vmul.f32 %v2075, %v2073
    %v2077 = vmul.f32 %v2076, %v2075
    %v2078 = vmul.f32 0.5, %v2077
    %v2079 = vsub.f32 1.5, %v2078
    %v2080 = vmul.f32 %v2075, %v2079
    %vm2081 = vweird.f32 %v2073
    %vm2082 = vweird.f32 %v2075
    %vm2083 = vmor %vm2081, %vm2082
    %v2084 = vsel %vm2083, %v2075, %v2080
    %v2085 = vrsqrt.pop %v2074
    %v2086 = vmul.f32 %v2085, %v2074
    %v2087 = vmul.f32 %v2086, %v2085
    %v2088 = vmul.f32 0.5, %v2087
    %v2089 = vsub.f32 1.5, %v2088
    %v2090 = vmul.f32 %v2085, %v2089
    %vm2091 = vweird.f32 %v2074
    %vm2092 = vweird.f32 %v2085
    %vm2093 = vmor %vm2091, %vm2092
    %v2094 = vsel %vm2093, %v2085, %v2090
    %v2095 = vmul.f32 %v2063, %v2084
    %v2096 = vmul.f32 %v2064, %v2094
    %v2097 = vmul.f32 %v2095, %v1178
    %v2098 = vmul.f32 %v2096, %v1178
    %v2099 = vadd.f32 %v2097, %v1183
    %v2100 = vadd.f32 %v2098, %v1183
    %v2101 = vpack.c.bf16 %v2100, %v2099
    %v2102 = vld [vmem:[#allocation19] sm:$0xff]
    %v2103 = vld [vmem:[#allocation19 + $0x8] sm:$0xff]
    %v2104 = vld [vmem:[#allocation19 + $0x10] sm:$0xff]
    %v2105 = vld [vmem:[#allocation19 + $0x18] sm:$0xff]
    %v2106 = vld [vmem:[#allocation19 + $0x20] sm:$0xff]
    %v2107 = vld [vmem:[#allocation19 + $0x28] sm:$0xff]
    %v2108 = vld [vmem:[#allocation19 + $0x30] sm:$0xff]
    %v2109 = vld [vmem:[#allocation19 + $0x38] sm:$0xff]
    %v2110 = vld [vmem:[#allocation19 + $0x40] sm:$0xff]
    %v2111 = vld [vmem:[#allocation19 + $0x48] sm:$0xff]
    %v2112 = vld [vmem:[#allocation19 + $0x50] sm:$0xff]
    %v2113 = vld [vmem:[#allocation19 + $0x58] sm:$0xff]
    %v2114 = vld [vmem:[#allocation19 + $0x60] sm:$0xff]
    %v2115 = vld [vmem:[#allocation19 + $0x68] sm:$0xff]
    %v2116 = vld [vmem:[#allocation19 + $0x70] sm:$0xff]
    %v2117 = vld [vmem:[#allocation19 + $0x78] sm:$0xff]
    %v2118 = vld [vmem:[%s15] sm:$0x3]
    %v2120 = vperm.slane %v2118, 0
    %v2121 = vperm.slane %v2118, 1
    %v2140 = vunpack.c.l.b16 %v2102
    %v2141 = vunpack.c.h.b16 %v2102
    %v2142 = vunpack.c.l.b16 %v2103
    %v2143 = vunpack.c.h.b16 %v2103
    %v2144 = vunpack.c.l.b16 %v2104
    %v2145 = vunpack.c.h.b16 %v2104
    %v2146 = vunpack.c.l.b16 %v2105
    %v2147 = vunpack.c.h.b16 %v2105
    %v2148 = vunpack.c.l.b16 %v2106
    %v2149 = vunpack.c.h.b16 %v2106
    %v2150 = vunpack.c.l.b16 %v2107
    %v2151 = vunpack.c.h.b16 %v2107
    %v2152 = vunpack.c.l.b16 %v2108
    %v2153 = vunpack.c.h.b16 %v2108
    %v2154 = vunpack.c.l.b16 %v2109
    %v2155 = vunpack.c.h.b16 %v2109
    %v2156 = vunpack.c.l.b16 %v2110
    %v2157 = vunpack.c.h.b16 %v2110
    %v2158 = vunpack.c.l.b16 %v2111
    %v2159 = vunpack.c.h.b16 %v2111
    %v2160 = vunpack.c.l.b16 %v2112
    %v2161 = vunpack.c.h.b16 %v2112
    %v2162 = vunpack.c.l.b16 %v2113
    %v2163 = vunpack.c.h.b16 %v2113
    %v2164 = vunpack.c.l.b16 %v2114
    %v2165 = vunpack.c.h.b16 %v2114
    %v2166 = vunpack.c.l.b16 %v2115
    %v2167 = vunpack.c.h.b16 %v2115
    %v2168 = vunpack.c.l.b16 %v2116
    %v2169 = vunpack.c.h.b16 %v2116
    %v2170 = vunpack.c.l.b16 %v2117
    %v2171 = vunpack.c.h.b16 %v2117
    %v2172 = vpack.c.b16 %v2142, %v2140
    %v2173 = vpack.c.b16 %v2143, %v2141
    %v2174 = vpack.c.b16 %v2146, %v2144
    %v2175 = vpack.c.b16 %v2147, %v2145
    %v2176 = vpack.c.b16 %v2150, %v2148
    %v2177 = vpack.c.b16 %v2151, %v2149
    %v2178 = vpack.c.b16 %v2154, %v2152
    %v2179 = vpack.c.b16 %v2155, %v2153
    %v2180 = vpack.c.b16 %v2158, %v2156
    %v2181 = vpack.c.b16 %v2159, %v2157
    %v2182 = vpack.c.b16 %v2162, %v2160
    %v2183 = vpack.c.b16 %v2163, %v2161
    %v2184 = vpack.c.b16 %v2166, %v2164
    %v2185 = vpack.c.b16 %v2167, %v2165
    %v2186 = vpack.c.b16 %v2170, %v2168
    %v2187 = vpack.c.b16 %v2171, %v2169
    %2204 = vmatpush.bf16.msra.mxu0 %v2186
    %2205 = vmatpush.bf16.msra.mxu0 %v2184
    %2206 = vmatpush.bf16.msra.mxu0 %v2182
    %2207 = vmatpush.bf16.msra.mxu0 %v2180
    %2208 = vmatpush.bf16.msra.mxu0 %v2178
    %2209 = vmatpush.bf16.msra.mxu0 %v2176
    %2210 = vmatpush.bf16.msra.mxu0 %v2174
    %2211 = vmatpush.bf16.msra.mxu0 %v2172
    %2212 = vmatmul.bf16.gmra.mxu0 %v2101
    %v2213 = vpop.f32.mrf.mxu0
    %v2214 = vadd.f32 %v2120, %v2213
    %v2215 = vpop.f32.mrf.mxu0
    %v2216 = vadd.f32 %v2120, %v2215
    %2217 = vdwg.mxu0
    %2218 = vmatpush.bf16.msra.mxu0 %v2187
    %2219 = vmatpush.bf16.msra.mxu0 %v2185
    %2220 = vmatpush.bf16.msra.mxu0 %v2183
    %2221 = vmatpush.bf16.msra.mxu0 %v2181
    %2222 = vmatpush.bf16.msra.mxu0 %v2179
    %2223 = vmatpush.bf16.msra.mxu0 %v2177
    %2224 = vmatpush.bf16.msra.mxu0 %v2175
    %2225 = vmatpush.bf16.msra.mxu0 %v2173
    %2226 = vmatmul.bf16.gmra.mxu0 %v2101
    %v2227 = vpop.f32.mrf.mxu0
    %v2228 = vadd.f32 %v2121, %v2227
    %v2229 = vpop.f32.mrf.mxu0
    %v2230 = vadd.f32 %v2121, %v2229
    %2231 = vdwg.mxu0
    %v2232 = vmax.f32 %v2214, 0.0
    %v2233 = vmax.f32 %v2228, 0.0
    %v2234 = vmax.f32 %v2216, 0.0
    %v2235 = vmax.f32 %v2230, 0.0
    %v2236 = vpack.c.bf16 %v2234, %v2232
    %v2237 = vpack.c.bf16 %v2235, %v2233
    %v2238 = vld [vmem:[#allocation20] sm:$0xf]
    %v2239 = vld [vmem:[#allocation20 + $0x4] sm:$0xf]
    %v2240 = vld [vmem:[#allocation20 + $0x8] sm:$0xf]
    %v2241 = vld [vmem:[#allocation20 + $0xc] sm:$0xf]
    %v2242 = vld [vmem:[#allocation20 + $0x10] sm:$0xf]
    %v2243 = vld [vmem:[#allocation20 + $0x14] sm:$0xf]
    %v2244 = vld [vmem:[#allocation20 + $0x18] sm:$0xf]
    %v2245 = vld [vmem:[#allocation20 + $0x1c] sm:$0xf]
    %v2246 = vld [vmem:[#allocation20 + $0x20] sm:$0xf]
    %v2247 = vld [vmem:[#allocation20 + $0x24] sm:$0xf]
    %v2248 = vld [vmem:[#allocation20 + $0x28] sm:$0xf]
    %v2249 = vld [vmem:[#allocation20 + $0x2c] sm:$0xf]
    %v2250 = vld [vmem:[#allocation20 + $0x30] sm:$0xf]
    %v2251 = vld [vmem:[#allocation20 + $0x34] sm:$0xf]
    %v2252 = vld [vmem:[#allocation20 + $0x38] sm:$0xf]
    %v2253 = vld [vmem:[#allocation20 + $0x3c] sm:$0xf]
    %v2254 = vld [vmem:[#allocation20 + $0x40] sm:$0xf]
    %v2255 = vld [vmem:[#allocation20 + $0x44] sm:$0xf]
    %v2256 = vld [vmem:[#allocation20 + $0x48] sm:$0xf]
    %v2257 = vld [vmem:[#allocation20 + $0x4c] sm:$0xf]
    %v2258 = vld [vmem:[#allocation20 + $0x50] sm:$0xf]
    %v2259 = vld [vmem:[#allocation20 + $0x54] sm:$0xf]
    %v2260 = vld [vmem:[#allocation20 + $0x58] sm:$0xf]
    %v2261 = vld [vmem:[#allocation20 + $0x5c] sm:$0xf]
    %v2262 = vld [vmem:[#allocation20 + $0x60] sm:$0xf]
    %v2263 = vld [vmem:[#allocation20 + $0x64] sm:$0xf]
    %v2264 = vld [vmem:[#allocation20 + $0x68] sm:$0xf]
    %v2265 = vld [vmem:[#allocation20 + $0x6c] sm:$0xf]
    %v2266 = vld [vmem:[#allocation20 + $0x70] sm:$0xf]
    %v2267 = vld [vmem:[#allocation20 + $0x74] sm:$0xf]
    %v2268 = vld [vmem:[#allocation20 + $0x78] sm:$0xf]
    %v2269 = vld [vmem:[#allocation20 + $0x7c] sm:$0xf]
    %v2270 = vld [vmem:[%s17] sm:$0x1]
    %v2272 = vperm.slane %v2270, 0
    %v2306 = vunpack.c.l.b16 %v2238
    %v2307 = vunpack.c.l.b16 %v2239
    %v2308 = vunpack.c.l.b16 %v2240
    %v2309 = vunpack.c.l.b16 %v2241
    %v2310 = vunpack.c.l.b16 %v2242
    %v2311 = vunpack.c.l.b16 %v2243
    %v2312 = vunpack.c.l.b16 %v2244
    %v2313 = vunpack.c.l.b16 %v2245
    %v2314 = vunpack.c.l.b16 %v2246
    %v2315 = vunpack.c.l.b16 %v2247
    %v2316 = vunpack.c.l.b16 %v2248
    %v2317 = vunpack.c.l.b16 %v2249
    %v2318 = vunpack.c.l.b16 %v2250
    %v2319 = vunpack.c.l.b16 %v2251
    %v2320 = vunpack.c.l.b16 %v2252
    %v2321 = vunpack.c.l.b16 %v2253
    %v2322 = vunpack.c.l.b16 %v2254
    %v2323 = vunpack.c.l.b16 %v2255
    %v2324 = vunpack.c.l.b16 %v2256
    %v2325 = vunpack.c.l.b16 %v2257
    %v2326 = vunpack.c.l.b16 %v2258
    %v2327 = vunpack.c.l.b16 %v2259
    %v2328 = vunpack.c.l.b16 %v2260
    %v2329 = vunpack.c.l.b16 %v2261
    %v2330 = vunpack.c.l.b16 %v2262
    %v2331 = vunpack.c.l.b16 %v2263
    %v2332 = vunpack.c.l.b16 %v2264
    %v2333 = vunpack.c.l.b16 %v2265
    %v2334 = vunpack.c.l.b16 %v2266
    %v2335 = vunpack.c.l.b16 %v2267
    %v2336 = vunpack.c.l.b16 %v2268
    %v2337 = vunpack.c.l.b16 %v2269
    %v2338 = vpack.c.b16 %v2307, %v2306
    %v2339 = vpack.c.b16 %v2309, %v2308
    %v2340 = vpack.c.b16 %v2311, %v2310
    %v2341 = vpack.c.b16 %v2313, %v2312
    %v2342 = vpack.c.b16 %v2315, %v2314
    %v2343 = vpack.c.b16 %v2317, %v2316
    %v2344 = vpack.c.b16 %v2319, %v2318
    %v2345 = vpack.c.b16 %v2321, %v2320
    %v2346 = vpack.c.b16 %v2323, %v2322
    %v2347 = vpack.c.b16 %v2325, %v2324
    %v2348 = vpack.c.b16 %v2327, %v2326
    %v2349 = vpack.c.b16 %v2329, %v2328
    %v2350 = vpack.c.b16 %v2331, %v2330
    %v2351 = vpack.c.b16 %v2333, %v2332
    %v2352 = vpack.c.b16 %v2335, %v2334
    %v2353 = vpack.c.b16 %v2337, %v2336
    %2370 = vmatpush.bf16.msra.mxu0 %v2345
    %2371 = vmatpush.bf16.msra.mxu0 %v2344
    %2372 = vmatpush.bf16.msra.mxu0 %v2343
    %2373 = vmatpush.bf16.msra.mxu0 %v2342
    %2374 = vmatpush.bf16.msra.mxu0 %v2341
    %2375 = vmatpush.bf16.msra.mxu0 %v2340
    %2376 = vmatpush.bf16.msra.mxu0 %v2339
    %2377 = vmatpush.bf16.msra.mxu0 %v2338
    %2378 = vmatmul.bf16.gmra.mxu0 %v2236
    %v2379 = vpop.f32.mrf.mxu0
    %v2380 = vadd.f32 %v2272, %v2379
    %v2381 = vpop.f32.mrf.mxu0
    %v2382 = vadd.f32 %v2272, %v2381
    %2383 = vdwg.mxu0
    %2384 = vmatpush.bf16.msra.mxu0 %v2353
    %2385 = vmatpush.bf16.msra.mxu0 %v2352
    %2386 = vmatpush.bf16.msra.mxu0 %v2351
    %2387 = vmatpush.bf16.msra.mxu0 %v2350
    %2388 = vmatpush.bf16.msra.mxu0 %v2349
    %2389 = vmatpush.bf16.msra.mxu0 %v2348
    %2390 = vmatpush.bf16.msra.mxu0 %v2347
    %2391 = vmatpush.bf16.msra.mxu0 %v2346
    %2392 = vmatmul.bf16.gmra.mxu0 %v2237
    %v2393 = vpop.f32.mrf.mxu0
    %v2394 = vadd.f32 %v2380, %v2393
    %v2395 = vpop.f32.mrf.mxu0
    %v2396 = vadd.f32 %v2382, %v2395
    %2397 = vdwg.mxu0
    %v2398 = vadd.f32 %v2394, %v2099
    %v2399 = vadd.f32 %v2396, %v2100
    %2400 = vadd.xlane.f32.xlu0 %v2398
    %v2401 = vpop.xlane.xlu0 %2400
    %2402 = vadd.xlane.f32.xlu0 %v2399
    %v2403 = vpop.xlane.xlu0 %2402
    %v2404 = vmul.f32 %v2401, %v1140
    %v2405 = vmul.f32 %v2403, %v1140
    %v2406 = vsub.f32 %v2398, %v2404
    %v2407 = vsub.f32 %v2399, %v2405
    %v2408 = vmul.f32 %v2406, %v2406
    %v2409 = vmul.f32 %v2407, %v2407
    %2410 = vadd.xlane.f32.xlu0 %v2408
    %v2411 = vpop.xlane.xlu0 %2410
    %2412 = vadd.xlane.f32.xlu0 %v2409
    %v2413 = vpop.xlane.xlu0 %2412
    %v2414 = vmul.f32 %v2411, %v1140
    %v2415 = vmul.f32 %v2413, %v1140
    %v2416 = vadd.f32 %v2414, 1e-05
    %v2417 = vadd.f32 %v2415, 1e-05
    %v2418 = vrsqrt.pop %v2416
    %v2419 = vmul.f32 %v2418, %v2416
    %v2420 = vmul.f32 %v2419, %v2418
    %v2421 = vmul.f32 0.5, %v2420
    %v2422 = vsub.f32 1.5, %v2421
    %v2423 = vmul.f32 %v2418, %v2422
    %vm2424 = vweird.f32 %v2416
    %vm2425 = vweird.f32 %v2418
    %vm2426 = vmor %vm2424, %vm2425
    %v2427 = vsel %vm2426, %v2418, %v2423
    %v2428 = vrsqrt.pop %v2417
    %v2429 = vmul.f32 %v2428, %v2417
    %v2430 = vmul.f32 %v2429, %v2428
    %v2431 = vmul.f32 0.5, %v2430
    %v2432 = vsub.f32 1.5, %v2431
    %v2433 = vmul.f32 %v2428, %v2432
    %vm2434 = vweird.f32 %v2417
    %vm2435 = vweird.f32 %v2428
    %vm2436 = vmor %vm2434, %vm2435
    %v2437 = vsel %vm2436, %v2428, %v2433
    %v2438 = vmul.f32 %v2406, %v2427
    %v2439 = vmul.f32 %v2407, %v2437
    %v2440 = vmul.f32 %v2438, %v1178
    %v2441 = vmul.f32 %v2439, %v1178
    %v2442 = vadd.f32 %v2440, %v1183
    %v2443 = vadd.f32 %v2441, %v1183
    %v2444 = vpack.c.bf16 %v2442, %v2442
    %v2445 = vpack.c.bf16 %v2443, %v2443
    %2446 = vst [vmem:[#allocation22] sm:$0xf] %v2444
    %2447 = vst [vmem:[#allocation22 + $0x4] sm:$0xf] %v2445
    // Predicated region
    $region130: #{tpu_custom_call.1} parent=1 // pred_check
      _
    $region131: #{tpu_custom_call.1} parent=1 // pred_check_branch
      %2449 = sbr.rel (0) target = $region133
    $region132: #{tpu_custom_call.1} parent=1 // pred_region
      %2451 = vsyncadd [#allocation4], 0
      %s2452 = sshll.u32 [#allocation22], 4
      %s2453 = int_to_ptr.vmem [resolvable:$true] %s2452
      %s2454 = sshll.u32 %s20, 4
      %s2455 = int_to_ptr.hbm [resolvable:$true] %s2454
      %2460 = dma.vmem_to_hbm [thread:$0]  %s2453, 128, %s2455, [#allocation4], 64, 64, 4
    $region133: #{tpu_custom_call.1} parent=1 // pred_fallthru
      _
    // Predicated region
    $region134: #{tpu_custom_call.1} parent=1 // pred_check
      _
    $region135: #{tpu_custom_call.1} parent=1 // pred_check_branch
      %2462 = sbr.rel (0) target = $region137
    $region136: #{tpu_custom_call.1} parent=1 // pred_region
      %2464 = dma.done [#allocation4], 128
    $region137: #{tpu_custom_call.1} parent=1 // pred_fallthru
      _
    %2465 = vsyncpa [#allocation3], 1
    %2466 = vsyncpa [#allocation6], 1
    %2467 = vsyncpa [#allocation9], 1
    %2468 = vsyncpa [#allocation12], 1
    %2469 = vsyncpa [#allocation15], 1
    %2470 = vsyncpa [#allocation18], 1
    %2471 = vsyncpa [#allocation21], 1
    %2472 = vsyncpa [#allocation4], 1

</llo_original>
